<compile_context>
chip_gen: v7x
topology: tpu7x:2x2x1
jax: 0.10.0
libtpu: 0.0.40
codegen_flags: <defaults>
</compile_context>

<pallas_src>
import numpy as np
import jax
import jax.numpy as jnp
from jax.experimental import pallas as pl
from jax.experimental.pallas import tpu as pltpu


# ---------------------------------------------------------------------------
# Fused kernel: whole Up block for one image
# ---------------------------------------------------------------------------

def _up_fused_kernel(x2_ref, x1_ref, s_ref, us_ref,
                     w1a_ref, w1b_ref, s1_ref, b1_ref,
                     w2_ref, s2_ref, b2_ref, o_ref):
    # x2_ref : (C2p, HW)      high-res skip, channels padded to multiple of 8
    # x1_ref : (C1p, H1W1)    low-res input, channels padded to multiple of 8
    # s_ref  : (9, HW, HW)    per-tap shift-with-zero-pad operators (conv padding=1)
    # us_ref : (9, H1W1, HW)  upsample(2x, align_corners) + F.pad + shift, composed
    # w1a/w1b: (Midp, 9*C2p) / (Midp, 9*C1p)   conv1 weight slabs, col = k*Cp + c
    # w2_ref : (Cout, 9*Midp)
    # s*/b*  : folded BatchNorm scale/bias, shape (rows, 1)
    # o_ref  : (Cout, HW)     lane-dense output (HW is a multiple of 128)
    C2p, HW = x2_ref.shape
    C1p, H1W1 = x1_ref.shape
    Midp = w1a_ref.shape[0]
    f32 = jnp.float32

    S = s_ref[...]                   # (9, HW, HW)
    US = us_ref[...]                 # (9, H1W1, HW)

    # conv1 im2col, x2 (skip) half: 9 shifted copies via one batched matmul
    x2b = jnp.broadcast_to(x2_ref[...][None], (9, C2p, HW))
    x2s = jnp.einsum('kci,kio->kco', x2b, S, preferred_element_type=f32)
    x2s = x2s.reshape(9 * C2p, HW)                     # row = k*C2p + c (8-aligned merge)

    # conv1 im2col, x1 half: upsample + pad + shift all fused into US
    x1b = jnp.broadcast_to(x1_ref[...][None], (9, C1p, H1W1))
    x1s = jnp.einsum('kci,kio->kco', x1b, US, preferred_element_type=f32)
    x1s = x1s.reshape(9 * C1p, HW)

    # conv1 as a single K=9*Cin dot per half (weight split replaces the concat)
    h = (jnp.dot(w1a_ref[...], x2s, preferred_element_type=f32) +
         jnp.dot(w1b_ref[...], x1s, preferred_element_type=f32))   # (Midp, HW)
    h = jnp.maximum(h * s1_ref[...] + b1_ref[...], 0.0)            # BN(eval) + ReLU

    # conv2: same shift operators, single K=9*Mid dot
    hb = jnp.broadcast_to(h[None], (9, Midp, HW))
    hs = jnp.einsum('kci,kio->kco', hb, S, preferred_element_type=f32)
    hs = hs.reshape(9 * Midp, HW)
    y = jnp.dot(w2_ref[...], hs, preferred_element_type=f32)       # (Cout, HW)
    y = jnp.maximum(y * s2_ref[...] + b2_ref[...], 0.0)
    o_ref[...] = y.astype(o_ref.dtype)


# ---------------------------------------------------------------------------
# Trace-time (numpy) operator construction
# ---------------------------------------------------------------------------

def _bilinear_matrix(n_in, n_out):
    """(n_out, n_in) matrix M with out = M @ in, bilinear, align_corners=True."""
    m = np.zeros((n_out, n_in), np.float32)
    if n_out == 1 or n_in == 1:
        m[:, 0] = 1.0
        return m
    pos = np.arange(n_out) * (n_in - 1) / (n_out - 1)
    lo = np.floor(pos).astype(np.int64)
    hi = np.minimum(lo + 1, n_in - 1)
    frac = (pos - lo).astype(np.float32)
    m[np.arange(n_out), lo] += 1.0 - frac
    m[np.arange(n_out), hi] += frac
    return m


def _build_operators(H1, W1, H2, W2):
    """Per-tap shift operators S (9, HW, HW) for a 3x3/pad=1 conv on the flattened
    (H2*W2) spatial dim, and US (9, H1*W1, HW) = (upsample2x + F.pad) composed with S."""
    HW = H2 * W2
    S = np.zeros((9, HW, HW), np.float32)
    for ky in range(3):
        for kx in range(3):
            k = ky * 3 + kx
            for yo in range(H2):
                yi = yo + ky - 1
                if not (0 <= yi < H2):
                    continue
                for xo in range(W2):
                    xi = xo + kx - 1
                    if 0 <= xi < W2:
                        S[k, yi * W2 + xi, yo * W2 + xo] = 1.0
    Ho, Wo = 2 * H1, 2 * W1
    dY, dX = H2 - Ho, W2 - Wo
    wyf = np.zeros((H2, H1), np.float32)
    wyf[dY // 2:dY // 2 + Ho, :] = _bilinear_matrix(H1, Ho)
    wxf = np.zeros((W2, W1), np.float32)
    wxf[dX // 2:dX // 2 + Wo, :] = _bilinear_matrix(W1, Wo)
    upad = np.kron(wyf, wxf)                       # (H2*W2, H1*W1)
    US = np.einsum('st,kso->kto', upad, S)         # (9, H1*W1, HW)
    return S, US


# ---------------------------------------------------------------------------
# Wrapper
# ---------------------------------------------------------------------------

def _round_up(x, m):
    return (x + m - 1) // m * m


def _conv_slab(w_oihw, cin_pad, cout_pad):
    """OIHW (Co, Ci, 3, 3) -> (cout_pad, 9*cin_pad), column = (ky*3+kx)*cin_pad + ci."""
    co, ci = w_oihw.shape[:2]
    w = jnp.pad(w_oihw, ((0, cout_pad - co), (0, cin_pad - ci), (0, 0), (0, 0)))
    return jnp.transpose(w, (0, 2, 3, 1)).reshape(cout_pad, 9 * cin_pad)


def _pad_rows(v, rows):
    v = v.reshape(-1, 1).astype(jnp.float32)
    return jnp.pad(v, ((0, rows - v.shape[0]), (0, 0)))


def up_forward(params, x1_nchw, x2_nchw):
    """Equivalent of Up.forward(x1, x2) with bilinear=True. NCHW in / NCHW out."""
    N, C1, H1, W1 = x1_nchw.shape
    _, C2, H2, W2 = x2_nchw.shape
    HW, H1W1 = H2 * W2, H1 * W1
    Mid, Cout = params["w1"].shape[0], params["w2"].shape[0]
    C1p, C2p, Midp = _round_up(C1, 8), _round_up(C2, 8), _round_up(Mid, 8)

    S_np, US_np = _build_operators(H1, W1, H2, W2)
    S, US = jnp.asarray(S_np), jnp.asarray(US_np)

    # NCHW -> (N, C, H*W) is a free contiguous reshape; the tiny channel pad keeps
    # the in-kernel (9, C, HW)->(9C, HW) merge sublane-aligned (zeros x zero weights).
    x2r = jnp.pad(x2_nchw.reshape(N, C2, HW), ((0, 0), (0, C2p - C2), (0, 0)))
    x1r = jnp.pad(x1_nchw.reshape(N, C1, H1W1), ((0, 0), (0, C1p - C1), (0, 0)))

    w1a = _conv_slab(params["w1"][:, :C2], C2p, Midp)   # conv1 weights for x2 channels
    w1b = _conv_slab(params["w1"][:, C2:], C1p, Midp)   # conv1 weights for upsampled x1
    w2r = _conv_slab(params["w2"], Midp, Cout)
    s1, b1 = _pad_rows(params["s1"], Midp), _pad_rows(params["b1"], Midp)
    s2, b2 = _pad_rows(params["s2"], Cout), _pad_rows(params["b2"], Cout)

    out = pl.pallas_call(
        _up_fused_kernel,
        out_shape=jax.ShapeDtypeStruct((N, Cout, HW), x2_nchw.dtype),
        grid=(N,),
        in_specs=[
            pl.BlockSpec((None, C2p, HW), lambda n: (n, 0, 0)),
            pl.BlockSpec((None, C1p, H1W1), lambda n: (n, 0, 0)),
            pl.BlockSpec((9, HW, HW), lambda n: (0, 0, 0)),
            pl.BlockSpec((9, H1W1, HW), lambda n: (0, 0, 0)),
            pl.BlockSpec((Midp, 9 * C2p), lambda n: (0, 0)),
            pl.BlockSpec((Midp, 9 * C1p), lambda n: (0, 0)),
            pl.BlockSpec((Midp, 1), lambda n: (0, 0)),
            pl.BlockSpec((Midp, 1), lambda n: (0, 0)),
            pl.BlockSpec((Cout, 9 * Midp), lambda n: (0, 0)),
            pl.BlockSpec((Cout, 1), lambda n: (0, 0)),
            pl.BlockSpec((Cout, 1), lambda n: (0, 0)),
        ],
        out_specs=pl.BlockSpec((None, Cout, HW), lambda n: (n, 0, 0)),
        compiler_params=pltpu.CompilerParams(
            dimension_semantics=("parallel",),
            vmem_limit_bytes=32 * 1024 * 1024,
        ),
    )(x2r, x1r, S, US, w1a, w1b, s1, b1, w2r, s2, b2)

    return out.reshape(N, Cout, H2, W2)     # free reshape back to NCHW


# ---------------------------------------------------------------------------
# Deterministic parameter init (shapes per DoubleConv(in_ch, out_ch, in_ch // 2))
# ---------------------------------------------------------------------------

def init_params(key, in_channels, out_channels):
    mid = in_channels // 2
    ks = jax.random.split(key, 10)

    def bn_fold(kg, kb, km, kv, c):
        gamma = 1.0 + 0.1 * jax.random.normal(kg, (c,), jnp.float32)
        beta = 0.1 * jax.random.normal(kb, (c,), jnp.float32)
        mean = 0.05 * jax.random.normal(km, (c,), jnp.float32)
        var = 1.0 + 0.1 * jax.random.uniform(kv, (c,), jnp.float32)
        scale = gamma / jnp.sqrt(var + 1e-5)
        bias = beta - mean * scale
        return scale, bias

    w1 = 0.1 * jax.random.normal(ks[0], (mid, in_channels, 3, 3), jnp.float32)      # OIHW
    w2 = 0.1 * jax.random.normal(ks[1], (out_channels, mid, 3, 3), jnp.float32)     # OIHW
    s1, b1 = bn_fold(ks[2], ks[3], ks[4], ks[5], mid)
    s2, b2 = bn_fold(ks[6], ks[7], ks[8], ks[9], out_channels)
    return {"w1": w1, "s1": s1, "b1": b1, "w2": w2, "s2": s2, "b2": b2}


# ---------------------------------------------------------------------------
# Pure-JAX reference (independent correctness check)
# ---------------------------------------------------------------------------

def ref_forward(params, x1, x2):
    N, C, H, W = x1.shape
    wy = jnp.asarray(_bilinear_matrix(H, 2 * H))
    wx = jnp.asarray(_bilinear_matrix(W, 2 * W))
    x1u = jnp.einsum('oh,nchw,qw->ncoq', wy, x1, wx)
    diffY = x2.shape[2] - x1u.shape[2]
    diffX = x2.shape[3] - x1u.shape[3]
    x1u = jnp.pad(x1u, ((0, 0), (0, 0),
                        (diffY // 2, diffY - diffY // 2),
                        (diffX // 2, diffX - diffX // 2)))
    x = jnp.concatenate([x2, x1u], axis=1)

    def cbr(x, w, s, b):
        y = jax.lax.conv_general_dilated(
            x, w, (1, 1), ((1, 1), (1, 1)),
            dimension_numbers=('NCHW', 'OIHW', 'NCHW'))
        y = y * s[None, :, None, None] + b[None, :, None, None]
        return jnp.maximum(y, 0.0)

    h = cbr(x, params["w1"], params["s1"], params["b1"])
    h = cbr(h, params["w2"], params["s2"], params["b2"])
    return h


if __name__ == "__main__":
    in_channels, out_channels = 8, 4          # Up(8, 4, bilinear=True); mid = 4
    N, H, W = 2, 8, 8                         # x1: low-res input, x2: high-res skip
    key = jax.random.PRNGKey(0)
    kx1, kx2, kp = jax.random.split(key, 3)

    x1 = jax.random.normal(kx1, (N, in_channels // 2, H, W), jnp.float32)
    x2 = jax.random.normal(kx2, (N, in_channels // 2, 2 * H, 2 * W), jnp.float32)
    params = init_params(kp, in_channels, out_channels)

    out = jax.jit(up_forward)(params, x1, x2)
    out = jax.block_until_ready(out)

    assert out.shape == (N, out_channels, 2 * H, 2 * W), out.shape
    ref = ref_forward(params, x1, x2)
    assert jnp.allclose(out, ref, atol=1e-3, rtol=1e-3), \
        float(jnp.max(jnp.abs(out - ref)))

    print("KERNEL_OK")
</pallas_src>

<mosaic_0001>
module attributes {stable_mosaic.version = 11 : i64} {
  func.func @_up_fused_kernel(%arg0: i32, %arg1: memref<1x8x256xf32, #tpu.memory_space<vmem>>, %arg2: memref<1x8x64xf32, #tpu.memory_space<vmem>>, %arg3: memref<9x256x256xf32, #tpu.memory_space<vmem>>, %arg4: memref<9x64x256xf32, #tpu.memory_space<vmem>>, %arg5: memref<8x72xf32, #tpu.memory_space<vmem>>, %arg6: memref<8x72xf32, #tpu.memory_space<vmem>>, %arg7: memref<8x1xf32, #tpu.memory_space<vmem>>, %arg8: memref<8x1xf32, #tpu.memory_space<vmem>>, %arg9: memref<4x72xf32, #tpu.memory_space<vmem>>, %arg10: memref<4x1xf32, #tpu.memory_space<vmem>>, %arg11: memref<4x1xf32, #tpu.memory_space<vmem>>, %arg12: memref<1x4x256xf32, #tpu.memory_space<vmem>>) attributes {dimension_semantics = [#tpu.dimension_semantics<parallel>], iteration_bounds = array<i64: 2>, scalar_prefetch = 0 : i64, scratch_operands = 0 : i64, tpu.core_type = #tpu.core_type<tc>, window_params = [{transform_indices = @transform_0, window_bounds = array<i64: 1, 8, 256>}, {transform_indices = @transform_1, window_bounds = array<i64: 1, 8, 64>}, {pipeline_mode = #tpu.pipeline_mode<synchronous>, transform_indices = @transform_2, window_bounds = array<i64: 9, 256, 256>}, {pipeline_mode = #tpu.pipeline_mode<synchronous>, transform_indices = @transform_3, window_bounds = array<i64: 9, 64, 256>}, {pipeline_mode = #tpu.pipeline_mode<synchronous>, transform_indices = @transform_4, window_bounds = array<i64: 8, 72>}, {pipeline_mode = #tpu.pipeline_mode<synchronous>, transform_indices = @transform_5, window_bounds = array<i64: 8, 72>}, {pipeline_mode = #tpu.pipeline_mode<synchronous>, transform_indices = @transform_6, window_bounds = array<i64: 8, 1>}, {pipeline_mode = #tpu.pipeline_mode<synchronous>, transform_indices = @transform_7, window_bounds = array<i64: 8, 1>}, {pipeline_mode = #tpu.pipeline_mode<synchronous>, transform_indices = @transform_8, window_bounds = array<i64: 4, 72>}, {pipeline_mode = #tpu.pipeline_mode<synchronous>, transform_indices = @transform_9, window_bounds = array<i64: 4, 1>}, {pipeline_mode = #tpu.pipeline_mode<synchronous>, transform_indices = @transform_10, window_bounds = array<i64: 4, 1>}, {transform_indices = @transform_11, window_bounds = array<i64: 1, 4, 256>}]} {
    %c0 = arith.constant 0 : index
    %c0_0 = arith.constant 0 : index
    %c0_1 = arith.constant 0 : index
    %0 = vector.load %arg3[%c0, %c0_0, %c0_1] : memref<9x256x256xf32, #tpu.memory_space<vmem>>, vector<9x256x256xf32>
    %c0_2 = arith.constant 0 : index
    %c0_3 = arith.constant 0 : index
    %c0_4 = arith.constant 0 : index
    %1 = vector.load %arg4[%c0_2, %c0_3, %c0_4] : memref<9x64x256xf32, #tpu.memory_space<vmem>>, vector<9x64x256xf32>
    %c0_5 = arith.constant 0 : index
    %c0_6 = arith.constant 0 : index
    %c0_7 = arith.constant 0 : index
    %2 = vector.load %arg1[%c0_5, %c0_6, %c0_7] : memref<1x8x256xf32, #tpu.memory_space<vmem>>, vector<1x8x256xf32>
    %3 = vector.shape_cast %2 : vector<1x8x256xf32> to vector<8x256xf32>
    %4 = vector.shape_cast %3 : vector<8x256xf32> to vector<1x8x256xf32>
    %5 = vector.shape_cast %4 : vector<1x8x256xf32> to vector<1x8x256xf32>
    %6 = vector.broadcast %5 : vector<1x8x256xf32> to vector<9x8x256xf32>
    "tpu.trace_start"() <{level = 10 : i32, message = "kci,kio->kco"}> : () -> ()
    %cst = arith.constant dense<0.000000e+00> : vector<9x8x256xf32>
    %7 = tpu.matmul %6, %0, %cst {dimension_numbers = #tpu.dot_dimension_numbers<[2], [1], [1], [2], [0, 0, 0, 1, 1, 2], [0], [0]>} : vector<9x8x256xf32>, vector<9x256x256xf32>, vector<9x8x256xf32> -> vector<9x8x256xf32>
    "tpu.trace_stop"() : () -> ()
    %8 = vector.shape_cast %7 : vector<9x8x256xf32> to vector<72x256xf32>
    %c0_8 = arith.constant 0 : index
    %c0_9 = arith.constant 0 : index
    %c0_10 = arith.constant 0 : index
    %9 = vector.load %arg2[%c0_8, %c0_9, %c0_10] : memref<1x8x64xf32, #tpu.memory_space<vmem>>, vector<1x8x64xf32>
    %10 = vector.shape_cast %9 : vector<1x8x64xf32> to vector<8x64xf32>
    %11 = vector.shape_cast %10 : vector<8x64xf32> to vector<1x8x64xf32>
    %12 = vector.shape_cast %11 : vector<1x8x64xf32> to vector<1x8x64xf32>
    %13 = vector.broadcast %12 : vector<1x8x64xf32> to vector<9x8x64xf32>
    "tpu.trace_start"() <{level = 10 : i32, message = "kci,kio->kco"}> : () -> ()
    %cst_11 = arith.constant dense<0.000000e+00> : vector<9x8x256xf32>
    %14 = tpu.matmul %13, %1, %cst_11 {dimension_numbers = #tpu.dot_dimension_numbers<[2], [1], [1], [2], [0, 0, 0, 1, 1, 2], [0], [0]>} : vector<9x8x64xf32>, vector<9x64x256xf32>, vector<9x8x256xf32> -> vector<9x8x256xf32>
    "tpu.trace_stop"() : () -> ()
    %15 = vector.shape_cast %14 : vector<9x8x256xf32> to vector<72x256xf32>
    %c0_12 = arith.constant 0 : index
    %c0_13 = arith.constant 0 : index
    %16 = vector.load %arg5[%c0_12, %c0_13] : memref<8x72xf32, #tpu.memory_space<vmem>>, vector<8x72xf32>
    %cst_14 = arith.constant dense<0.000000e+00> : vector<8x256xf32>
    %17 = tpu.matmul %16, %8, %cst_14 {dimension_numbers = #tpu.dot_dimension_numbers<[1], [0], [0], [1], [0, 0, 1, 1], [], []>} : vector<8x72xf32>, vector<72x256xf32>, vector<8x256xf32> -> vector<8x256xf32>
    %c0_15 = arith.constant 0 : index
    %c0_16 = arith.constant 0 : index
    %18 = vector.load %arg6[%c0_15, %c0_16] : memref<8x72xf32, #tpu.memory_space<vmem>>, vector<8x72xf32>
    %cst_17 = arith.constant dense<0.000000e+00> : vector<8x256xf32>
    %19 = tpu.matmul %18, %15, %cst_17 {dimension_numbers = #tpu.dot_dimension_numbers<[1], [0], [0], [1], [0, 0, 1, 1], [], []>} : vector<8x72xf32>, vector<72x256xf32>, vector<8x256xf32> -> vector<8x256xf32>
    %20 = arith.addf %17, %19 : vector<8x256xf32>
    %c0_18 = arith.constant 0 : index
    %c0_19 = arith.constant 0 : index
    %21 = vector.load %arg7[%c0_18, %c0_19] : memref<8x1xf32, #tpu.memory_space<vmem>>, vector<8x1xf32>
    %22 = vector.broadcast %21 : vector<8x1xf32> to vector<8x256xf32>
    %23 = arith.mulf %20, %22 : vector<8x256xf32>
    %c0_20 = arith.constant 0 : index
    %c0_21 = arith.constant 0 : index
    %24 = vector.load %arg8[%c0_20, %c0_21] : memref<8x1xf32, #tpu.memory_space<vmem>>, vector<8x1xf32>
    %25 = vector.broadcast %24 : vector<8x1xf32> to vector<8x256xf32>
    %26 = arith.addf %23, %25 : vector<8x256xf32>
    %cst_22 = arith.constant 0.000000e+00 : f32
    %27 = vector.broadcast %cst_22 : f32 to vector<8x256xf32>
    %28 = arith.maximumf %26, %27 : vector<8x256xf32>
    %29 = vector.shape_cast %28 : vector<8x256xf32> to vector<1x8x256xf32>
    %30 = vector.shape_cast %29 : vector<1x8x256xf32> to vector<1x8x256xf32>
    %31 = vector.broadcast %30 : vector<1x8x256xf32> to vector<9x8x256xf32>
    "tpu.trace_start"() <{level = 10 : i32, message = "kci,kio->kco"}> : () -> ()
    %cst_23 = arith.constant dense<0.000000e+00> : vector<9x8x256xf32>
    %32 = tpu.matmul %31, %0, %cst_23 {dimension_numbers = #tpu.dot_dimension_numbers<[2], [1], [1], [2], [0, 0, 0, 1, 1, 2], [0], [0]>} : vector<9x8x256xf32>, vector<9x256x256xf32>, vector<9x8x256xf32> -> vector<9x8x256xf32>
    "tpu.trace_stop"() : () -> ()
    %33 = vector.shape_cast %32 : vector<9x8x256xf32> to vector<72x256xf32>
    %c0_24 = arith.constant 0 : index
    %c0_25 = arith.constant 0 : index
    %34 = vector.load %arg9[%c0_24, %c0_25] : memref<4x72xf32, #tpu.memory_space<vmem>>, vector<4x72xf32>
    %cst_26 = arith.constant dense<0.000000e+00> : vector<4x256xf32>
    %35 = tpu.matmul %34, %33, %cst_26 {dimension_numbers = #tpu.dot_dimension_numbers<[1], [0], [0], [1], [0, 0, 1, 1], [], []>} : vector<4x72xf32>, vector<72x256xf32>, vector<4x256xf32> -> vector<4x256xf32>
    %c0_27 = arith.constant 0 : index
    %c0_28 = arith.constant 0 : index
    %36 = vector.load %arg10[%c0_27, %c0_28] : memref<4x1xf32, #tpu.memory_space<vmem>>, vector<4x1xf32>
    %37 = vector.broadcast %36 : vector<4x1xf32> to vector<4x256xf32>
    %38 = arith.mulf %35, %37 : vector<4x256xf32>
    %c0_29 = arith.constant 0 : index
    %c0_30 = arith.constant 0 : index
    %39 = vector.load %arg11[%c0_29, %c0_30] : memref<4x1xf32, #tpu.memory_space<vmem>>, vector<4x1xf32>
    %40 = vector.broadcast %39 : vector<4x1xf32> to vector<4x256xf32>
    %41 = arith.addf %38, %40 : vector<4x256xf32>
    %cst_31 = arith.constant 0.000000e+00 : f32
    %42 = vector.broadcast %cst_31 : f32 to vector<4x256xf32>
    %43 = arith.maximumf %41, %42 : vector<4x256xf32>
    %c0_32 = arith.constant 0 : index
    %c0_33 = arith.constant 0 : index
    %c0_34 = arith.constant 0 : index
    %44 = vector.load %arg12[%c0_32, %c0_33, %c0_34] : memref<1x4x256xf32, #tpu.memory_space<vmem>>, vector<1x4x256xf32>
    %45 = vector.shape_cast %44 : vector<1x4x256xf32> to vector<4x256xf32>
    %46 = vector.shape_cast %43 : vector<4x256xf32> to vector<1x4x256xf32>
    tpu.vector_store %arg12[%c0_32, %c0_33, %c0_34], %46 {strides = array<i32>} : memref<1x4x256xf32, #tpu.memory_space<vmem>>, vector<1x4x256xf32>,
    return
  }
  func.func @transform_0(%arg0: i32) -> (i32, i32, i32) {
    %c0_i32 = arith.constant 0 : i32
    %c0_i32_0 = arith.constant 0 : i32
    %c0_i32_1 = arith.constant 0 : i32
    return %arg0, %c0_i32, %c0_i32_0 : i32, i32, i32
  }
  func.func @transform_1(%arg0: i32) -> (i32, i32, i32) {
    %c0_i32 = arith.constant 0 : i32
    %c0_i32_0 = arith.constant 0 : i32
    %c0_i32_1 = arith.constant 0 : i32
    return %arg0, %c0_i32, %c0_i32_0 : i32, i32, i32
  }
  func.func @transform_2(%arg0: i32) -> (i32, i32, i32) {
    %c0_i32 = arith.constant 0 : i32
    %c0_i32_0 = arith.constant 0 : i32
    %c0_i32_1 = arith.constant 0 : i32
    %c0_i32_2 = arith.constant 0 : i32
    return %c0_i32, %c0_i32_0, %c0_i32_1 : i32, i32, i32
  }
  func.func @transform_3(%arg0: i32) -> (i32, i32, i32) {
    %c0_i32 = arith.constant 0 : i32
    %c0_i32_0 = arith.constant 0 : i32
    %c0_i32_1 = arith.constant 0 : i32
    %c0_i32_2 = arith.constant 0 : i32
    return %c0_i32, %c0_i32_0, %c0_i32_1 : i32, i32, i32
  }
  func.func @transform_4(%arg0: i32) -> (i32, i32) {
    %c0_i32 = arith.constant 0 : i32
    %c0_i32_0 = arith.constant 0 : i32
    %c0_i32_1 = arith.constant 0 : i32
    return %c0_i32, %c0_i32_0 : i32, i32
  }
  func.func @transform_5(%arg0: i32) -> (i32, i32) {
    %c0_i32 = arith.constant 0 : i32
    %c0_i32_0 = arith.constant 0 : i32
    %c0_i32_1 = arith.constant 0 : i32
    return %c0_i32, %c0_i32_0 : i32, i32
  }
  func.func @transform_6(%arg0: i32) -> (i32, i32) {
    %c0_i32 = arith.constant 0 : i32
    %c0_i32_0 = arith.constant 0 : i32
    %c0_i32_1 = arith.constant 0 : i32
    return %c0_i32, %c0_i32_0 : i32, i32
  }
  func.func @transform_7(%arg0: i32) -> (i32, i32) {
    %c0_i32 = arith.constant 0 : i32
    %c0_i32_0 = arith.constant 0 : i32
    %c0_i32_1 = arith.constant 0 : i32
    return %c0_i32, %c0_i32_0 : i32, i32
  }
  func.func @transform_8(%arg0: i32) -> (i32, i32) {
    %c0_i32 = arith.constant 0 : i32
    %c0_i32_0 = arith.constant 0 : i32
    %c0_i32_1 = arith.constant 0 : i32
    return %c0_i32, %c0_i32_0 : i32, i32
  }
  func.func @transform_9(%arg0: i32) -> (i32, i32) {
    %c0_i32 = arith.constant 0 : i32
    %c0_i32_0 = arith.constant 0 : i32
    %c0_i32_1 = arith.constant 0 : i32
    return %c0_i32, %c0_i32_0 : i32, i32
  }
  func.func @transform_10(%arg0: i32) -> (i32, i32) {
    %c0_i32 = arith.constant 0 : i32
    %c0_i32_0 = arith.constant 0 : i32
    %c0_i32_1 = arith.constant 0 : i32
    return %c0_i32, %c0_i32_0 : i32, i32
  }
  func.func @transform_11(%arg0: i32) -> (i32, i32, i32) {
    %c0_i32 = arith.constant 0 : i32
    %c0_i32_0 = arith.constant 0 : i32
    %c0_i32_1 = arith.constant 0 : i32
    return %arg0, %c0_i32, %c0_i32_0 : i32, i32, i32
  }
}

</mosaic_0001>

<llo_original>
// kernel: up_forward.1
$region0: #{up_forward.1}
  #allocation0 [shape = 'u32[]', space=smem, size = 0x4, offset = 0x4, fixed_abs, tag = 'smem constant byte address 0x4 - core index']
  #allocation1 [shape = 'u32[144,128]{1,0:T(1,128)}', space=vmem, size = 0x12000, scoped, tag = 'internal scratch']
  %s0 = inlined_call_operand.vmem [shape: f32[2,8,256], index: 0, kind: input, shape index: {}]
  %s1 = inlined_call_operand.vmem [shape: f32[2,8,64], index: 1, kind: input, shape index: {}]
  %s2 = inlined_call_operand.hbm [shape: f32[9,256,256], index: 2, kind: input, shape index: {}]
  %s3 = inlined_call_operand.hbm [shape: f32[9,64,256], index: 3, kind: input, shape index: {}]
  %s4 = inlined_call_operand.vmem [shape: f32[8,72], index: 4, kind: input, shape index: {}]
  %s5 = inlined_call_operand.vmem [shape: f32[8,72], index: 5, kind: input, shape index: {}]
  %s6 = inlined_call_operand.vmem [shape: f32[8,1], index: 6, kind: input, shape index: {}]
  %s7 = inlined_call_operand.vmem [shape: f32[8,1], index: 7, kind: input, shape index: {}]
  %s8 = inlined_call_operand.vmem [shape: f32[4,72], index: 8, kind: input, shape index: {}]
  %s9 = inlined_call_operand.vmem [shape: f32[4,1], index: 9, kind: input, shape index: {}]
  %s10 = inlined_call_operand.vmem [shape: f32[4,1], index: 10, kind: input, shape index: {}]
  %s11 = inlined_call_operand.vmem [shape: f32[2,4,256], index: 11, kind: output, shape index: {}]
  %s12 = sld [smem:[#allocation0]]
  $region85: #{up_forward.1} parent=0
    _
  %s14 = ssub.s32 1, %s12
  %s15 = scalar_select 0, %s14, %s12
  $region1: #{up_forward.1} parent=0
    #allocation2 [shape = 'u8[2359296]{0}', space=vmem, size = 0x240000, scoped, tag = 'input window, operand 2, single buffered']
    #allocation3 [shape = 's32[2]{0}', space=sflag, size = 0x8, scoped, tag = 'scoped memory for up_forward.1']
    #allocation4 [shape = 'u8[589824]{0}', space=vmem, size = 0x90000, scoped, tag = 'input window, operand 3, single buffered']
    #allocation5 [shape = 's32[1]{0}', space=sflag, size = 0x4, scoped, tag = 'scoped memory for up_forward.1']
    %16 = vsyncpa [#allocation3], 0
    %17 = vsyncpa [#allocation5], 0
    loop: start=0, step=1, limit=4
    $region2: #{up_forward.1} parent=1 // loop_pre_header
      _
    $region3: #{up_forward.1} parent=1 // loop_header
      %s19 = sphi 0, %s23
      %p20 = scmp.ge.s32.totalorder %s19, 4
      %s29 = sphi 0, %s31
      %s32 = sphi 0, %s29
      %s33 = sphi 0, %s32
      %s49 = sphi 0, %s33
      %s55 = sphi 0, %s57
      %s58 = sphi 0, %s55
      %s59 = sphi 0, %s58
      %s75 = sphi 0, %s59
      %s79 = sphi 0, %s79
      %s81 = sphi 0, %s79
      %s82 = sphi 0, %s81
      %s96 = sphi 0, %s82
      %s100 = sphi 0, %s100
      %s102 = sphi 0, %s100
      %s103 = sphi 0, %s102
      %s117 = sphi 0, %s103
      %s121 = sphi 0, %s121
      %s123 = sphi 0, %s121
      %s124 = sphi 0, %s123
      %s138 = sphi 0, %s124
      %s142 = sphi 0, %s142
      %s144 = sphi 0, %s142
      %s145 = sphi 0, %s144
      %s159 = sphi 0, %s145
      %s163 = sphi 0, %s163
      %s165 = sphi 0, %s163
      %s166 = sphi 0, %s165
      %s180 = sphi 0, %s166
      %s184 = sphi 0, %s184
      %s186 = sphi 0, %s184
      %s187 = sphi 0, %s186
      %s201 = sphi 0, %s187
      %s205 = sphi 0, %s205
      %s207 = sphi 0, %s205
      %s208 = sphi 0, %s207
      %s222 = sphi 0, %s208
      %s226 = sphi 0, %s226
      %s228 = sphi 0, %s226
      %s229 = sphi 0, %s228
      %s243 = sphi 0, %s229
      %s247 = sphi 0, %s247
      %s249 = sphi 0, %s247
      %s250 = sphi 0, %s249
      %s264 = sphi 0, %s250
      %s270 = sphi 0, %s272
      %s273 = sphi 0, %s270
      %s274 = sphi 0, %s273
      %s290 = sphi 0, %s274
    $region4: #{up_forward.1} parent=1 // loop_header_branch
      %22 = sbr.rel (%p20) target = $region8
    $region5: #{up_forward.1} parent=1 // loop_body
      %s24 = ssub.s32 %s19, 1
      %s25 = ssub.s32 %s19, 2
      %s26 = sadd.s32 %s19, 1
      %s27 = ssub.s32 %s19, %s26
      %p28 = scmp.eq.s32.totalorder %s27, 0
      %s30 = sadd.s32 %s29, 1
      %s31 = scalar_select %p28, %s29, %s30
      %p34 = pneg %p28
      %p35 = scmp.eq.s32.totalorder %s19, 1
      %p36 = por %p34, %p35
      %p37 = scmp.ne.s32.totalorder %s29, %s32
      %p38 = scmp.eq.s32.totalorder %s19, 0
      %p39 = por %p37, %p38
      %p40 = scmp.ne.s32.totalorder %s29, %s32
      %p41 = scmp.eq.s32.totalorder %s24, 1
      %p42 = por %p40, %p41
      %p43 = scmp.ne.s32.totalorder %s32, %s33
      %p44 = scmp.eq.s32.totalorder %s24, 0
      %p45 = por %p43, %p44
      %p46 = scmp.ne.s32.totalorder %s32, %s33
      %p47 = scmp.eq.s32.totalorder %s25, 1
      %p48 = por %p46, %p47
      %p50 = scmp.ne.s32.totalorder %s33, %s49
      %p51 = scmp.eq.s32.totalorder %s25, 0
      %p52 = por %p50, %p51
      %s53 = ssub.s32 %s19, %s26
      %p54 = scmp.eq.s32.totalorder %s53, 0
      %s56 = sadd.s32 %s55, 1
      %s57 = scalar_select %p54, %s55, %s56
      %p60 = pneg %p54
      %p61 = scmp.eq.s32.totalorder %s19, 1
      %p62 = por %p60, %p61
      %p63 = scmp.ne.s32.totalorder %s55, %s58
      %p64 = scmp.eq.s32.totalorder %s19, 0
      %p65 = por %p63, %p64
      %p66 = scmp.ne.s32.totalorder %s55, %s58
      %p67 = scmp.eq.s32.totalorder %s24, 1
      %p68 = por %p66, %p67
      %p69 = scmp.ne.s32.totalorder %s58, %s59
      %p70 = scmp.eq.s32.totalorder %s24, 0
      %p71 = por %p69, %p70
      %p72 = scmp.ne.s32.totalorder %s58, %s59
      %p73 = scmp.eq.s32.totalorder %s25, 1
      %p74 = por %p72, %p73
      %p76 = scmp.ne.s32.totalorder %s59, %s75
      %p77 = scmp.eq.s32.totalorder %s25, 0
      %p78 = por %p76, %p77
      %s80 = sadd.s32 %s79, 1
      %p83 = scmp.eq.s32.totalorder %s19, 1
      %p84 = scmp.ne.s32.totalorder %s79, %s81
      %p85 = scmp.eq.s32.totalorder %s19, 0
      %p86 = por %p84, %p85
      %p87 = scmp.ne.s32.totalorder %s79, %s81
      %p88 = scmp.eq.s32.totalorder %s24, 1
      %p89 = por %p87, %p88
      %p90 = scmp.ne.s32.totalorder %s81, %s82
      %p91 = scmp.eq.s32.totalorder %s24, 0
      %p92 = por %p90, %p91
      %p93 = scmp.ne.s32.totalorder %s81, %s82
      %p94 = scmp.eq.s32.totalorder %s25, 1
      %p95 = por %p93, %p94
      %p97 = scmp.ne.s32.totalorder %s82, %s96
      %p98 = scmp.eq.s32.totalorder %s25, 0
      %p99 = por %p97, %p98
      %s101 = sadd.s32 %s100, 1
      %p104 = scmp.eq.s32.totalorder %s19, 1
      %p105 = scmp.ne.s32.totalorder %s100, %s102
      %p106 = scmp.eq.s32.totalorder %s19, 0
      %p107 = por %p105, %p106
      %p108 = scmp.ne.s32.totalorder %s100, %s102
      %p109 = scmp.eq.s32.totalorder %s24, 1
      %p110 = por %p108, %p109
      %p111 = scmp.ne.s32.totalorder %s102, %s103
      %p112 = scmp.eq.s32.totalorder %s24, 0
      %p113 = por %p111, %p112
      %p114 = scmp.ne.s32.totalorder %s102, %s103
      %p115 = scmp.eq.s32.totalorder %s25, 1
      %p116 = por %p114, %p115
      %p118 = scmp.ne.s32.totalorder %s103, %s117
      %p119 = scmp.eq.s32.totalorder %s25, 0
      %p120 = por %p118, %p119
      %s122 = sadd.s32 %s121, 1
      %p125 = scmp.eq.s32.totalorder %s19, 1
      %p126 = scmp.ne.s32.totalorder %s121, %s123
      %p127 = scmp.eq.s32.totalorder %s19, 0
      %p128 = por %p126, %p127
      %p129 = scmp.ne.s32.totalorder %s121, %s123
      %p130 = scmp.eq.s32.totalorder %s24, 1
      %p131 = por %p129, %p130
      %p132 = scmp.ne.s32.totalorder %s123, %s124
      %p133 = scmp.eq.s32.totalorder %s24, 0
      %p134 = por %p132, %p133
      %p135 = scmp.ne.s32.totalorder %s123, %s124
      %p136 = scmp.eq.s32.totalorder %s25, 1
      %p137 = por %p135, %p136
      %p139 = scmp.ne.s32.totalorder %s124, %s138
      %p140 = scmp.eq.s32.totalorder %s25, 0
      %p141 = por %p139, %p140
      %s143 = sadd.s32 %s142, 1
      %p146 = scmp.eq.s32.totalorder %s19, 1
      %p147 = scmp.ne.s32.totalorder %s142, %s144
      %p148 = scmp.eq.s32.totalorder %s19, 0
      %p149 = por %p147, %p148
      %p150 = scmp.ne.s32.totalorder %s142, %s144
      %p151 = scmp.eq.s32.totalorder %s24, 1
      %p152 = por %p150, %p151
      %p153 = scmp.ne.s32.totalorder %s144, %s145
      %p154 = scmp.eq.s32.totalorder %s24, 0
      %p155 = por %p153, %p154
      %p156 = scmp.ne.s32.totalorder %s144, %s145
      %p157 = scmp.eq.s32.totalorder %s25, 1
      %p158 = por %p156, %p157
      %p160 = scmp.ne.s32.totalorder %s145, %s159
      %p161 = scmp.eq.s32.totalorder %s25, 0
      %p162 = por %p160, %p161
      %s164 = sadd.s32 %s163, 1
      %p167 = scmp.eq.s32.totalorder %s19, 1
      %p168 = scmp.ne.s32.totalorder %s163, %s165
      %p169 = scmp.eq.s32.totalorder %s19, 0
      %p170 = por %p168, %p169
      %p171 = scmp.ne.s32.totalorder %s163, %s165
      %p172 = scmp.eq.s32.totalorder %s24, 1
      %p173 = por %p171, %p172
      %p174 = scmp.ne.s32.totalorder %s165, %s166
      %p175 = scmp.eq.s32.totalorder %s24, 0
      %p176 = por %p174, %p175
      %p177 = scmp.ne.s32.totalorder %s165, %s166
      %p178 = scmp.eq.s32.totalorder %s25, 1
      %p179 = por %p177, %p178
      %p181 = scmp.ne.s32.totalorder %s166, %s180
      %p182 = scmp.eq.s32.totalorder %s25, 0
      %p183 = por %p181, %p182
      %s185 = sadd.s32 %s184, 1
      %p188 = scmp.eq.s32.totalorder %s19, 1
      %p189 = scmp.ne.s32.totalorder %s184, %s186
      %p190 = scmp.eq.s32.totalorder %s19, 0
      %p191 = por %p189, %p190
      %p192 = scmp.ne.s32.totalorder %s184, %s186
      %p193 = scmp.eq.s32.totalorder %s24, 1
      %p194 = por %p192, %p193
      %p195 = scmp.ne.s32.totalorder %s186, %s187
      %p196 = scmp.eq.s32.totalorder %s24, 0
      %p197 = por %p195, %p196
      %p198 = scmp.ne.s32.totalorder %s186, %s187
      %p199 = scmp.eq.s32.totalorder %s25, 1
      %p200 = por %p198, %p199
      %p202 = scmp.ne.s32.totalorder %s187, %s201
      %p203 = scmp.eq.s32.totalorder %s25, 0
      %p204 = por %p202, %p203
      %s206 = sadd.s32 %s205, 1
      %p209 = scmp.eq.s32.totalorder %s19, 1
      %p210 = scmp.ne.s32.totalorder %s205, %s207
      %p211 = scmp.eq.s32.totalorder %s19, 0
      %p212 = por %p210, %p211
      %p213 = scmp.ne.s32.totalorder %s205, %s207
      %p214 = scmp.eq.s32.totalorder %s24, 1
      %p215 = por %p213, %p214
      %p216 = scmp.ne.s32.totalorder %s207, %s208
      %p217 = scmp.eq.s32.totalorder %s24, 0
      %p218 = por %p216, %p217
      %p219 = scmp.ne.s32.totalorder %s207, %s208
      %p220 = scmp.eq.s32.totalorder %s25, 1
      %p221 = por %p219, %p220
      %p223 = scmp.ne.s32.totalorder %s208, %s222
      %p224 = scmp.eq.s32.totalorder %s25, 0
      %p225 = por %p223, %p224
      %s227 = sadd.s32 %s226, 1
      %p230 = scmp.eq.s32.totalorder %s19, 1
      %p231 = scmp.ne.s32.totalorder %s226, %s228
      %p232 = scmp.eq.s32.totalorder %s19, 0
      %p233 = por %p231, %p232
      %p234 = scmp.ne.s32.totalorder %s226, %s228
      %p235 = scmp.eq.s32.totalorder %s24, 1
      %p236 = por %p234, %p235
      %p237 = scmp.ne.s32.totalorder %s228, %s229
      %p238 = scmp.eq.s32.totalorder %s24, 0
      %p239 = por %p237, %p238
      %p240 = scmp.ne.s32.totalorder %s228, %s229
      %p241 = scmp.eq.s32.totalorder %s25, 1
      %p242 = por %p240, %p241
      %p244 = scmp.ne.s32.totalorder %s229, %s243
      %p245 = scmp.eq.s32.totalorder %s25, 0
      %p246 = por %p244, %p245
      %s248 = sadd.s32 %s247, 1
      %p251 = scmp.eq.s32.totalorder %s19, 1
      %p252 = scmp.ne.s32.totalorder %s247, %s249
      %p253 = scmp.eq.s32.totalorder %s19, 0
      %p254 = por %p252, %p253
      %p255 = scmp.ne.s32.totalorder %s247, %s249
      %p256 = scmp.eq.s32.totalorder %s24, 1
      %p257 = por %p255, %p256
      %p258 = scmp.ne.s32.totalorder %s249, %s250
      %p259 = scmp.eq.s32.totalorder %s24, 0
      %p260 = por %p258, %p259
      %p261 = scmp.ne.s32.totalorder %s249, %s250
      %p262 = scmp.eq.s32.totalorder %s25, 1
      %p263 = por %p261, %p262
      %p265 = scmp.ne.s32.totalorder %s250, %s264
      %p266 = scmp.eq.s32.totalorder %s25, 0
      %p267 = por %p265, %p266
      %s268 = ssub.s32 %s19, %s26
      %p269 = scmp.eq.s32.totalorder %s268, 0
      %s271 = sadd.s32 %s270, 1
      %s272 = scalar_select %p269, %s270, %s271
      %p275 = pneg %p269
      %p276 = scmp.eq.s32.totalorder %s19, 1
      %p277 = por %p275, %p276
      %p278 = scmp.ne.s32.totalorder %s270, %s273
      %p279 = scmp.eq.s32.totalorder %s19, 0
      %p280 = por %p278, %p279
      %p281 = scmp.ne.s32.totalorder %s270, %s273
      %p282 = scmp.eq.s32.totalorder %s24, 1
      %p283 = por %p281, %p282
      %p284 = scmp.ne.s32.totalorder %s273, %s274
      %p285 = scmp.eq.s32.totalorder %s24, 0
      %p286 = por %p284, %p285
      %p287 = scmp.ne.s32.totalorder %s273, %s274
      %p288 = scmp.eq.s32.totalorder %s25, 1
      %p289 = por %p287, %p288
      %p291 = scmp.ne.s32.totalorder %s274, %s290
      %p292 = scmp.eq.s32.totalorder %s25, 0
      %p293 = por %p291, %p292
      %p294 = scmp.le.s32.totalorder 1, %s19
      %p295 = scmp.lt.s32.totalorder %s19, 3
      %p296 = pnand %p294, %p295
      %p297 = pneg %p296
      // Predicated region
      $region9: #{up_forward.1} parent=5 // pred_check
        _
      $region10: #{up_forward.1} parent=5 // pred_check_branch
        %299 = sbr.rel (%p296) target = $region12
      $region11: #{up_forward.1} parent=5 // pred_region
        %s300 = ssub.s32 %s19, 1
        // Predicated region
        $region13: #{up_forward.1} parent=11 // pred_check
          %p301 = pneg %p92
        $region14: #{up_forward.1} parent=11 // pred_check_branch
          %303 = sbr.rel (%p301) target = $region16
        $region15: #{up_forward.1} parent=11 // pred_region
          %s305 = ssub.s32 73728, 73728
          %306 = vsyncadd [#allocation3], %s305
          %s307 = sshll.u32 [#allocation2], 4
          %s308 = int_to_ptr.vmem [resolvable:$true] %s307
          %313 = dma.hbm_to_vmem [thread:$0]  %s2, 73728, %s308, [#allocation3], 256, 256, 16
        $region16: #{up_forward.1} parent=11 // pred_fallthru
          _
        // Predicated region
        $region17: #{up_forward.1} parent=11 // pred_check
          %p314 = pneg %p113
        $region18: #{up_forward.1} parent=11 // pred_check_branch
          %316 = sbr.rel (%p314) target = $region20
        $region19: #{up_forward.1} parent=11 // pred_region
          %s318 = ssub.s32 18432, 18432
          %319 = vsyncadd [#allocation5], %s318
          %s320 = sshll.u32 [#allocation4], 4
          %s321 = int_to_ptr.vmem [resolvable:$true] %s320
          %326 = dma.hbm_to_vmem [thread:$0]  %s3, 18432, %s321, [#allocation5], 256, 256, 16
        $region20: #{up_forward.1} parent=11 // pred_fallthru
          _
        // Predicated region
        $region21: #{up_forward.1} parent=11 // pred_check
          %p327 = pneg %p134
        $region22: #{up_forward.1} parent=11 // pred_check_branch
          %329 = sbr.rel (%p327) target = $region24
        $region23: #{up_forward.1} parent=11 // pred_region
          _
        $region24: #{up_forward.1} parent=11 // pred_fallthru
          _
        // Predicated region
        $region25: #{up_forward.1} parent=11 // pred_check
          %p330 = pneg %p155
        $region26: #{up_forward.1} parent=11 // pred_check_branch
          %332 = sbr.rel (%p330) target = $region28
        $region27: #{up_forward.1} parent=11 // pred_region
          _
        $region28: #{up_forward.1} parent=11 // pred_fallthru
          _
        // Predicated region
        $region29: #{up_forward.1} parent=11 // pred_check
          %p333 = pneg %p176
        $region30: #{up_forward.1} parent=11 // pred_check_branch
          %335 = sbr.rel (%p333) target = $region32
        $region31: #{up_forward.1} parent=11 // pred_region
          _
        $region32: #{up_forward.1} parent=11 // pred_fallthru
          _
        // Predicated region
        $region33: #{up_forward.1} parent=11 // pred_check
          %p336 = pneg %p197
        $region34: #{up_forward.1} parent=11 // pred_check_branch
          %338 = sbr.rel (%p336) target = $region36
        $region35: #{up_forward.1} parent=11 // pred_region
          _
        $region36: #{up_forward.1} parent=11 // pred_fallthru
          _
        // Predicated region
        $region37: #{up_forward.1} parent=11 // pred_check
          %p339 = pneg %p218
        $region38: #{up_forward.1} parent=11 // pred_check_branch
          %341 = sbr.rel (%p339) target = $region40
        $region39: #{up_forward.1} parent=11 // pred_region
          _
        $region40: #{up_forward.1} parent=11 // pred_fallthru
          _
        // Predicated region
        $region41: #{up_forward.1} parent=11 // pred_check
          %p342 = pneg %p239
        $region42: #{up_forward.1} parent=11 // pred_check_branch
          %344 = sbr.rel (%p342) target = $region44
        $region43: #{up_forward.1} parent=11 // pred_region
          _
        $region44: #{up_forward.1} parent=11 // pred_fallthru
          _
        // Predicated region
        $region45: #{up_forward.1} parent=11 // pred_check
          %p345 = pneg %p260
        $region46: #{up_forward.1} parent=11 // pred_check_branch
          %347 = sbr.rel (%p345) target = $region48
        $region47: #{up_forward.1} parent=11 // pred_region
          _
        $region48: #{up_forward.1} parent=11 // pred_fallthru
          _
      $region12: #{up_forward.1} parent=5 // pred_fallthru
        _
      %p348 = scmp.lt.s32.totalorder %s19, 2
      // Predicated region
      $region49: #{up_forward.1} parent=5 // pred_check
        %p349 = pneg %p348
      $region50: #{up_forward.1} parent=5 // pred_check_branch
        %351 = sbr.rel (%p349) target = $region52
      $region51: #{up_forward.1} parent=5 // pred_region
        // Predicated region
        $region53: #{up_forward.1} parent=51 // pred_check
          %p352 = pneg %p39
        $region54: #{up_forward.1} parent=51 // pred_check_branch
          %354 = sbr.rel (%p352) target = $region56
        $region55: #{up_forward.1} parent=51 // pred_region
          %p355 = scmp.lt.s32.totalorder %s19, 1
          %s356 = scalar_select %p355, %s19, 1
          %s357 = smul.addr %s356, 2
          %s358 = smul.addr %s357, 8
          %s359 = scalar_lea.vmem %s0, %s358
        $region56: #{up_forward.1} parent=51 // pred_fallthru
          _
        // Predicated region
        $region57: #{up_forward.1} parent=51 // pred_check
          %p360 = pneg %p65
        $region58: #{up_forward.1} parent=51 // pred_check_branch
          %362 = sbr.rel (%p360) target = $region60
        $region59: #{up_forward.1} parent=51 // pred_region
          %p363 = scmp.lt.s32.totalorder %s19, 1
          %s364 = scalar_select %p363, %s19, 1
          %s365 = smul.addr %s364, 8
          %s366 = scalar_lea.vmem %s1, %s365
        $region60: #{up_forward.1} parent=51 // pred_fallthru
          _
      $region52: #{up_forward.1} parent=5 // pred_fallthru
        _
      %p367 = scmp.le.s32.totalorder 1, %s19
      %p368 = scmp.lt.s32.totalorder %s19, 3
      %p369 = pnand %p367, %p368
      %p370 = pneg %p369
      // Predicated region
      $region61: #{up_forward.1} parent=5 // pred_check
        _
      $region62: #{up_forward.1} parent=5 // pred_check_branch
        %372 = sbr.rel (%p369) target = $region64
      $region63: #{up_forward.1} parent=5 // pred_region
        %s373 = ssub.s32 %s19, 1
        // Predicated region
        $region65: #{up_forward.1} parent=63 // pred_check
          %p374 = pneg %p92
        $region66: #{up_forward.1} parent=63 // pred_check_branch
          %376 = sbr.rel (%p374) target = $region68
        $region67: #{up_forward.1} parent=63 // pred_region
          %377 = dma.done [#allocation3], 73728
        $region68: #{up_forward.1} parent=63 // pred_fallthru
          _
        // Predicated region
        $region69: #{up_forward.1} parent=63 // pred_check
          %p378 = pneg %p113
        $region70: #{up_forward.1} parent=63 // pred_check_branch
          %380 = sbr.rel (%p378) target = $region72
        $region71: #{up_forward.1} parent=63 // pred_region
          %381 = dma.done [#allocation5], 18432
        $region72: #{up_forward.1} parent=63 // pred_fallthru
          _
        %p382 = scmp.lt.s32.totalorder %s24, 1
        %s383 = scalar_select %p382, %s24, 1
        %s384 = smul.addr %s383, 2
        %s385 = smul.addr %s384, 8
        %s386 = scalar_lea.vmem %s0, %s385
        %p387 = pneg %p45
        %p388 = pneg %p42
        %p389 = scmp.lt.s32.totalorder %s24, 1
        %s390 = scalar_select %p389, %s24, 1
        %s391 = smul.addr %s390, 8
        %s392 = scalar_lea.vmem %s1, %s391
        %p393 = pneg %p71
        %p394 = pneg %p68
        %p395 = pneg %p92
        %p396 = pneg %p89
        %p397 = pneg %p113
        %p398 = pneg %p110
        %p399 = pneg %p134
        %p400 = pneg %p131
        %p401 = pneg %p155
        %p402 = pneg %p152
        %p403 = pneg %p176
        %p404 = pneg %p173
        %p405 = pneg %p197
        %p406 = pneg %p194
        %p407 = pneg %p218
        %p408 = pneg %p215
        %p409 = pneg %p239
        %p410 = pneg %p236
        %p411 = pneg %p260
        %p412 = pneg %p257
        %p413 = pneg %p286
        %p414 = pneg %p283
        %p415 = scmp.lt.s32.totalorder %s24, 1
        %s416 = scalar_select %p415, %s24, 1
        %s417 = smul.addr %s416, 2
        %s418 = smul.addr %s417, 4
        %s419 = scalar_lea.vmem %s11, %s418
        %p420 = scmp.lt.s32.totalorder %s24, 1
        %s421 = scalar_select %p420, %s24, 1
        %s422 = smul.addr %s421, 2
        %s423 = smul.addr %s422, 8
        %s424 = scalar_lea.vmem %s0, %s423
        %p425 = scmp.lt.s32.totalorder %s24, 1
        %s426 = scalar_select %p425, %s24, 1
        %s427 = smul.addr %s426, 8
        %s428 = scalar_lea.vmem %s1, %s427
        %p429 = scmp.lt.s32.totalorder %s24, 1
        %s430 = scalar_select %p429, %s24, 1
        %s431 = smul.addr %s430, 2
        %s432 = smul.addr %s431, 4
        %s433 = scalar_lea.vmem %s11, %s432
        %v434 = vld [vmem:[#allocation2] sm:$0xff]
        %v435 = vld [vmem:[#allocation2 + $0x8] sm:$0xff]
        %v436 = vld [vmem:[#allocation2 + $0x10] sm:$0xff]
        %v437 = vld [vmem:[#allocation2 + $0x18] sm:$0xff]
        %v438 = vld [vmem:[#allocation2 + $0x20] sm:$0xff]
        %v439 = vld [vmem:[#allocation2 + $0x28] sm:$0xff]
        %v440 = vld [vmem:[#allocation2 + $0x30] sm:$0xff]
        %v441 = vld [vmem:[#allocation2 + $0x38] sm:$0xff]
        %v442 = vld [vmem:[#allocation2 + $0x40] sm:$0xff]
        %v443 = vld [vmem:[#allocation2 + $0x48] sm:$0xff]
        %v444 = vld [vmem:[#allocation2 + $0x50] sm:$0xff]
        %v445 = vld [vmem:[#allocation2 + $0x58] sm:$0xff]
        %v446 = vld [vmem:[#allocation2 + $0x60] sm:$0xff]
        %v447 = vld [vmem:[#allocation2 + $0x68] sm:$0xff]
        %v448 = vld [vmem:[#allocation2 + $0x70] sm:$0xff]
        %v449 = vld [vmem:[#allocation2 + $0x78] sm:$0xff]
        %v450 = vld [vmem:[#allocation2 + $0x80] sm:$0xff]
        %v451 = vld [vmem:[#allocation2 + $0x88] sm:$0xff]
        %v452 = vld [vmem:[#allocation2 + $0x90] sm:$0xff]
        %v453 = vld [vmem:[#allocation2 + $0x98] sm:$0xff]
        %v454 = vld [vmem:[#allocation2 + $0xa0] sm:$0xff]
        %v455 = vld [vmem:[#allocation2 + $0xa8] sm:$0xff]
        %v456 = vld [vmem:[#allocation2 + $0xb0] sm:$0xff]
        %v457 = vld [vmem:[#allocation2 + $0xb8] sm:$0xff]
        %v458 = vld [vmem:[#allocation2 + $0xc0] sm:$0xff]
        %v459 = vld [vmem:[#allocation2 + $0xc8] sm:$0xff]
        %v460 = vld [vmem:[#allocation2 + $0xd0] sm:$0xff]
        %v461 = vld [vmem:[#allocation2 + $0xd8] sm:$0xff]
        %v462 = vld [vmem:[#allocation2 + $0xe0] sm:$0xff]
        %v463 = vld [vmem:[#allocation2 + $0xe8] sm:$0xff]
        %v464 = vld [vmem:[#allocation2 + $0xf0] sm:$0xff]
        %v465 = vld [vmem:[#allocation2 + $0xf8] sm:$0xff]
        %v466 = vld [vmem:[#allocation2 + $0x100] sm:$0xff]
        %v467 = vld [vmem:[#allocation2 + $0x108] sm:$0xff]
        %v468 = vld [vmem:[#allocation2 + $0x110] sm:$0xff]
        %v469 = vld [vmem:[#allocation2 + $0x118] sm:$0xff]
        %v470 = vld [vmem:[#allocation2 + $0x120] sm:$0xff]
        %v471 = vld [vmem:[#allocation2 + $0x128] sm:$0xff]
        %v472 = vld [vmem:[#allocation2 + $0x130] sm:$0xff]
        %v473 = vld [vmem:[#allocation2 + $0x138] sm:$0xff]
        %v474 = vld [vmem:[#allocation2 + $0x140] sm:$0xff]
        %v475 = vld [vmem:[#allocation2 + $0x148] sm:$0xff]
        %v476 = vld [vmem:[#allocation2 + $0x150] sm:$0xff]
        %v477 = vld [vmem:[#allocation2 + $0x158] sm:$0xff]
        %v478 = vld [vmem:[#allocation2 + $0x160] sm:$0xff]
        %v479 = vld [vmem:[#allocation2 + $0x168] sm:$0xff]
        %v480 = vld [vmem:[#allocation2 + $0x170] sm:$0xff]
        %v481 = vld [vmem:[#allocation2 + $0x178] sm:$0xff]
        %v482 = vld [vmem:[#allocation2 + $0x180] sm:$0xff]
        %v483 = vld [vmem:[#allocation2 + $0x188] sm:$0xff]
        %v484 = vld [vmem:[#allocation2 + $0x190] sm:$0xff]
        %v485 = vld [vmem:[#allocation2 + $0x198] sm:$0xff]
        %v486 = vld [vmem:[#allocation2 + $0x1a0] sm:$0xff]
        %v487 = vld [vmem:[#allocation2 + $0x1a8] sm:$0xff]
        %v488 = vld [vmem:[#allocation2 + $0x1b0] sm:$0xff]
        %v489 = vld [vmem:[#allocation2 + $0x1b8] sm:$0xff]
        %v490 = vld [vmem:[#allocation2 + $0x1c0] sm:$0xff]
        %v491 = vld [vmem:[#allocation2 + $0x1c8] sm:$0xff]
        %v492 = vld [vmem:[#allocation2 + $0x1d0] sm:$0xff]
        %v493 = vld [vmem:[#allocation2 + $0x1d8] sm:$0xff]
        %v494 = vld [vmem:[#allocation2 + $0x1e0] sm:$0xff]
        %v495 = vld [vmem:[#allocation2 + $0x1e8] sm:$0xff]
        %v496 = vld [vmem:[#allocation2 + $0x1f0] sm:$0xff]
        %v497 = vld [vmem:[#allocation2 + $0x1f8] sm:$0xff]
        %v498 = vld [vmem:[#allocation2 + $0x200] sm:$0xff]
        %v499 = vld [vmem:[#allocation2 + $0x208] sm:$0xff]
        %v500 = vld [vmem:[#allocation2 + $0x210] sm:$0xff]
        %v501 = vld [vmem:[#allocation2 + $0x218] sm:$0xff]
        %v502 = vld [vmem:[#allocation2 + $0x220] sm:$0xff]
        %v503 = vld [vmem:[#allocation2 + $0x228] sm:$0xff]
        %v504 = vld [vmem:[#allocation2 + $0x230] sm:$0xff]
        %v505 = vld [vmem:[#allocation2 + $0x238] sm:$0xff]
        %v506 = vld [vmem:[#allocation2 + $0x240] sm:$0xff]
        %v507 = vld [vmem:[#allocation2 + $0x248] sm:$0xff]
        %v508 = vld [vmem:[#allocation2 + $0x250] sm:$0xff]
        %v509 = vld [vmem:[#allocation2 + $0x258] sm:$0xff]
        %v510 = vld [vmem:[#allocation2 + $0x260] sm:$0xff]
        %v511 = vld [vmem:[#allocation2 + $0x268] sm:$0xff]
        %v512 = vld [vmem:[#allocation2 + $0x270] sm:$0xff]
        %v513 = vld [vmem:[#allocation2 + $0x278] sm:$0xff]
        %v514 = vld [vmem:[#allocation2 + $0x280] sm:$0xff]
        %v515 = vld [vmem:[#allocation2 + $0x288] sm:$0xff]
        %v516 = vld [vmem:[#allocation2 + $0x290] sm:$0xff]
        %v517 = vld [vmem:[#allocation2 + $0x298] sm:$0xff]
        %v518 = vld [vmem:[#allocation2 + $0x2a0] sm:$0xff]
        %v519 = vld [vmem:[#allocation2 + $0x2a8] sm:$0xff]
        %v520 = vld [vmem:[#allocation2 + $0x2b0] sm:$0xff]
        %v521 = vld [vmem:[#allocation2 + $0x2b8] sm:$0xff]
        %v522 = vld [vmem:[#allocation2 + $0x2c0] sm:$0xff]
        %v523 = vld [vmem:[#allocation2 + $0x2c8] sm:$0xff]
        %v524 = vld [vmem:[#allocation2 + $0x2d0] sm:$0xff]
        %v525 = vld [vmem:[#allocation2 + $0x2d8] sm:$0xff]
        %v526 = vld [vmem:[#allocation2 + $0x2e0] sm:$0xff]
        %v527 = vld [vmem:[#allocation2 + $0x2e8] sm:$0xff]
        %v528 = vld [vmem:[#allocation2 + $0x2f0] sm:$0xff]
        %v529 = vld [vmem:[#allocation2 + $0x2f8] sm:$0xff]
        %v530 = vld [vmem:[#allocation2 + $0x300] sm:$0xff]
        %v531 = vld [vmem:[#allocation2 + $0x308] sm:$0xff]
        %v532 = vld [vmem:[#allocation2 + $0x310] sm:$0xff]
        %v533 = vld [vmem:[#allocation2 + $0x318] sm:$0xff]
        %v534 = vld [vmem:[#allocation2 + $0x320] sm:$0xff]
        %v535 = vld [vmem:[#allocation2 + $0x328] sm:$0xff]
        %v536 = vld [vmem:[#allocation2 + $0x330] sm:$0xff]
        %v537 = vld [vmem:[#allocation2 + $0x338] sm:$0xff]
        %v538 = vld [vmem:[#allocation2 + $0x340] sm:$0xff]
        %v539 = vld [vmem:[#allocation2 + $0x348] sm:$0xff]
        %v540 = vld [vmem:[#allocation2 + $0x350] sm:$0xff]
        %v541 = vld [vmem:[#allocation2 + $0x358] sm:$0xff]
        %v542 = vld [vmem:[#allocation2 + $0x360] sm:$0xff]
        %v543 = vld [vmem:[#allocation2 + $0x368] sm:$0xff]
        %v544 = vld [vmem:[#allocation2 + $0x370] sm:$0xff]
        %v545 = vld [vmem:[#allocation2 + $0x378] sm:$0xff]
        %v546 = vld [vmem:[#allocation2 + $0x380] sm:$0xff]
        %v547 = vld [vmem:[#allocation2 + $0x388] sm:$0xff]
        %v548 = vld [vmem:[#allocation2 + $0x390] sm:$0xff]
        %v549 = vld [vmem:[#allocation2 + $0x398] sm:$0xff]
        %v550 = vld [vmem:[#allocation2 + $0x3a0] sm:$0xff]
        %v551 = vld [vmem:[#allocation2 + $0x3a8] sm:$0xff]
        %v552 = vld [vmem:[#allocation2 + $0x3b0] sm:$0xff]
        %v553 = vld [vmem:[#allocation2 + $0x3b8] sm:$0xff]
        %v554 = vld [vmem:[#allocation2 + $0x3c0] sm:$0xff]
        %v555 = vld [vmem:[#allocation2 + $0x3c8] sm:$0xff]
        %v556 = vld [vmem:[#allocation2 + $0x3d0] sm:$0xff]
        %v557 = vld [vmem:[#allocation2 + $0x3d8] sm:$0xff]
        %v558 = vld [vmem:[#allocation2 + $0x3e0] sm:$0xff]
        %v559 = vld [vmem:[#allocation2 + $0x3e8] sm:$0xff]
        %v560 = vld [vmem:[#allocation2 + $0x3f0] sm:$0xff]
        %v561 = vld [vmem:[#allocation2 + $0x3f8] sm:$0xff]
        %v562 = vld [vmem:[#allocation2 + $0x400] sm:$0xff]
        %v563 = vld [vmem:[#allocation2 + $0x408] sm:$0xff]
        %v564 = vld [vmem:[#allocation2 + $0x410] sm:$0xff]
        %v565 = vld [vmem:[#allocation2 + $0x418] sm:$0xff]
        %v566 = vld [vmem:[#allocation2 + $0x420] sm:$0xff]
        %v567 = vld [vmem:[#allocation2 + $0x428] sm:$0xff]
        %v568 = vld [vmem:[#allocation2 + $0x430] sm:$0xff]
        %v569 = vld [vmem:[#allocation2 + $0x438] sm:$0xff]
        %v570 = vld [vmem:[#allocation2 + $0x440] sm:$0xff]
        %v571 = vld [vmem:[#allocation2 + $0x448] sm:$0xff]
        %v572 = vld [vmem:[#allocation2 + $0x450] sm:$0xff]
        %v573 = vld [vmem:[#allocation2 + $0x458] sm:$0xff]
        %v574 = vld [vmem:[#allocation2 + $0x460] sm:$0xff]
        %v575 = vld [vmem:[#allocation2 + $0x468] sm:$0xff]
        %v576 = vld [vmem:[#allocation2 + $0x470] sm:$0xff]
        %v577 = vld [vmem:[#allocation2 + $0x478] sm:$0xff]
        %v578 = vld [vmem:[#allocation2 + $0x480] sm:$0xff]
        %v579 = vld [vmem:[#allocation2 + $0x488] sm:$0xff]
        %v580 = vld [vmem:[#allocation2 + $0x490] sm:$0xff]
        %v581 = vld [vmem:[#allocation2 + $0x498] sm:$0xff]
        %v582 = vld [vmem:[#allocation2 + $0x4a0] sm:$0xff]
        %v583 = vld [vmem:[#allocation2 + $0x4a8] sm:$0xff]
        %v584 = vld [vmem:[#allocation2 + $0x4b0] sm:$0xff]
        %v585 = vld [vmem:[#allocation2 + $0x4b8] sm:$0xff]
        %v586 = vld [vmem:[#allocation2 + $0x4c0] sm:$0xff]
        %v587 = vld [vmem:[#allocation2 + $0x4c8] sm:$0xff]
        %v588 = vld [vmem:[#allocation2 + $0x4d0] sm:$0xff]
        %v589 = vld [vmem:[#allocation2 + $0x4d8] sm:$0xff]
        %v590 = vld [vmem:[#allocation2 + $0x4e0] sm:$0xff]
        %v591 = vld [vmem:[#allocation2 + $0x4e8] sm:$0xff]
        %v592 = vld [vmem:[#allocation2 + $0x4f0] sm:$0xff]
        %v593 = vld [vmem:[#allocation2 + $0x4f8] sm:$0xff]
        %v594 = vld [vmem:[#allocation2 + $0x500] sm:$0xff]
        %v595 = vld [vmem:[#allocation2 + $0x508] sm:$0xff]
        %v596 = vld [vmem:[#allocation2 + $0x510] sm:$0xff]
        %v597 = vld [vmem:[#allocation2 + $0x518] sm:$0xff]
        %v598 = vld [vmem:[#allocation2 + $0x520] sm:$0xff]
        %v599 = vld [vmem:[#allocation2 + $0x528] sm:$0xff]
        %v600 = vld [vmem:[#allocation2 + $0x530] sm:$0xff]
        %v601 = vld [vmem:[#allocation2 + $0x538] sm:$0xff]
        %v602 = vld [vmem:[#allocation2 + $0x540] sm:$0xff]
        %v603 = vld [vmem:[#allocation2 + $0x548] sm:$0xff]
        %v604 = vld [vmem:[#allocation2 + $0x550] sm:$0xff]
        %v605 = vld [vmem:[#allocation2 + $0x558] sm:$0xff]
        %v606 = vld [vmem:[#allocation2 + $0x560] sm:$0xff]
        %v607 = vld [vmem:[#allocation2 + $0x568] sm:$0xff]
        %v608 = vld [vmem:[#allocation2 + $0x570] sm:$0xff]
        %v609 = vld [vmem:[#allocation2 + $0x578] sm:$0xff]
        %v610 = vld [vmem:[#allocation2 + $0x580] sm:$0xff]
        %v611 = vld [vmem:[#allocation2 + $0x588] sm:$0xff]
        %v612 = vld [vmem:[#allocation2 + $0x590] sm:$0xff]
        %v613 = vld [vmem:[#allocation2 + $0x598] sm:$0xff]
        %v614 = vld [vmem:[#allocation2 + $0x5a0] sm:$0xff]
        %v615 = vld [vmem:[#allocation2 + $0x5a8] sm:$0xff]
        %v616 = vld [vmem:[#allocation2 + $0x5b0] sm:$0xff]
        %v617 = vld [vmem:[#allocation2 + $0x5b8] sm:$0xff]
        %v618 = vld [vmem:[#allocation2 + $0x5c0] sm:$0xff]
        %v619 = vld [vmem:[#allocation2 + $0x5c8] sm:$0xff]
        %v620 = vld [vmem:[#allocation2 + $0x5d0] sm:$0xff]
        %v621 = vld [vmem:[#allocation2 + $0x5d8] sm:$0xff]
        %v622 = vld [vmem:[#allocation2 + $0x5e0] sm:$0xff]
        %v623 = vld [vmem:[#allocation2 + $0x5e8] sm:$0xff]
        %v624 = vld [vmem:[#allocation2 + $0x5f0] sm:$0xff]
        %v625 = vld [vmem:[#allocation2 + $0x5f8] sm:$0xff]
        %v626 = vld [vmem:[#allocation2 + $0x600] sm:$0xff]
        %v627 = vld [vmem:[#allocation2 + $0x608] sm:$0xff]
        %v628 = vld [vmem:[#allocation2 + $0x610] sm:$0xff]
        %v629 = vld [vmem:[#allocation2 + $0x618] sm:$0xff]
        %v630 = vld [vmem:[#allocation2 + $0x620] sm:$0xff]
        %v631 = vld [vmem:[#allocation2 + $0x628] sm:$0xff]
        %v632 = vld [vmem:[#allocation2 + $0x630] sm:$0xff]
        %v633 = vld [vmem:[#allocation2 + $0x638] sm:$0xff]
        %v634 = vld [vmem:[#allocation2 + $0x640] sm:$0xff]
        %v635 = vld [vmem:[#allocation2 + $0x648] sm:$0xff]
        %v636 = vld [vmem:[#allocation2 + $0x650] sm:$0xff]
        %v637 = vld [vmem:[#allocation2 + $0x658] sm:$0xff]
        %v638 = vld [vmem:[#allocation2 + $0x660] sm:$0xff]
        %v639 = vld [vmem:[#allocation2 + $0x668] sm:$0xff]
        %v640 = vld [vmem:[#allocation2 + $0x670] sm:$0xff]
        %v641 = vld [vmem:[#allocation2 + $0x678] sm:$0xff]
        %v642 = vld [vmem:[#allocation2 + $0x680] sm:$0xff]
        %v643 = vld [vmem:[#allocation2 + $0x688] sm:$0xff]
        %v644 = vld [vmem:[#allocation2 + $0x690] sm:$0xff]
        %v645 = vld [vmem:[#allocation2 + $0x698] sm:$0xff]
        %v646 = vld [vmem:[#allocation2 + $0x6a0] sm:$0xff]
        %v647 = vld [vmem:[#allocation2 + $0x6a8] sm:$0xff]
        %v648 = vld [vmem:[#allocation2 + $0x6b0] sm:$0xff]
        %v649 = vld [vmem:[#allocation2 + $0x6b8] sm:$0xff]
        %v650 = vld [vmem:[#allocation2 + $0x6c0] sm:$0xff]
        %v651 = vld [vmem:[#allocation2 + $0x6c8] sm:$0xff]
        %v652 = vld [vmem:[#allocation2 + $0x6d0] sm:$0xff]
        %v653 = vld [vmem:[#allocation2 + $0x6d8] sm:$0xff]
        %v654 = vld [vmem:[#allocation2 + $0x6e0] sm:$0xff]
        %v655 = vld [vmem:[#allocation2 + $0x6e8] sm:$0xff]
        %v656 = vld [vmem:[#allocation2 + $0x6f0] sm:$0xff]
        %v657 = vld [vmem:[#allocation2 + $0x6f8] sm:$0xff]
        %v658 = vld [vmem:[#allocation2 + $0x700] sm:$0xff]
        %v659 = vld [vmem:[#allocation2 + $0x708] sm:$0xff]
        %v660 = vld [vmem:[#allocation2 + $0x710] sm:$0xff]
        %v661 = vld [vmem:[#allocation2 + $0x718] sm:$0xff]
        %v662 = vld [vmem:[#allocation2 + $0x720] sm:$0xff]
        %v663 = vld [vmem:[#allocation2 + $0x728] sm:$0xff]
        %v664 = vld [vmem:[#allocation2 + $0x730] sm:$0xff]
        %v665 = vld [vmem:[#allocation2 + $0x738] sm:$0xff]
        %v666 = vld [vmem:[#allocation2 + $0x740] sm:$0xff]
        %v667 = vld [vmem:[#allocation2 + $0x748] sm:$0xff]
        %v668 = vld [vmem:[#allocation2 + $0x750] sm:$0xff]
        %v669 = vld [vmem:[#allocation2 + $0x758] sm:$0xff]
        %v670 = vld [vmem:[#allocation2 + $0x760] sm:$0xff]
        %v671 = vld [vmem:[#allocation2 + $0x768] sm:$0xff]
        %v672 = vld [vmem:[#allocation2 + $0x770] sm:$0xff]
        %v673 = vld [vmem:[#allocation2 + $0x778] sm:$0xff]
        %v674 = vld [vmem:[#allocation2 + $0x780] sm:$0xff]
        %v675 = vld [vmem:[#allocation2 + $0x788] sm:$0xff]
        %v676 = vld [vmem:[#allocation2 + $0x790] sm:$0xff]
        %v677 = vld [vmem:[#allocation2 + $0x798] sm:$0xff]
        %v678 = vld [vmem:[#allocation2 + $0x7a0] sm:$0xff]
        %v679 = vld [vmem:[#allocation2 + $0x7a8] sm:$0xff]
        %v680 = vld [vmem:[#allocation2 + $0x7b0] sm:$0xff]
        %v681 = vld [vmem:[#allocation2 + $0x7b8] sm:$0xff]
        %v682 = vld [vmem:[#allocation2 + $0x7c0] sm:$0xff]
        %v683 = vld [vmem:[#allocation2 + $0x7c8] sm:$0xff]
        %v684 = vld [vmem:[#allocation2 + $0x7d0] sm:$0xff]
        %v685 = vld [vmem:[#allocation2 + $0x7d8] sm:$0xff]
        %v686 = vld [vmem:[#allocation2 + $0x7e0] sm:$0xff]
        %v687 = vld [vmem:[#allocation2 + $0x7e8] sm:$0xff]
        %v688 = vld [vmem:[#allocation2 + $0x7f0] sm:$0xff]
        %v689 = vld [vmem:[#allocation2 + $0x7f8] sm:$0xff]
        %v690 = vld [vmem:[#allocation2 + $0x800] sm:$0xff]
        %v691 = vld [vmem:[#allocation2 + $0x808] sm:$0xff]
        %v692 = vld [vmem:[#allocation2 + $0x810] sm:$0xff]
        %v693 = vld [vmem:[#allocation2 + $0x818] sm:$0xff]
        %v694 = vld [vmem:[#allocation2 + $0x820] sm:$0xff]
        %v695 = vld [vmem:[#allocation2 + $0x828] sm:$0xff]
        %v696 = vld [vmem:[#allocation2 + $0x830] sm:$0xff]
        %v697 = vld [vmem:[#allocation2 + $0x838] sm:$0xff]
        %v698 = vld [vmem:[#allocation2 + $0x840] sm:$0xff]
        %v699 = vld [vmem:[#allocation2 + $0x848] sm:$0xff]
        %v700 = vld [vmem:[#allocation2 + $0x850] sm:$0xff]
        %v701 = vld [vmem:[#allocation2 + $0x858] sm:$0xff]
        %v702 = vld [vmem:[#allocation2 + $0x860] sm:$0xff]
        %v703 = vld [vmem:[#allocation2 + $0x868] sm:$0xff]
        %v704 = vld [vmem:[#allocation2 + $0x870] sm:$0xff]
        %v705 = vld [vmem:[#allocation2 + $0x878] sm:$0xff]
        %v706 = vld [vmem:[#allocation2 + $0x880] sm:$0xff]
        %v707 = vld [vmem:[#allocation2 + $0x888] sm:$0xff]
        %v708 = vld [vmem:[#allocation2 + $0x890] sm:$0xff]
        %v709 = vld [vmem:[#allocation2 + $0x898] sm:$0xff]
        %v710 = vld [vmem:[#allocation2 + $0x8a0] sm:$0xff]
        %v711 = vld [vmem:[#allocation2 + $0x8a8] sm:$0xff]
        %v712 = vld [vmem:[#allocation2 + $0x8b0] sm:$0xff]
        %v713 = vld [vmem:[#allocation2 + $0x8b8] sm:$0xff]
        %v714 = vld [vmem:[#allocation2 + $0x8c0] sm:$0xff]
        %v715 = vld [vmem:[#allocation2 + $0x8c8] sm:$0xff]
        %v716 = vld [vmem:[#allocation2 + $0x8d0] sm:$0xff]
        %v717 = vld [vmem:[#allocation2 + $0x8d8] sm:$0xff]
        %v718 = vld [vmem:[#allocation2 + $0x8e0] sm:$0xff]
        %v719 = vld [vmem:[#allocation2 + $0x8e8] sm:$0xff]
        %v720 = vld [vmem:[#allocation2 + $0x8f0] sm:$0xff]
        %v721 = vld [vmem:[#allocation2 + $0x8f8] sm:$0xff]
        %v722 = vld [vmem:[#allocation2 + $0x900] sm:$0xff]
        %v723 = vld [vmem:[#allocation2 + $0x908] sm:$0xff]
        %v724 = vld [vmem:[#allocation2 + $0x910] sm:$0xff]
        %v725 = vld [vmem:[#allocation2 + $0x918] sm:$0xff]
        %v726 = vld [vmem:[#allocation2 + $0x920] sm:$0xff]
        %v727 = vld [vmem:[#allocation2 + $0x928] sm:$0xff]
        %v728 = vld [vmem:[#allocation2 + $0x930] sm:$0xff]
        %v729 = vld [vmem:[#allocation2 + $0x938] sm:$0xff]
        %v730 = vld [vmem:[#allocation2 + $0x940] sm:$0xff]
        %v731 = vld [vmem:[#allocation2 + $0x948] sm:$0xff]
        %v732 = vld [vmem:[#allocation2 + $0x950] sm:$0xff]
        %v733 = vld [vmem:[#allocation2 + $0x958] sm:$0xff]
        %v734 = vld [vmem:[#allocation2 + $0x960] sm:$0xff]
        %v735 = vld [vmem:[#allocation2 + $0x968] sm:$0xff]
        %v736 = vld [vmem:[#allocation2 + $0x970] sm:$0xff]
        %v737 = vld [vmem:[#allocation2 + $0x978] sm:$0xff]
        %v738 = vld [vmem:[#allocation2 + $0x980] sm:$0xff]
        %v739 = vld [vmem:[#allocation2 + $0x988] sm:$0xff]
        %v740 = vld [vmem:[#allocation2 + $0x990] sm:$0xff]
        %v741 = vld [vmem:[#allocation2 + $0x998] sm:$0xff]
        %v742 = vld [vmem:[#allocation2 + $0x9a0] sm:$0xff]
        %v743 = vld [vmem:[#allocation2 + $0x9a8] sm:$0xff]
        %v744 = vld [vmem:[#allocation2 + $0x9b0] sm:$0xff]
        %v745 = vld [vmem:[#allocation2 + $0x9b8] sm:$0xff]
        %v746 = vld [vmem:[#allocation2 + $0x9c0] sm:$0xff]
        %v747 = vld [vmem:[#allocation2 + $0x9c8] sm:$0xff]
        %v748 = vld [vmem:[#allocation2 + $0x9d0] sm:$0xff]
        %v749 = vld [vmem:[#allocation2 + $0x9d8] sm:$0xff]
        %v750 = vld [vmem:[#allocation2 + $0x9e0] sm:$0xff]
        %v751 = vld [vmem:[#allocation2 + $0x9e8] sm:$0xff]
        %v752 = vld [vmem:[#allocation2 + $0x9f0] sm:$0xff]
        %v753 = vld [vmem:[#allocation2 + $0x9f8] sm:$0xff]
        %v754 = vld [vmem:[#allocation2 + $0xa00] sm:$0xff]
        %v755 = vld [vmem:[#allocation2 + $0xa08] sm:$0xff]
        %v756 = vld [vmem:[#allocation2 + $0xa10] sm:$0xff]
        %v757 = vld [vmem:[#allocation2 + $0xa18] sm:$0xff]
        %v758 = vld [vmem:[#allocation2 + $0xa20] sm:$0xff]
        %v759 = vld [vmem:[#allocation2 + $0xa28] sm:$0xff]
        %v760 = vld [vmem:[#allocation2 + $0xa30] sm:$0xff]
        %v761 = vld [vmem:[#allocation2 + $0xa38] sm:$0xff]
        %v762 = vld [vmem:[#allocation2 + $0xa40] sm:$0xff]
        %v763 = vld [vmem:[#allocation2 + $0xa48] sm:$0xff]
        %v764 = vld [vmem:[#allocation2 + $0xa50] sm:$0xff]
        %v765 = vld [vmem:[#allocation2 + $0xa58] sm:$0xff]
        %v766 = vld [vmem:[#allocation2 + $0xa60] sm:$0xff]
        %v767 = vld [vmem:[#allocation2 + $0xa68] sm:$0xff]
        %v768 = vld [vmem:[#allocation2 + $0xa70] sm:$0xff]
        %v769 = vld [vmem:[#allocation2 + $0xa78] sm:$0xff]
        %v770 = vld [vmem:[#allocation2 + $0xa80] sm:$0xff]
        %v771 = vld [vmem:[#allocation2 + $0xa88] sm:$0xff]
        %v772 = vld [vmem:[#allocation2 + $0xa90] sm:$0xff]
        %v773 = vld [vmem:[#allocation2 + $0xa98] sm:$0xff]
        %v774 = vld [vmem:[#allocation2 + $0xaa0] sm:$0xff]
        %v775 = vld [vmem:[#allocation2 + $0xaa8] sm:$0xff]
        %v776 = vld [vmem:[#allocation2 + $0xab0] sm:$0xff]
        %v777 = vld [vmem:[#allocation2 + $0xab8] sm:$0xff]
        %v778 = vld [vmem:[#allocation2 + $0xac0] sm:$0xff]
        %v779 = vld [vmem:[#allocation2 + $0xac8] sm:$0xff]
        %v780 = vld [vmem:[#allocation2 + $0xad0] sm:$0xff]
        %v781 = vld [vmem:[#allocation2 + $0xad8] sm:$0xff]
        %v782 = vld [vmem:[#allocation2 + $0xae0] sm:$0xff]
        %v783 = vld [vmem:[#allocation2 + $0xae8] sm:$0xff]
        %v784 = vld [vmem:[#allocation2 + $0xaf0] sm:$0xff]
        %v785 = vld [vmem:[#allocation2 + $0xaf8] sm:$0xff]
        %v786 = vld [vmem:[#allocation2 + $0xb00] sm:$0xff]
        %v787 = vld [vmem:[#allocation2 + $0xb08] sm:$0xff]
        %v788 = vld [vmem:[#allocation2 + $0xb10] sm:$0xff]
        %v789 = vld [vmem:[#allocation2 + $0xb18] sm:$0xff]
        %v790 = vld [vmem:[#allocation2 + $0xb20] sm:$0xff]
        %v791 = vld [vmem:[#allocation2 + $0xb28] sm:$0xff]
        %v792 = vld [vmem:[#allocation2 + $0xb30] sm:$0xff]
        %v793 = vld [vmem:[#allocation2 + $0xb38] sm:$0xff]
        %v794 = vld [vmem:[#allocation2 + $0xb40] sm:$0xff]
        %v795 = vld [vmem:[#allocation2 + $0xb48] sm:$0xff]
        %v796 = vld [vmem:[#allocation2 + $0xb50] sm:$0xff]
        %v797 = vld [vmem:[#allocation2 + $0xb58] sm:$0xff]
        %v798 = vld [vmem:[#allocation2 + $0xb60] sm:$0xff]
        %v799 = vld [vmem:[#allocation2 + $0xb68] sm:$0xff]
        %v800 = vld [vmem:[#allocation2 + $0xb70] sm:$0xff]
        %v801 = vld [vmem:[#allocation2 + $0xb78] sm:$0xff]
        %v802 = vld [vmem:[#allocation2 + $0xb80] sm:$0xff]
        %v803 = vld [vmem:[#allocation2 + $0xb88] sm:$0xff]
        %v804 = vld [vmem:[#allocation2 + $0xb90] sm:$0xff]
        %v805 = vld [vmem:[#allocation2 + $0xb98] sm:$0xff]
        %v806 = vld [vmem:[#allocation2 + $0xba0] sm:$0xff]
        %v807 = vld [vmem:[#allocation2 + $0xba8] sm:$0xff]
        %v808 = vld [vmem:[#allocation2 + $0xbb0] sm:$0xff]
        %v809 = vld [vmem:[#allocation2 + $0xbb8] sm:$0xff]
        %v810 = vld [vmem:[#allocation2 + $0xbc0] sm:$0xff]
        %v811 = vld [vmem:[#allocation2 + $0xbc8] sm:$0xff]
        %v812 = vld [vmem:[#allocation2 + $0xbd0] sm:$0xff]
        %v813 = vld [vmem:[#allocation2 + $0xbd8] sm:$0xff]
        %v814 = vld [vmem:[#allocation2 + $0xbe0] sm:$0xff]
        %v815 = vld [vmem:[#allocation2 + $0xbe8] sm:$0xff]
        %v816 = vld [vmem:[#allocation2 + $0xbf0] sm:$0xff]
        %v817 = vld [vmem:[#allocation2 + $0xbf8] sm:$0xff]
        %v818 = vld [vmem:[#allocation2 + $0xc00] sm:$0xff]
        %v819 = vld [vmem:[#allocation2 + $0xc08] sm:$0xff]
        %v820 = vld [vmem:[#allocation2 + $0xc10] sm:$0xff]
        %v821 = vld [vmem:[#allocation2 + $0xc18] sm:$0xff]
        %v822 = vld [vmem:[#allocation2 + $0xc20] sm:$0xff]
        %v823 = vld [vmem:[#allocation2 + $0xc28] sm:$0xff]
        %v824 = vld [vmem:[#allocation2 + $0xc30] sm:$0xff]
        %v825 = vld [vmem:[#allocation2 + $0xc38] sm:$0xff]
        %v826 = vld [vmem:[#allocation2 + $0xc40] sm:$0xff]
        %v827 = vld [vmem:[#allocation2 + $0xc48] sm:$0xff]
        %v828 = vld [vmem:[#allocation2 + $0xc50] sm:$0xff]
        %v829 = vld [vmem:[#allocation2 + $0xc58] sm:$0xff]
        %v830 = vld [vmem:[#allocation2 + $0xc60] sm:$0xff]
        %v831 = vld [vmem:[#allocation2 + $0xc68] sm:$0xff]
        %v832 = vld [vmem:[#allocation2 + $0xc70] sm:$0xff]
        %v833 = vld [vmem:[#allocation2 + $0xc78] sm:$0xff]
        %v834 = vld [vmem:[#allocation2 + $0xc80] sm:$0xff]
        %v835 = vld [vmem:[#allocation2 + $0xc88] sm:$0xff]
        %v836 = vld [vmem:[#allocation2 + $0xc90] sm:$0xff]
        %v837 = vld [vmem:[#allocation2 + $0xc98] sm:$0xff]
        %v838 = vld [vmem:[#allocation2 + $0xca0] sm:$0xff]
        %v839 = vld [vmem:[#allocation2 + $0xca8] sm:$0xff]
        %v840 = vld [vmem:[#allocation2 + $0xcb0] sm:$0xff]
        %v841 = vld [vmem:[#allocation2 + $0xcb8] sm:$0xff]
        %v842 = vld [vmem:[#allocation2 + $0xcc0] sm:$0xff]
        %v843 = vld [vmem:[#allocation2 + $0xcc8] sm:$0xff]
        %v844 = vld [vmem:[#allocation2 + $0xcd0] sm:$0xff]
        %v845 = vld [vmem:[#allocation2 + $0xcd8] sm:$0xff]
        %v846 = vld [vmem:[#allocation2 + $0xce0] sm:$0xff]
        %v847 = vld [vmem:[#allocation2 + $0xce8] sm:$0xff]
        %v848 = vld [vmem:[#allocation2 + $0xcf0] sm:$0xff]
        %v849 = vld [vmem:[#allocation2 + $0xcf8] sm:$0xff]
        %v850 = vld [vmem:[#allocation2 + $0xd00] sm:$0xff]
        %v851 = vld [vmem:[#allocation2 + $0xd08] sm:$0xff]
        %v852 = vld [vmem:[#allocation2 + $0xd10] sm:$0xff]
        %v853 = vld [vmem:[#allocation2 + $0xd18] sm:$0xff]
        %v854 = vld [vmem:[#allocation2 + $0xd20] sm:$0xff]
        %v855 = vld [vmem:[#allocation2 + $0xd28] sm:$0xff]
        %v856 = vld [vmem:[#allocation2 + $0xd30] sm:$0xff]
        %v857 = vld [vmem:[#allocation2 + $0xd38] sm:$0xff]
        %v858 = vld [vmem:[#allocation2 + $0xd40] sm:$0xff]
        %v859 = vld [vmem:[#allocation2 + $0xd48] sm:$0xff]
        %v860 = vld [vmem:[#allocation2 + $0xd50] sm:$0xff]
        %v861 = vld [vmem:[#allocation2 + $0xd58] sm:$0xff]
        %v862 = vld [vmem:[#allocation2 + $0xd60] sm:$0xff]
        %v863 = vld [vmem:[#allocation2 + $0xd68] sm:$0xff]
        %v864 = vld [vmem:[#allocation2 + $0xd70] sm:$0xff]
        %v865 = vld [vmem:[#allocation2 + $0xd78] sm:$0xff]
        %v866 = vld [vmem:[#allocation2 + $0xd80] sm:$0xff]
        %v867 = vld [vmem:[#allocation2 + $0xd88] sm:$0xff]
        %v868 = vld [vmem:[#allocation2 + $0xd90] sm:$0xff]
        %v869 = vld [vmem:[#allocation2 + $0xd98] sm:$0xff]
        %v870 = vld [vmem:[#allocation2 + $0xda0] sm:$0xff]
        %v871 = vld [vmem:[#allocation2 + $0xda8] sm:$0xff]
        %v872 = vld [vmem:[#allocation2 + $0xdb0] sm:$0xff]
        %v873 = vld [vmem:[#allocation2 + $0xdb8] sm:$0xff]
        %v874 = vld [vmem:[#allocation2 + $0xdc0] sm:$0xff]
        %v875 = vld [vmem:[#allocation2 + $0xdc8] sm:$0xff]
        %v876 = vld [vmem:[#allocation2 + $0xdd0] sm:$0xff]
        %v877 = vld [vmem:[#allocation2 + $0xdd8] sm:$0xff]
        %v878 = vld [vmem:[#allocation2 + $0xde0] sm:$0xff]
        %v879 = vld [vmem:[#allocation2 + $0xde8] sm:$0xff]
        %v880 = vld [vmem:[#allocation2 + $0xdf0] sm:$0xff]
        %v881 = vld [vmem:[#allocation2 + $0xdf8] sm:$0xff]
        %v882 = vld [vmem:[#allocation2 + $0xe00] sm:$0xff]
        %v883 = vld [vmem:[#allocation2 + $0xe08] sm:$0xff]
        %v884 = vld [vmem:[#allocation2 + $0xe10] sm:$0xff]
        %v885 = vld [vmem:[#allocation2 + $0xe18] sm:$0xff]
        %v886 = vld [vmem:[#allocation2 + $0xe20] sm:$0xff]
        %v887 = vld [vmem:[#allocation2 + $0xe28] sm:$0xff]
        %v888 = vld [vmem:[#allocation2 + $0xe30] sm:$0xff]
        %v889 = vld [vmem:[#allocation2 + $0xe38] sm:$0xff]
        %v890 = vld [vmem:[#allocation2 + $0xe40] sm:$0xff]
        %v891 = vld [vmem:[#allocation2 + $0xe48] sm:$0xff]
        %v892 = vld [vmem:[#allocation2 + $0xe50] sm:$0xff]
        %v893 = vld [vmem:[#allocation2 + $0xe58] sm:$0xff]
        %v894 = vld [vmem:[#allocation2 + $0xe60] sm:$0xff]
        %v895 = vld [vmem:[#allocation2 + $0xe68] sm:$0xff]
        %v896 = vld [vmem:[#allocation2 + $0xe70] sm:$0xff]
        %v897 = vld [vmem:[#allocation2 + $0xe78] sm:$0xff]
        %v898 = vld [vmem:[#allocation2 + $0xe80] sm:$0xff]
        %v899 = vld [vmem:[#allocation2 + $0xe88] sm:$0xff]
        %v900 = vld [vmem:[#allocation2 + $0xe90] sm:$0xff]
        %v901 = vld [vmem:[#allocation2 + $0xe98] sm:$0xff]
        %v902 = vld [vmem:[#allocation2 + $0xea0] sm:$0xff]
        %v903 = vld [vmem:[#allocation2 + $0xea8] sm:$0xff]
        %v904 = vld [vmem:[#allocation2 + $0xeb0] sm:$0xff]
        %v905 = vld [vmem:[#allocation2 + $0xeb8] sm:$0xff]
        %v906 = vld [vmem:[#allocation2 + $0xec0] sm:$0xff]
        %v907 = vld [vmem:[#allocation2 + $0xec8] sm:$0xff]
        %v908 = vld [vmem:[#allocation2 + $0xed0] sm:$0xff]
        %v909 = vld [vmem:[#allocation2 + $0xed8] sm:$0xff]
        %v910 = vld [vmem:[#allocation2 + $0xee0] sm:$0xff]
        %v911 = vld [vmem:[#allocation2 + $0xee8] sm:$0xff]
        %v912 = vld [vmem:[#allocation2 + $0xef0] sm:$0xff]
        %v913 = vld [vmem:[#allocation2 + $0xef8] sm:$0xff]
        %v914 = vld [vmem:[#allocation2 + $0xf00] sm:$0xff]
        %v915 = vld [vmem:[#allocation2 + $0xf08] sm:$0xff]
        %v916 = vld [vmem:[#allocation2 + $0xf10] sm:$0xff]
        %v917 = vld [vmem:[#allocation2 + $0xf18] sm:$0xff]
        %v918 = vld [vmem:[#allocation2 + $0xf20] sm:$0xff]
        %v919 = vld [vmem:[#allocation2 + $0xf28] sm:$0xff]
        %v920 = vld [vmem:[#allocation2 + $0xf30] sm:$0xff]
        %v921 = vld [vmem:[#allocation2 + $0xf38] sm:$0xff]
        %v922 = vld [vmem:[#allocation2 + $0xf40] sm:$0xff]
        %v923 = vld [vmem:[#allocation2 + $0xf48] sm:$0xff]
        %v924 = vld [vmem:[#allocation2 + $0xf50] sm:$0xff]
        %v925 = vld [vmem:[#allocation2 + $0xf58] sm:$0xff]
        %v926 = vld [vmem:[#allocation2 + $0xf60] sm:$0xff]
        %v927 = vld [vmem:[#allocation2 + $0xf68] sm:$0xff]
        %v928 = vld [vmem:[#allocation2 + $0xf70] sm:$0xff]
        %v929 = vld [vmem:[#allocation2 + $0xf78] sm:$0xff]
        %v930 = vld [vmem:[#allocation2 + $0xf80] sm:$0xff]
        %v931 = vld [vmem:[#allocation2 + $0xf88] sm:$0xff]
        %v932 = vld [vmem:[#allocation2 + $0xf90] sm:$0xff]
        %v933 = vld [vmem:[#allocation2 + $0xf98] sm:$0xff]
        %v934 = vld [vmem:[#allocation2 + $0xfa0] sm:$0xff]
        %v935 = vld [vmem:[#allocation2 + $0xfa8] sm:$0xff]
        %v936 = vld [vmem:[#allocation2 + $0xfb0] sm:$0xff]
        %v937 = vld [vmem:[#allocation2 + $0xfb8] sm:$0xff]
        %v938 = vld [vmem:[#allocation2 + $0xfc0] sm:$0xff]
        %v939 = vld [vmem:[#allocation2 + $0xfc8] sm:$0xff]
        %v940 = vld [vmem:[#allocation2 + $0xfd0] sm:$0xff]
        %v941 = vld [vmem:[#allocation2 + $0xfd8] sm:$0xff]
        %v942 = vld [vmem:[#allocation2 + $0xfe0] sm:$0xff]
        %v943 = vld [vmem:[#allocation2 + $0xfe8] sm:$0xff]
        %v944 = vld [vmem:[#allocation2 + $0xff0] sm:$0xff]
        %v945 = vld [vmem:[#allocation2 + $0xff8] sm:$0xff]
        %v946 = vld [vmem:[#allocation2 + $0x1000] sm:$0xff]
        %v947 = vld [vmem:[#allocation2 + $0x1008] sm:$0xff]
        %v948 = vld [vmem:[#allocation2 + $0x1010] sm:$0xff]
        %v949 = vld [vmem:[#allocation2 + $0x1018] sm:$0xff]
        %v950 = vld [vmem:[#allocation2 + $0x1020] sm:$0xff]
        %v951 = vld [vmem:[#allocation2 + $0x1028] sm:$0xff]
        %v952 = vld [vmem:[#allocation2 + $0x1030] sm:$0xff]
        %v953 = vld [vmem:[#allocation2 + $0x1038] sm:$0xff]
        %v954 = vld [vmem:[#allocation2 + $0x1040] sm:$0xff]
        %v955 = vld [vmem:[#allocation2 + $0x1048] sm:$0xff]
        %v956 = vld [vmem:[#allocation2 + $0x1050] sm:$0xff]
        %v957 = vld [vmem:[#allocation2 + $0x1058] sm:$0xff]
        %v958 = vld [vmem:[#allocation2 + $0x1060] sm:$0xff]
        %v959 = vld [vmem:[#allocation2 + $0x1068] sm:$0xff]
        %v960 = vld [vmem:[#allocation2 + $0x1070] sm:$0xff]
        %v961 = vld [vmem:[#allocation2 + $0x1078] sm:$0xff]
        %v962 = vld [vmem:[#allocation2 + $0x1080] sm:$0xff]
        %v963 = vld [vmem:[#allocation2 + $0x1088] sm:$0xff]
        %v964 = vld [vmem:[#allocation2 + $0x1090] sm:$0xff]
        %v965 = vld [vmem:[#allocation2 + $0x1098] sm:$0xff]
        %v966 = vld [vmem:[#allocation2 + $0x10a0] sm:$0xff]
        %v967 = vld [vmem:[#allocation2 + $0x10a8] sm:$0xff]
        %v968 = vld [vmem:[#allocation2 + $0x10b0] sm:$0xff]
        %v969 = vld [vmem:[#allocation2 + $0x10b8] sm:$0xff]
        %v970 = vld [vmem:[#allocation2 + $0x10c0] sm:$0xff]
        %v971 = vld [vmem:[#allocation2 + $0x10c8] sm:$0xff]
        %v972 = vld [vmem:[#allocation2 + $0x10d0] sm:$0xff]
        %v973 = vld [vmem:[#allocation2 + $0x10d8] sm:$0xff]
        %v974 = vld [vmem:[#allocation2 + $0x10e0] sm:$0xff]
        %v975 = vld [vmem:[#allocation2 + $0x10e8] sm:$0xff]
        %v976 = vld [vmem:[#allocation2 + $0x10f0] sm:$0xff]
        %v977 = vld [vmem:[#allocation2 + $0x10f8] sm:$0xff]
        %v978 = vld [vmem:[#allocation2 + $0x1100] sm:$0xff]
        %v979 = vld [vmem:[#allocation2 + $0x1108] sm:$0xff]
        %v980 = vld [vmem:[#allocation2 + $0x1110] sm:$0xff]
        %v981 = vld [vmem:[#allocation2 + $0x1118] sm:$0xff]
        %v982 = vld [vmem:[#allocation2 + $0x1120] sm:$0xff]
        %v983 = vld [vmem:[#allocation2 + $0x1128] sm:$0xff]
        %v984 = vld [vmem:[#allocation2 + $0x1130] sm:$0xff]
        %v985 = vld [vmem:[#allocation2 + $0x1138] sm:$0xff]
        %v986 = vld [vmem:[#allocation2 + $0x1140] sm:$0xff]
        %v987 = vld [vmem:[#allocation2 + $0x1148] sm:$0xff]
        %v988 = vld [vmem:[#allocation2 + $0x1150] sm:$0xff]
        %v989 = vld [vmem:[#allocation2 + $0x1158] sm:$0xff]
        %v990 = vld [vmem:[#allocation2 + $0x1160] sm:$0xff]
        %v991 = vld [vmem:[#allocation2 + $0x1168] sm:$0xff]
        %v992 = vld [vmem:[#allocation2 + $0x1170] sm:$0xff]
        %v993 = vld [vmem:[#allocation2 + $0x1178] sm:$0xff]
        %v994 = vld [vmem:[#allocation2 + $0x1180] sm:$0xff]
        %v995 = vld [vmem:[#allocation2 + $0x1188] sm:$0xff]
        %v996 = vld [vmem:[#allocation2 + $0x1190] sm:$0xff]
        %v997 = vld [vmem:[#allocation2 + $0x1198] sm:$0xff]
        %v998 = vld [vmem:[#allocation2 + $0x11a0] sm:$0xff]
        %v999 = vld [vmem:[#allocation2 + $0x11a8] sm:$0xff]
        %v1000 = vld [vmem:[#allocation2 + $0x11b0] sm:$0xff]
        %v1001 = vld [vmem:[#allocation2 + $0x11b8] sm:$0xff]
        %v1002 = vld [vmem:[#allocation2 + $0x11c0] sm:$0xff]
        %v1003 = vld [vmem:[#allocation2 + $0x11c8] sm:$0xff]
        %v1004 = vld [vmem:[#allocation2 + $0x11d0] sm:$0xff]
        %v1005 = vld [vmem:[#allocation2 + $0x11d8] sm:$0xff]
        %v1006 = vld [vmem:[#allocation2 + $0x11e0] sm:$0xff]
        %v1007 = vld [vmem:[#allocation2 + $0x11e8] sm:$0xff]
        %v1008 = vld [vmem:[#allocation2 + $0x11f0] sm:$0xff]
        %v1009 = vld [vmem:[#allocation2 + $0x11f8] sm:$0xff]
        %v1010 = vld [vmem:[#allocation4] sm:$0xff]
        %v1011 = vld [vmem:[#allocation4 + $0x8] sm:$0xff]
        %v1012 = vld [vmem:[#allocation4 + $0x10] sm:$0xff]
        %v1013 = vld [vmem:[#allocation4 + $0x18] sm:$0xff]
        %v1014 = vld [vmem:[#allocation4 + $0x20] sm:$0xff]
        %v1015 = vld [vmem:[#allocation4 + $0x28] sm:$0xff]
        %v1016 = vld [vmem:[#allocation4 + $0x30] sm:$0xff]
        %v1017 = vld [vmem:[#allocation4 + $0x38] sm:$0xff]
        %v1018 = vld [vmem:[#allocation4 + $0x40] sm:$0xff]
        %v1019 = vld [vmem:[#allocation4 + $0x48] sm:$0xff]
        %v1020 = vld [vmem:[#allocation4 + $0x50] sm:$0xff]
        %v1021 = vld [vmem:[#allocation4 + $0x58] sm:$0xff]
        %v1022 = vld [vmem:[#allocation4 + $0x60] sm:$0xff]
        %v1023 = vld [vmem:[#allocation4 + $0x68] sm:$0xff]
        %v1024 = vld [vmem:[#allocation4 + $0x70] sm:$0xff]
        %v1025 = vld [vmem:[#allocation4 + $0x78] sm:$0xff]
        %v1026 = vld [vmem:[#allocation4 + $0x80] sm:$0xff]
        %v1027 = vld [vmem:[#allocation4 + $0x88] sm:$0xff]
        %v1028 = vld [vmem:[#allocation4 + $0x90] sm:$0xff]
        %v1029 = vld [vmem:[#allocation4 + $0x98] sm:$0xff]
        %v1030 = vld [vmem:[#allocation4 + $0xa0] sm:$0xff]
        %v1031 = vld [vmem:[#allocation4 + $0xa8] sm:$0xff]
        %v1032 = vld [vmem:[#allocation4 + $0xb0] sm:$0xff]
        %v1033 = vld [vmem:[#allocation4 + $0xb8] sm:$0xff]
        %v1034 = vld [vmem:[#allocation4 + $0xc0] sm:$0xff]
        %v1035 = vld [vmem:[#allocation4 + $0xc8] sm:$0xff]
        %v1036 = vld [vmem:[#allocation4 + $0xd0] sm:$0xff]
        %v1037 = vld [vmem:[#allocation4 + $0xd8] sm:$0xff]
        %v1038 = vld [vmem:[#allocation4 + $0xe0] sm:$0xff]
        %v1039 = vld [vmem:[#allocation4 + $0xe8] sm:$0xff]
        %v1040 = vld [vmem:[#allocation4 + $0xf0] sm:$0xff]
        %v1041 = vld [vmem:[#allocation4 + $0xf8] sm:$0xff]
        %v1042 = vld [vmem:[#allocation4 + $0x100] sm:$0xff]
        %v1043 = vld [vmem:[#allocation4 + $0x108] sm:$0xff]
        %v1044 = vld [vmem:[#allocation4 + $0x110] sm:$0xff]
        %v1045 = vld [vmem:[#allocation4 + $0x118] sm:$0xff]
        %v1046 = vld [vmem:[#allocation4 + $0x120] sm:$0xff]
        %v1047 = vld [vmem:[#allocation4 + $0x128] sm:$0xff]
        %v1048 = vld [vmem:[#allocation4 + $0x130] sm:$0xff]
        %v1049 = vld [vmem:[#allocation4 + $0x138] sm:$0xff]
        %v1050 = vld [vmem:[#allocation4 + $0x140] sm:$0xff]
        %v1051 = vld [vmem:[#allocation4 + $0x148] sm:$0xff]
        %v1052 = vld [vmem:[#allocation4 + $0x150] sm:$0xff]
        %v1053 = vld [vmem:[#allocation4 + $0x158] sm:$0xff]
        %v1054 = vld [vmem:[#allocation4 + $0x160] sm:$0xff]
        %v1055 = vld [vmem:[#allocation4 + $0x168] sm:$0xff]
        %v1056 = vld [vmem:[#allocation4 + $0x170] sm:$0xff]
        %v1057 = vld [vmem:[#allocation4 + $0x178] sm:$0xff]
        %v1058 = vld [vmem:[#allocation4 + $0x180] sm:$0xff]
        %v1059 = vld [vmem:[#allocation4 + $0x188] sm:$0xff]
        %v1060 = vld [vmem:[#allocation4 + $0x190] sm:$0xff]
        %v1061 = vld [vmem:[#allocation4 + $0x198] sm:$0xff]
        %v1062 = vld [vmem:[#allocation4 + $0x1a0] sm:$0xff]
        %v1063 = vld [vmem:[#allocation4 + $0x1a8] sm:$0xff]
        %v1064 = vld [vmem:[#allocation4 + $0x1b0] sm:$0xff]
        %v1065 = vld [vmem:[#allocation4 + $0x1b8] sm:$0xff]
        %v1066 = vld [vmem:[#allocation4 + $0x1c0] sm:$0xff]
        %v1067 = vld [vmem:[#allocation4 + $0x1c8] sm:$0xff]
        %v1068 = vld [vmem:[#allocation4 + $0x1d0] sm:$0xff]
        %v1069 = vld [vmem:[#allocation4 + $0x1d8] sm:$0xff]
        %v1070 = vld [vmem:[#allocation4 + $0x1e0] sm:$0xff]
        %v1071 = vld [vmem:[#allocation4 + $0x1e8] sm:$0xff]
        %v1072 = vld [vmem:[#allocation4 + $0x1f0] sm:$0xff]
        %v1073 = vld [vmem:[#allocation4 + $0x1f8] sm:$0xff]
        %v1074 = vld [vmem:[#allocation4 + $0x200] sm:$0xff]
        %v1075 = vld [vmem:[#allocation4 + $0x208] sm:$0xff]
        %v1076 = vld [vmem:[#allocation4 + $0x210] sm:$0xff]
        %v1077 = vld [vmem:[#allocation4 + $0x218] sm:$0xff]
        %v1078 = vld [vmem:[#allocation4 + $0x220] sm:$0xff]
        %v1079 = vld [vmem:[#allocation4 + $0x228] sm:$0xff]
        %v1080 = vld [vmem:[#allocation4 + $0x230] sm:$0xff]
        %v1081 = vld [vmem:[#allocation4 + $0x238] sm:$0xff]
        %v1082 = vld [vmem:[#allocation4 + $0x240] sm:$0xff]
        %v1083 = vld [vmem:[#allocation4 + $0x248] sm:$0xff]
        %v1084 = vld [vmem:[#allocation4 + $0x250] sm:$0xff]
        %v1085 = vld [vmem:[#allocation4 + $0x258] sm:$0xff]
        %v1086 = vld [vmem:[#allocation4 + $0x260] sm:$0xff]
        %v1087 = vld [vmem:[#allocation4 + $0x268] sm:$0xff]
        %v1088 = vld [vmem:[#allocation4 + $0x270] sm:$0xff]
        %v1089 = vld [vmem:[#allocation4 + $0x278] sm:$0xff]
        %v1090 = vld [vmem:[#allocation4 + $0x280] sm:$0xff]
        %v1091 = vld [vmem:[#allocation4 + $0x288] sm:$0xff]
        %v1092 = vld [vmem:[#allocation4 + $0x290] sm:$0xff]
        %v1093 = vld [vmem:[#allocation4 + $0x298] sm:$0xff]
        %v1094 = vld [vmem:[#allocation4 + $0x2a0] sm:$0xff]
        %v1095 = vld [vmem:[#allocation4 + $0x2a8] sm:$0xff]
        %v1096 = vld [vmem:[#allocation4 + $0x2b0] sm:$0xff]
        %v1097 = vld [vmem:[#allocation4 + $0x2b8] sm:$0xff]
        %v1098 = vld [vmem:[#allocation4 + $0x2c0] sm:$0xff]
        %v1099 = vld [vmem:[#allocation4 + $0x2c8] sm:$0xff]
        %v1100 = vld [vmem:[#allocation4 + $0x2d0] sm:$0xff]
        %v1101 = vld [vmem:[#allocation4 + $0x2d8] sm:$0xff]
        %v1102 = vld [vmem:[#allocation4 + $0x2e0] sm:$0xff]
        %v1103 = vld [vmem:[#allocation4 + $0x2e8] sm:$0xff]
        %v1104 = vld [vmem:[#allocation4 + $0x2f0] sm:$0xff]
        %v1105 = vld [vmem:[#allocation4 + $0x2f8] sm:$0xff]
        %v1106 = vld [vmem:[#allocation4 + $0x300] sm:$0xff]
        %v1107 = vld [vmem:[#allocation4 + $0x308] sm:$0xff]
        %v1108 = vld [vmem:[#allocation4 + $0x310] sm:$0xff]
        %v1109 = vld [vmem:[#allocation4 + $0x318] sm:$0xff]
        %v1110 = vld [vmem:[#allocation4 + $0x320] sm:$0xff]
        %v1111 = vld [vmem:[#allocation4 + $0x328] sm:$0xff]
        %v1112 = vld [vmem:[#allocation4 + $0x330] sm:$0xff]
        %v1113 = vld [vmem:[#allocation4 + $0x338] sm:$0xff]
        %v1114 = vld [vmem:[#allocation4 + $0x340] sm:$0xff]
        %v1115 = vld [vmem:[#allocation4 + $0x348] sm:$0xff]
        %v1116 = vld [vmem:[#allocation4 + $0x350] sm:$0xff]
        %v1117 = vld [vmem:[#allocation4 + $0x358] sm:$0xff]
        %v1118 = vld [vmem:[#allocation4 + $0x360] sm:$0xff]
        %v1119 = vld [vmem:[#allocation4 + $0x368] sm:$0xff]
        %v1120 = vld [vmem:[#allocation4 + $0x370] sm:$0xff]
        %v1121 = vld [vmem:[#allocation4 + $0x378] sm:$0xff]
        %v1122 = vld [vmem:[#allocation4 + $0x380] sm:$0xff]
        %v1123 = vld [vmem:[#allocation4 + $0x388] sm:$0xff]
        %v1124 = vld [vmem:[#allocation4 + $0x390] sm:$0xff]
        %v1125 = vld [vmem:[#allocation4 + $0x398] sm:$0xff]
        %v1126 = vld [vmem:[#allocation4 + $0x3a0] sm:$0xff]
        %v1127 = vld [vmem:[#allocation4 + $0x3a8] sm:$0xff]
        %v1128 = vld [vmem:[#allocation4 + $0x3b0] sm:$0xff]
        %v1129 = vld [vmem:[#allocation4 + $0x3b8] sm:$0xff]
        %v1130 = vld [vmem:[#allocation4 + $0x3c0] sm:$0xff]
        %v1131 = vld [vmem:[#allocation4 + $0x3c8] sm:$0xff]
        %v1132 = vld [vmem:[#allocation4 + $0x3d0] sm:$0xff]
        %v1133 = vld [vmem:[#allocation4 + $0x3d8] sm:$0xff]
        %v1134 = vld [vmem:[#allocation4 + $0x3e0] sm:$0xff]
        %v1135 = vld [vmem:[#allocation4 + $0x3e8] sm:$0xff]
        %v1136 = vld [vmem:[#allocation4 + $0x3f0] sm:$0xff]
        %v1137 = vld [vmem:[#allocation4 + $0x3f8] sm:$0xff]
        %v1138 = vld [vmem:[#allocation4 + $0x400] sm:$0xff]
        %v1139 = vld [vmem:[#allocation4 + $0x408] sm:$0xff]
        %v1140 = vld [vmem:[#allocation4 + $0x410] sm:$0xff]
        %v1141 = vld [vmem:[#allocation4 + $0x418] sm:$0xff]
        %v1142 = vld [vmem:[#allocation4 + $0x420] sm:$0xff]
        %v1143 = vld [vmem:[#allocation4 + $0x428] sm:$0xff]
        %v1144 = vld [vmem:[#allocation4 + $0x430] sm:$0xff]
        %v1145 = vld [vmem:[#allocation4 + $0x438] sm:$0xff]
        %v1146 = vld [vmem:[#allocation4 + $0x440] sm:$0xff]
        %v1147 = vld [vmem:[#allocation4 + $0x448] sm:$0xff]
        %v1148 = vld [vmem:[#allocation4 + $0x450] sm:$0xff]
        %v1149 = vld [vmem:[#allocation4 + $0x458] sm:$0xff]
        %v1150 = vld [vmem:[#allocation4 + $0x460] sm:$0xff]
        %v1151 = vld [vmem:[#allocation4 + $0x468] sm:$0xff]
        %v1152 = vld [vmem:[#allocation4 + $0x470] sm:$0xff]
        %v1153 = vld [vmem:[#allocation4 + $0x478] sm:$0xff]
        %v1154 = vld [vmem:[%s424] sm:$0xff]
        %v1155 = vld [vmem:[%s424 + $0x8] sm:$0xff]
        %1156 = vmatprep.subr.mxu0 %v435
        %1157 = vmatpush1.msra.mxu0 %v434
        %1158 = vmatprep.subr.mxu0 %v437
        %1159 = vmatpush1.msra.mxu0 %v436
        %1160 = vmatprep.subr.mxu0 %v439
        %1161 = vmatpush1.msra.mxu0 %v438
        %1162 = vmatprep.subr.mxu0 %v441
        %1163 = vmatpush1.msra.mxu0 %v440
        %1164 = vmatprep.subr.mxu0 %v443
        %1165 = vmatpush1.msra.mxu0 %v442
        %1166 = vmatprep.subr.mxu0 %v445
        %1167 = vmatpush1.msra.mxu0 %v444
        %1168 = vmatprep.subr.mxu0 %v447
        %1169 = vmatpush1.msra.mxu0 %v446
        %1170 = vmatprep.subr.mxu0 %v449
        %1171 = vmatpush1.msra.mxu0 %v448
        %1172 = vmatprep.subr.mxu0 %v451
        %1173 = vmatpush1.msra.mxu0 %v450
        %1174 = vmatprep.subr.mxu0 %v453
        %1175 = vmatpush1.msra.mxu0 %v452
        %1176 = vmatprep.subr.mxu0 %v455
        %1177 = vmatpush1.msra.mxu0 %v454
        %1178 = vmatprep.subr.mxu0 %v457
        %1179 = vmatpush1.msra.mxu0 %v456
        %1180 = vmatprep.subr.mxu0 %v459
        %1181 = vmatpush1.msra.mxu0 %v458
        %1182 = vmatprep.subr.mxu0 %v461
        %1183 = vmatpush1.msra.mxu0 %v460
        %1184 = vmatprep.subr.mxu0 %v463
        %1185 = vmatpush1.msra.mxu0 %v462
        %1186 = vmatprep.subr.mxu0 %v465
        %1187 = vmatpush1.msra.mxu0 %v464
        %1188 = vmatprep.subr.mxu0 %v467
        %1189 = vmatpush1.msra.mxu0 %v466
        %1190 = vmatprep.subr.mxu0 %v469
        %1191 = vmatpush1.msra.mxu0 %v468
        %1192 = vmatprep.subr.mxu0 %v471
        %1193 = vmatpush1.msra.mxu0 %v470
        %1194 = vmatprep.subr.mxu0 %v473
        %1195 = vmatpush1.msra.mxu0 %v472
        %1196 = vmatprep.subr.mxu0 %v475
        %1197 = vmatpush1.msra.mxu0 %v474
        %1198 = vmatprep.subr.mxu0 %v477
        %1199 = vmatpush1.msra.mxu0 %v476
        %1200 = vmatprep.subr.mxu0 %v479
        %1201 = vmatpush1.msra.mxu0 %v478
        %1202 = vmatprep.subr.mxu0 %v481
        %1203 = vmatpush1.msra.mxu0 %v480
        %1204 = vmatprep.subr.mxu0 %v483
        %1205 = vmatpush1.msra.mxu0 %v482
        %1206 = vmatprep.subr.mxu0 %v485
        %1207 = vmatpush1.msra.mxu0 %v484
        %1208 = vmatprep.subr.mxu0 %v487
        %1209 = vmatpush1.msra.mxu0 %v486
        %1210 = vmatprep.subr.mxu0 %v489
        %1211 = vmatpush1.msra.mxu0 %v488
        %1212 = vmatprep.subr.mxu0 %v491
        %1213 = vmatpush1.msra.mxu0 %v490
        %1214 = vmatprep.subr.mxu0 %v493
        %1215 = vmatpush1.msra.mxu0 %v492
        %1216 = vmatprep.subr.mxu0 %v495
        %1217 = vmatpush1.msra.mxu0 %v494
        %1218 = vmatprep.subr.mxu0 %v497
        %1219 = vmatpush1.msra.mxu0 %v496
        %1220 = vmatprep.mubr.f32.mxu0 %v1155
        %1221 = vmatmul.mubr.f32.gmra.mrb[0].mxu0 %v1154
        %v1222 = vpop.f32.mrb[0].mxu0
        %v1223 = vadd.f32 0.0, %v1222
        %v1224 = vpop.f32.mrb[0].mxu0
        %v1225 = vadd.f32 0.0, %v1224
        %1226 = vdwg.mxu0
        %1227 = vmatprep.subr.mxu0 %v499
        %1228 = vmatpush1.msra.mxu0 %v498
        %1229 = vmatprep.subr.mxu0 %v501
        %1230 = vmatpush1.msra.mxu0 %v500
        %1231 = vmatprep.subr.mxu0 %v503
        %1232 = vmatpush1.msra.mxu0 %v502
        %1233 = vmatprep.subr.mxu0 %v505
        %1234 = vmatpush1.msra.mxu0 %v504
        %1235 = vmatprep.subr.mxu0 %v507
        %1236 = vmatpush1.msra.mxu0 %v506
        %1237 = vmatprep.subr.mxu0 %v509
        %1238 = vmatpush1.msra.mxu0 %v508
        %1239 = vmatprep.subr.mxu0 %v511
        %1240 = vmatpush1.msra.mxu0 %v510
        %1241 = vmatprep.subr.mxu0 %v513
        %1242 = vmatpush1.msra.mxu0 %v512
        %1243 = vmatprep.subr.mxu0 %v515
        %1244 = vmatpush1.msra.mxu0 %v514
        %1245 = vmatprep.subr.mxu0 %v517
        %1246 = vmatpush1.msra.mxu0 %v516
        %1247 = vmatprep.subr.mxu0 %v519
        %1248 = vmatpush1.msra.mxu0 %v518
        %1249 = vmatprep.subr.mxu0 %v521
        %1250 = vmatpush1.msra.mxu0 %v520
        %1251 = vmatprep.subr.mxu0 %v523
        %1252 = vmatpush1.msra.mxu0 %v522
        %1253 = vmatprep.subr.mxu0 %v525
        %1254 = vmatpush1.msra.mxu0 %v524
        %1255 = vmatprep.subr.mxu0 %v527
        %1256 = vmatpush1.msra.mxu0 %v526
        %1257 = vmatprep.subr.mxu0 %v529
        %1258 = vmatpush1.msra.mxu0 %v528
        %1259 = vmatprep.subr.mxu0 %v531
        %1260 = vmatpush1.msra.mxu0 %v530
        %1261 = vmatprep.subr.mxu0 %v533
        %1262 = vmatpush1.msra.mxu0 %v532
        %1263 = vmatprep.subr.mxu0 %v535
        %1264 = vmatpush1.msra.mxu0 %v534
        %1265 = vmatprep.subr.mxu0 %v537
        %1266 = vmatpush1.msra.mxu0 %v536
        %1267 = vmatprep.subr.mxu0 %v539
        %1268 = vmatpush1.msra.mxu0 %v538
        %1269 = vmatprep.subr.mxu0 %v541
        %1270 = vmatpush1.msra.mxu0 %v540
        %1271 = vmatprep.subr.mxu0 %v543
        %1272 = vmatpush1.msra.mxu0 %v542
        %1273 = vmatprep.subr.mxu0 %v545
        %1274 = vmatpush1.msra.mxu0 %v544
        %1275 = vmatprep.subr.mxu0 %v547
        %1276 = vmatpush1.msra.mxu0 %v546
        %1277 = vmatprep.subr.mxu0 %v549
        %1278 = vmatpush1.msra.mxu0 %v548
        %1279 = vmatprep.subr.mxu0 %v551
        %1280 = vmatpush1.msra.mxu0 %v550
        %1281 = vmatprep.subr.mxu0 %v553
        %1282 = vmatpush1.msra.mxu0 %v552
        %1283 = vmatprep.subr.mxu0 %v555
        %1284 = vmatpush1.msra.mxu0 %v554
        %1285 = vmatprep.subr.mxu0 %v557
        %1286 = vmatpush1.msra.mxu0 %v556
        %1287 = vmatprep.subr.mxu0 %v559
        %1288 = vmatpush1.msra.mxu0 %v558
        %1289 = vmatprep.subr.mxu0 %v561
        %1290 = vmatpush1.msra.mxu0 %v560
        %1291 = vmatprep.mubr.f32.mxu0 %v1155
        %1292 = vmatmul.mubr.f32.gmra.mrb[0].mxu0 %v1154
        %v1293 = vpop.f32.mrb[0].mxu0
        %v1294 = vadd.f32 0.0, %v1293
        %v1295 = vpop.f32.mrb[0].mxu0
        %v1296 = vadd.f32 0.0, %v1295
        %1297 = vdwg.mxu0
        %1298 = vmatprep.subr.mxu0 %v563
        %1299 = vmatpush1.msra.mxu0 %v562
        %1300 = vmatprep.subr.mxu0 %v565
        %1301 = vmatpush1.msra.mxu0 %v564
        %1302 = vmatprep.subr.mxu0 %v567
        %1303 = vmatpush1.msra.mxu0 %v566
        %1304 = vmatprep.subr.mxu0 %v569
        %1305 = vmatpush1.msra.mxu0 %v568
        %1306 = vmatprep.subr.mxu0 %v571
        %1307 = vmatpush1.msra.mxu0 %v570
        %1308 = vmatprep.subr.mxu0 %v573
        %1309 = vmatpush1.msra.mxu0 %v572
        %1310 = vmatprep.subr.mxu0 %v575
        %1311 = vmatpush1.msra.mxu0 %v574
        %1312 = vmatprep.subr.mxu0 %v577
        %1313 = vmatpush1.msra.mxu0 %v576
        %1314 = vmatprep.subr.mxu0 %v579
        %1315 = vmatpush1.msra.mxu0 %v578
        %1316 = vmatprep.subr.mxu0 %v581
        %1317 = vmatpush1.msra.mxu0 %v580
        %1318 = vmatprep.subr.mxu0 %v583
        %1319 = vmatpush1.msra.mxu0 %v582
        %1320 = vmatprep.subr.mxu0 %v585
        %1321 = vmatpush1.msra.mxu0 %v584
        %1322 = vmatprep.subr.mxu0 %v587
        %1323 = vmatpush1.msra.mxu0 %v586
        %1324 = vmatprep.subr.mxu0 %v589
        %1325 = vmatpush1.msra.mxu0 %v588
        %1326 = vmatprep.subr.mxu0 %v591
        %1327 = vmatpush1.msra.mxu0 %v590
        %1328 = vmatprep.subr.mxu0 %v593
        %1329 = vmatpush1.msra.mxu0 %v592
        %1330 = vmatprep.subr.mxu0 %v595
        %1331 = vmatpush1.msra.mxu0 %v594
        %1332 = vmatprep.subr.mxu0 %v597
        %1333 = vmatpush1.msra.mxu0 %v596
        %1334 = vmatprep.subr.mxu0 %v599
        %1335 = vmatpush1.msra.mxu0 %v598
        %1336 = vmatprep.subr.mxu0 %v601
        %1337 = vmatpush1.msra.mxu0 %v600
        %1338 = vmatprep.subr.mxu0 %v603
        %1339 = vmatpush1.msra.mxu0 %v602
        %1340 = vmatprep.subr.mxu0 %v605
        %1341 = vmatpush1.msra.mxu0 %v604
        %1342 = vmatprep.subr.mxu0 %v607
        %1343 = vmatpush1.msra.mxu0 %v606
        %1344 = vmatprep.subr.mxu0 %v609
        %1345 = vmatpush1.msra.mxu0 %v608
        %1346 = vmatprep.subr.mxu0 %v611
        %1347 = vmatpush1.msra.mxu0 %v610
        %1348 = vmatprep.subr.mxu0 %v613
        %1349 = vmatpush1.msra.mxu0 %v612
        %1350 = vmatprep.subr.mxu0 %v615
        %1351 = vmatpush1.msra.mxu0 %v614
        %1352 = vmatprep.subr.mxu0 %v617
        %1353 = vmatpush1.msra.mxu0 %v616
        %1354 = vmatprep.subr.mxu0 %v619
        %1355 = vmatpush1.msra.mxu0 %v618
        %1356 = vmatprep.subr.mxu0 %v621
        %1357 = vmatpush1.msra.mxu0 %v620
        %1358 = vmatprep.subr.mxu0 %v623
        %1359 = vmatpush1.msra.mxu0 %v622
        %1360 = vmatprep.subr.mxu0 %v625
        %1361 = vmatpush1.msra.mxu0 %v624
        %1362 = vmatprep.mubr.f32.mxu0 %v1155
        %1363 = vmatmul.mubr.f32.gmra.mrb[0].mxu0 %v1154
        %v1364 = vpop.f32.mrb[0].mxu0
        %v1365 = vadd.f32 0.0, %v1364
        %v1366 = vpop.f32.mrb[0].mxu0
        %v1367 = vadd.f32 0.0, %v1366
        %1368 = vdwg.mxu0
        %1369 = vmatprep.subr.mxu0 %v627
        %1370 = vmatpush1.msra.mxu0 %v626
        %1371 = vmatprep.subr.mxu0 %v629
        %1372 = vmatpush1.msra.mxu0 %v628
        %1373 = vmatprep.subr.mxu0 %v631
        %1374 = vmatpush1.msra.mxu0 %v630
        %1375 = vmatprep.subr.mxu0 %v633
        %1376 = vmatpush1.msra.mxu0 %v632
        %1377 = vmatprep.subr.mxu0 %v635
        %1378 = vmatpush1.msra.mxu0 %v634
        %1379 = vmatprep.subr.mxu0 %v637
        %1380 = vmatpush1.msra.mxu0 %v636
        %1381 = vmatprep.subr.mxu0 %v639
        %1382 = vmatpush1.msra.mxu0 %v638
        %1383 = vmatprep.subr.mxu0 %v641
        %1384 = vmatpush1.msra.mxu0 %v640
        %1385 = vmatprep.subr.mxu0 %v643
        %1386 = vmatpush1.msra.mxu0 %v642
        %1387 = vmatprep.subr.mxu0 %v645
        %1388 = vmatpush1.msra.mxu0 %v644
        %1389 = vmatprep.subr.mxu0 %v647
        %1390 = vmatpush1.msra.mxu0 %v646
        %1391 = vmatprep.subr.mxu0 %v649
        %1392 = vmatpush1.msra.mxu0 %v648
        %1393 = vmatprep.subr.mxu0 %v651
        %1394 = vmatpush1.msra.mxu0 %v650
        %1395 = vmatprep.subr.mxu0 %v653
        %1396 = vmatpush1.msra.mxu0 %v652
        %1397 = vmatprep.subr.mxu0 %v655
        %1398 = vmatpush1.msra.mxu0 %v654
        %1399 = vmatprep.subr.mxu0 %v657
        %1400 = vmatpush1.msra.mxu0 %v656
        %1401 = vmatprep.subr.mxu0 %v659
        %1402 = vmatpush1.msra.mxu0 %v658
        %1403 = vmatprep.subr.mxu0 %v661
        %1404 = vmatpush1.msra.mxu0 %v660
        %1405 = vmatprep.subr.mxu0 %v663
        %1406 = vmatpush1.msra.mxu0 %v662
        %1407 = vmatprep.subr.mxu0 %v665
        %1408 = vmatpush1.msra.mxu0 %v664
        %1409 = vmatprep.subr.mxu0 %v667
        %1410 = vmatpush1.msra.mxu0 %v666
        %1411 = vmatprep.subr.mxu0 %v669
        %1412 = vmatpush1.msra.mxu0 %v668
        %1413 = vmatprep.subr.mxu0 %v671
        %1414 = vmatpush1.msra.mxu0 %v670
        %1415 = vmatprep.subr.mxu0 %v673
        %1416 = vmatpush1.msra.mxu0 %v672
        %1417 = vmatprep.subr.mxu0 %v675
        %1418 = vmatpush1.msra.mxu0 %v674
        %1419 = vmatprep.subr.mxu0 %v677
        %1420 = vmatpush1.msra.mxu0 %v676
        %1421 = vmatprep.subr.mxu0 %v679
        %1422 = vmatpush1.msra.mxu0 %v678
        %1423 = vmatprep.subr.mxu0 %v681
        %1424 = vmatpush1.msra.mxu0 %v680
        %1425 = vmatprep.subr.mxu0 %v683
        %1426 = vmatpush1.msra.mxu0 %v682
        %1427 = vmatprep.subr.mxu0 %v685
        %1428 = vmatpush1.msra.mxu0 %v684
        %1429 = vmatprep.subr.mxu0 %v687
        %1430 = vmatpush1.msra.mxu0 %v686
        %1431 = vmatprep.subr.mxu0 %v689
        %1432 = vmatpush1.msra.mxu0 %v688
        %1433 = vmatprep.mubr.f32.mxu0 %v1155
        %1434 = vmatmul.mubr.f32.gmra.mrb[0].mxu0 %v1154
        %v1435 = vpop.f32.mrb[0].mxu0
        %v1436 = vadd.f32 0.0, %v1435
        %v1437 = vpop.f32.mrb[0].mxu0
        %v1438 = vadd.f32 0.0, %v1437
        %1439 = vdwg.mxu0
        %1440 = vmatprep.subr.mxu0 %v691
        %1441 = vmatpush1.msra.mxu0 %v690
        %1442 = vmatprep.subr.mxu0 %v693
        %1443 = vmatpush1.msra.mxu0 %v692
        %1444 = vmatprep.subr.mxu0 %v695
        %1445 = vmatpush1.msra.mxu0 %v694
        %1446 = vmatprep.subr.mxu0 %v697
        %1447 = vmatpush1.msra.mxu0 %v696
        %1448 = vmatprep.subr.mxu0 %v699
        %1449 = vmatpush1.msra.mxu0 %v698
        %1450 = vmatprep.subr.mxu0 %v701
        %1451 = vmatpush1.msra.mxu0 %v700
        %1452 = vmatprep.subr.mxu0 %v703
        %1453 = vmatpush1.msra.mxu0 %v702
        %1454 = vmatprep.subr.mxu0 %v705
        %1455 = vmatpush1.msra.mxu0 %v704
        %1456 = vmatprep.subr.mxu0 %v707
        %1457 = vmatpush1.msra.mxu0 %v706
        %1458 = vmatprep.subr.mxu0 %v709
        %1459 = vmatpush1.msra.mxu0 %v708
        %1460 = vmatprep.subr.mxu0 %v711
        %1461 = vmatpush1.msra.mxu0 %v710
        %1462 = vmatprep.subr.mxu0 %v713
        %1463 = vmatpush1.msra.mxu0 %v712
        %1464 = vmatprep.subr.mxu0 %v715
        %1465 = vmatpush1.msra.mxu0 %v714
        %1466 = vmatprep.subr.mxu0 %v717
        %1467 = vmatpush1.msra.mxu0 %v716
        %1468 = vmatprep.subr.mxu0 %v719
        %1469 = vmatpush1.msra.mxu0 %v718
        %1470 = vmatprep.subr.mxu0 %v721
        %1471 = vmatpush1.msra.mxu0 %v720
        %1472 = vmatprep.subr.mxu0 %v723
        %1473 = vmatpush1.msra.mxu0 %v722
        %1474 = vmatprep.subr.mxu0 %v725
        %1475 = vmatpush1.msra.mxu0 %v724
        %1476 = vmatprep.subr.mxu0 %v727
        %1477 = vmatpush1.msra.mxu0 %v726
        %1478 = vmatprep.subr.mxu0 %v729
        %1479 = vmatpush1.msra.mxu0 %v728
        %1480 = vmatprep.subr.mxu0 %v731
        %1481 = vmatpush1.msra.mxu0 %v730
        %1482 = vmatprep.subr.mxu0 %v733
        %1483 = vmatpush1.msra.mxu0 %v732
        %1484 = vmatprep.subr.mxu0 %v735
        %1485 = vmatpush1.msra.mxu0 %v734
        %1486 = vmatprep.subr.mxu0 %v737
        %1487 = vmatpush1.msra.mxu0 %v736
        %1488 = vmatprep.subr.mxu0 %v739
        %1489 = vmatpush1.msra.mxu0 %v738
        %1490 = vmatprep.subr.mxu0 %v741
        %1491 = vmatpush1.msra.mxu0 %v740
        %1492 = vmatprep.subr.mxu0 %v743
        %1493 = vmatpush1.msra.mxu0 %v742
        %1494 = vmatprep.subr.mxu0 %v745
        %1495 = vmatpush1.msra.mxu0 %v744
        %1496 = vmatprep.subr.mxu0 %v747
        %1497 = vmatpush1.msra.mxu0 %v746
        %1498 = vmatprep.subr.mxu0 %v749
        %1499 = vmatpush1.msra.mxu0 %v748
        %1500 = vmatprep.subr.mxu0 %v751
        %1501 = vmatpush1.msra.mxu0 %v750
        %1502 = vmatprep.subr.mxu0 %v753
        %1503 = vmatpush1.msra.mxu0 %v752
        %1504 = vmatprep.mubr.f32.mxu0 %v1155
        %1505 = vmatmul.mubr.f32.gmra.mrb[0].mxu0 %v1154
        %v1506 = vpop.f32.mrb[0].mxu0
        %v1507 = vadd.f32 0.0, %v1506
        %v1508 = vpop.f32.mrb[0].mxu0
        %v1509 = vadd.f32 0.0, %v1508
        %1510 = vdwg.mxu0
        %1511 = vmatprep.subr.mxu0 %v755
        %1512 = vmatpush1.msra.mxu0 %v754
        %1513 = vmatprep.subr.mxu0 %v757
        %1514 = vmatpush1.msra.mxu0 %v756
        %1515 = vmatprep.subr.mxu0 %v759
        %1516 = vmatpush1.msra.mxu0 %v758
        %1517 = vmatprep.subr.mxu0 %v761
        %1518 = vmatpush1.msra.mxu0 %v760
        %1519 = vmatprep.subr.mxu0 %v763
        %1520 = vmatpush1.msra.mxu0 %v762
        %1521 = vmatprep.subr.mxu0 %v765
        %1522 = vmatpush1.msra.mxu0 %v764
        %1523 = vmatprep.subr.mxu0 %v767
        %1524 = vmatpush1.msra.mxu0 %v766
        %1525 = vmatprep.subr.mxu0 %v769
        %1526 = vmatpush1.msra.mxu0 %v768
        %1527 = vmatprep.subr.mxu0 %v771
        %1528 = vmatpush1.msra.mxu0 %v770
        %1529 = vmatprep.subr.mxu0 %v773
        %1530 = vmatpush1.msra.mxu0 %v772
        %1531 = vmatprep.subr.mxu0 %v775
        %1532 = vmatpush1.msra.mxu0 %v774
        %1533 = vmatprep.subr.mxu0 %v777
        %1534 = vmatpush1.msra.mxu0 %v776
        %1535 = vmatprep.subr.mxu0 %v779
        %1536 = vmatpush1.msra.mxu0 %v778
        %1537 = vmatprep.subr.mxu0 %v781
        %1538 = vmatpush1.msra.mxu0 %v780
        %1539 = vmatprep.subr.mxu0 %v783
        %1540 = vmatpush1.msra.mxu0 %v782
        %1541 = vmatprep.subr.mxu0 %v785
        %1542 = vmatpush1.msra.mxu0 %v784
        %1543 = vmatprep.subr.mxu0 %v787
        %1544 = vmatpush1.msra.mxu0 %v786
        %1545 = vmatprep.subr.mxu0 %v789
        %1546 = vmatpush1.msra.mxu0 %v788
        %1547 = vmatprep.subr.mxu0 %v791
        %1548 = vmatpush1.msra.mxu0 %v790
        %1549 = vmatprep.subr.mxu0 %v793
        %1550 = vmatpush1.msra.mxu0 %v792
        %1551 = vmatprep.subr.mxu0 %v795
        %1552 = vmatpush1.msra.mxu0 %v794
        %1553 = vmatprep.subr.mxu0 %v797
        %1554 = vmatpush1.msra.mxu0 %v796
        %1555 = vmatprep.subr.mxu0 %v799
        %1556 = vmatpush1.msra.mxu0 %v798
        %1557 = vmatprep.subr.mxu0 %v801
        %1558 = vmatpush1.msra.mxu0 %v800
        %1559 = vmatprep.subr.mxu0 %v803
        %1560 = vmatpush1.msra.mxu0 %v802
        %1561 = vmatprep.subr.mxu0 %v805
        %1562 = vmatpush1.msra.mxu0 %v804
        %1563 = vmatprep.subr.mxu0 %v807
        %1564 = vmatpush1.msra.mxu0 %v806
        %1565 = vmatprep.subr.mxu0 %v809
        %1566 = vmatpush1.msra.mxu0 %v808
        %1567 = vmatprep.subr.mxu0 %v811
        %1568 = vmatpush1.msra.mxu0 %v810
        %1569 = vmatprep.subr.mxu0 %v813
        %1570 = vmatpush1.msra.mxu0 %v812
        %1571 = vmatprep.subr.mxu0 %v815
        %1572 = vmatpush1.msra.mxu0 %v814
        %1573 = vmatprep.subr.mxu0 %v817
        %1574 = vmatpush1.msra.mxu0 %v816
        %1575 = vmatprep.mubr.f32.mxu0 %v1155
        %1576 = vmatmul.mubr.f32.gmra.mrb[0].mxu0 %v1154
        %v1577 = vpop.f32.mrb[0].mxu0
        %v1578 = vadd.f32 0.0, %v1577
        %v1579 = vpop.f32.mrb[0].mxu0
        %v1580 = vadd.f32 0.0, %v1579
        %1581 = vdwg.mxu0
        %1582 = vmatprep.subr.mxu0 %v819
        %1583 = vmatpush1.msra.mxu0 %v818
        %1584 = vmatprep.subr.mxu0 %v821
        %1585 = vmatpush1.msra.mxu0 %v820
        %1586 = vmatprep.subr.mxu0 %v823
        %1587 = vmatpush1.msra.mxu0 %v822
        %1588 = vmatprep.subr.mxu0 %v825
        %1589 = vmatpush1.msra.mxu0 %v824
        %1590 = vmatprep.subr.mxu0 %v827
        %1591 = vmatpush1.msra.mxu0 %v826
        %1592 = vmatprep.subr.mxu0 %v829
        %1593 = vmatpush1.msra.mxu0 %v828
        %1594 = vmatprep.subr.mxu0 %v831
        %1595 = vmatpush1.msra.mxu0 %v830
        %1596 = vmatprep.subr.mxu0 %v833
        %1597 = vmatpush1.msra.mxu0 %v832
        %1598 = vmatprep.subr.mxu0 %v835
        %1599 = vmatpush1.msra.mxu0 %v834
        %1600 = vmatprep.subr.mxu0 %v837
        %1601 = vmatpush1.msra.mxu0 %v836
        %1602 = vmatprep.subr.mxu0 %v839
        %1603 = vmatpush1.msra.mxu0 %v838
        %1604 = vmatprep.subr.mxu0 %v841
        %1605 = vmatpush1.msra.mxu0 %v840
        %1606 = vmatprep.subr.mxu0 %v843
        %1607 = vmatpush1.msra.mxu0 %v842
        %1608 = vmatprep.subr.mxu0 %v845
        %1609 = vmatpush1.msra.mxu0 %v844
        %1610 = vmatprep.subr.mxu0 %v847
        %1611 = vmatpush1.msra.mxu0 %v846
        %1612 = vmatprep.subr.mxu0 %v849
        %1613 = vmatpush1.msra.mxu0 %v848
        %1614 = vmatprep.subr.mxu0 %v851
        %1615 = vmatpush1.msra.mxu0 %v850
        %1616 = vmatprep.subr.mxu0 %v853
        %1617 = vmatpush1.msra.mxu0 %v852
        %1618 = vmatprep.subr.mxu0 %v855
        %1619 = vmatpush1.msra.mxu0 %v854
        %1620 = vmatprep.subr.mxu0 %v857
        %1621 = vmatpush1.msra.mxu0 %v856
        %1622 = vmatprep.subr.mxu0 %v859
        %1623 = vmatpush1.msra.mxu0 %v858
        %1624 = vmatprep.subr.mxu0 %v861
        %1625 = vmatpush1.msra.mxu0 %v860
        %1626 = vmatprep.subr.mxu0 %v863
        %1627 = vmatpush1.msra.mxu0 %v862
        %1628 = vmatprep.subr.mxu0 %v865
        %1629 = vmatpush1.msra.mxu0 %v864
        %1630 = vmatprep.subr.mxu0 %v867
        %1631 = vmatpush1.msra.mxu0 %v866
        %1632 = vmatprep.subr.mxu0 %v869
        %1633 = vmatpush1.msra.mxu0 %v868
        %1634 = vmatprep.subr.mxu0 %v871
        %1635 = vmatpush1.msra.mxu0 %v870
        %1636 = vmatprep.subr.mxu0 %v873
        %1637 = vmatpush1.msra.mxu0 %v872
        %1638 = vmatprep.subr.mxu0 %v875
        %1639 = vmatpush1.msra.mxu0 %v874
        %1640 = vmatprep.subr.mxu0 %v877
        %1641 = vmatpush1.msra.mxu0 %v876
        %1642 = vmatprep.subr.mxu0 %v879
        %1643 = vmatpush1.msra.mxu0 %v878
        %1644 = vmatprep.subr.mxu0 %v881
        %1645 = vmatpush1.msra.mxu0 %v880
        %1646 = vmatprep.mubr.f32.mxu0 %v1155
        %1647 = vmatmul.mubr.f32.gmra.mrb[0].mxu0 %v1154
        %v1648 = vpop.f32.mrb[0].mxu0
        %v1649 = vadd.f32 0.0, %v1648
        %v1650 = vpop.f32.mrb[0].mxu0
        %v1651 = vadd.f32 0.0, %v1650
        %1652 = vdwg.mxu0
        %1653 = vmatprep.subr.mxu0 %v883
        %1654 = vmatpush1.msra.mxu0 %v882
        %1655 = vmatprep.subr.mxu0 %v885
        %1656 = vmatpush1.msra.mxu0 %v884
        %1657 = vmatprep.subr.mxu0 %v887
        %1658 = vmatpush1.msra.mxu0 %v886
        %1659 = vmatprep.subr.mxu0 %v889
        %1660 = vmatpush1.msra.mxu0 %v888
        %1661 = vmatprep.subr.mxu0 %v891
        %1662 = vmatpush1.msra.mxu0 %v890
        %1663 = vmatprep.subr.mxu0 %v893
        %1664 = vmatpush1.msra.mxu0 %v892
        %1665 = vmatprep.subr.mxu0 %v895
        %1666 = vmatpush1.msra.mxu0 %v894
        %1667 = vmatprep.subr.mxu0 %v897
        %1668 = vmatpush1.msra.mxu0 %v896
        %1669 = vmatprep.subr.mxu0 %v899
        %1670 = vmatpush1.msra.mxu0 %v898
        %1671 = vmatprep.subr.mxu0 %v901
        %1672 = vmatpush1.msra.mxu0 %v900
        %1673 = vmatprep.subr.mxu0 %v903
        %1674 = vmatpush1.msra.mxu0 %v902
        %1675 = vmatprep.subr.mxu0 %v905
        %1676 = vmatpush1.msra.mxu0 %v904
        %1677 = vmatprep.subr.mxu0 %v907
        %1678 = vmatpush1.msra.mxu0 %v906
        %1679 = vmatprep.subr.mxu0 %v909
        %1680 = vmatpush1.msra.mxu0 %v908
        %1681 = vmatprep.subr.mxu0 %v911
        %1682 = vmatpush1.msra.mxu0 %v910
        %1683 = vmatprep.subr.mxu0 %v913
        %1684 = vmatpush1.msra.mxu0 %v912
        %1685 = vmatprep.subr.mxu0 %v915
        %1686 = vmatpush1.msra.mxu0 %v914
        %1687 = vmatprep.subr.mxu0 %v917
        %1688 = vmatpush1.msra.mxu0 %v916
        %1689 = vmatprep.subr.mxu0 %v919
        %1690 = vmatpush1.msra.mxu0 %v918
        %1691 = vmatprep.subr.mxu0 %v921
        %1692 = vmatpush1.msra.mxu0 %v920
        %1693 = vmatprep.subr.mxu0 %v923
        %1694 = vmatpush1.msra.mxu0 %v922
        %1695 = vmatprep.subr.mxu0 %v925
        %1696 = vmatpush1.msra.mxu0 %v924
        %1697 = vmatprep.subr.mxu0 %v927
        %1698 = vmatpush1.msra.mxu0 %v926
        %1699 = vmatprep.subr.mxu0 %v929
        %1700 = vmatpush1.msra.mxu0 %v928
        %1701 = vmatprep.subr.mxu0 %v931
        %1702 = vmatpush1.msra.mxu0 %v930
        %1703 = vmatprep.subr.mxu0 %v933
        %1704 = vmatpush1.msra.mxu0 %v932
        %1705 = vmatprep.subr.mxu0 %v935
        %1706 = vmatpush1.msra.mxu0 %v934
        %1707 = vmatprep.subr.mxu0 %v937
        %1708 = vmatpush1.msra.mxu0 %v936
        %1709 = vmatprep.subr.mxu0 %v939
        %1710 = vmatpush1.msra.mxu0 %v938
        %1711 = vmatprep.subr.mxu0 %v941
        %1712 = vmatpush1.msra.mxu0 %v940
        %1713 = vmatprep.subr.mxu0 %v943
        %1714 = vmatpush1.msra.mxu0 %v942
        %1715 = vmatprep.subr.mxu0 %v945
        %1716 = vmatpush1.msra.mxu0 %v944
        %1717 = vmatprep.mubr.f32.mxu0 %v1155
        %1718 = vmatmul.mubr.f32.gmra.mrb[0].mxu0 %v1154
        %v1719 = vpop.f32.mrb[0].mxu0
        %v1720 = vadd.f32 0.0, %v1719
        %v1721 = vpop.f32.mrb[0].mxu0
        %v1722 = vadd.f32 0.0, %v1721
        %1723 = vdwg.mxu0
        %1724 = vmatprep.subr.mxu0 %v947
        %1725 = vmatpush1.msra.mxu0 %v946
        %1726 = vmatprep.subr.mxu0 %v949
        %1727 = vmatpush1.msra.mxu0 %v948
        %1728 = vmatprep.subr.mxu0 %v951
        %1729 = vmatpush1.msra.mxu0 %v950
        %1730 = vmatprep.subr.mxu0 %v953
        %1731 = vmatpush1.msra.mxu0 %v952
        %1732 = vmatprep.subr.mxu0 %v955
        %1733 = vmatpush1.msra.mxu0 %v954
        %1734 = vmatprep.subr.mxu0 %v957
        %1735 = vmatpush1.msra.mxu0 %v956
        %1736 = vmatprep.subr.mxu0 %v959
        %1737 = vmatpush1.msra.mxu0 %v958
        %1738 = vmatprep.subr.mxu0 %v961
        %1739 = vmatpush1.msra.mxu0 %v960
        %1740 = vmatprep.subr.mxu0 %v963
        %1741 = vmatpush1.msra.mxu0 %v962
        %1742 = vmatprep.subr.mxu0 %v965
        %1743 = vmatpush1.msra.mxu0 %v964
        %1744 = vmatprep.subr.mxu0 %v967
        %1745 = vmatpush1.msra.mxu0 %v966
        %1746 = vmatprep.subr.mxu0 %v969
        %1747 = vmatpush1.msra.mxu0 %v968
        %1748 = vmatprep.subr.mxu0 %v971
        %1749 = vmatpush1.msra.mxu0 %v970
        %1750 = vmatprep.subr.mxu0 %v973
        %1751 = vmatpush1.msra.mxu0 %v972
        %1752 = vmatprep.subr.mxu0 %v975
        %1753 = vmatpush1.msra.mxu0 %v974
        %1754 = vmatprep.subr.mxu0 %v977
        %1755 = vmatpush1.msra.mxu0 %v976
        %1756 = vmatprep.subr.mxu0 %v979
        %1757 = vmatpush1.msra.mxu0 %v978
        %1758 = vmatprep.subr.mxu0 %v981
        %1759 = vmatpush1.msra.mxu0 %v980
        %1760 = vmatprep.subr.mxu0 %v983
        %1761 = vmatpush1.msra.mxu0 %v982
        %1762 = vmatprep.subr.mxu0 %v985
        %1763 = vmatpush1.msra.mxu0 %v984
        %1764 = vmatprep.subr.mxu0 %v987
        %1765 = vmatpush1.msra.mxu0 %v986
        %1766 = vmatprep.subr.mxu0 %v989
        %1767 = vmatpush1.msra.mxu0 %v988
        %1768 = vmatprep.subr.mxu0 %v991
        %1769 = vmatpush1.msra.mxu0 %v990
        %1770 = vmatprep.subr.mxu0 %v993
        %1771 = vmatpush1.msra.mxu0 %v992
        %1772 = vmatprep.subr.mxu0 %v995
        %1773 = vmatpush1.msra.mxu0 %v994
        %1774 = vmatprep.subr.mxu0 %v997
        %1775 = vmatpush1.msra.mxu0 %v996
        %1776 = vmatprep.subr.mxu0 %v999
        %1777 = vmatpush1.msra.mxu0 %v998
        %1778 = vmatprep.subr.mxu0 %v1001
        %1779 = vmatpush1.msra.mxu0 %v1000
        %1780 = vmatprep.subr.mxu0 %v1003
        %1781 = vmatpush1.msra.mxu0 %v1002
        %1782 = vmatprep.subr.mxu0 %v1005
        %1783 = vmatpush1.msra.mxu0 %v1004
        %1784 = vmatprep.subr.mxu0 %v1007
        %1785 = vmatpush1.msra.mxu0 %v1006
        %1786 = vmatprep.subr.mxu0 %v1009
        %1787 = vmatpush1.msra.mxu0 %v1008
        %1788 = vmatprep.mubr.f32.mxu0 %v1155
        %1789 = vmatmul.mubr.f32.gmra.mrb[0].mxu0 %v1154
        %v1790 = vpop.f32.mrb[0].mxu0
        %v1791 = vadd.f32 0.0, %v1790
        %v1792 = vpop.f32.mrb[0].mxu0
        %v1793 = vadd.f32 0.0, %v1792
        %1794 = vdwg.mxu0
        %v1795 = vld [vmem:[%s428] sm:$0xff]
        %vm1796 = vcmask 523264
        %v1798 = vsel %vm1796, %v1795, 0
        %1800 = vmatprep.subr.mxu0 %v1011
        %1801 = vmatpush1.msra.mxu0 %v1010
        %1802 = vmatprep.subr.mxu0 %v1013
        %1803 = vmatpush1.msra.mxu0 %v1012
        %1804 = vmatprep.subr.mxu0 %v1015
        %1805 = vmatpush1.msra.mxu0 %v1014
        %1806 = vmatprep.subr.mxu0 %v1017
        %1807 = vmatpush1.msra.mxu0 %v1016
        %1808 = vmatprep.subr.mxu0 %v1019
        %1809 = vmatpush1.msra.mxu0 %v1018
        %1810 = vmatprep.subr.mxu0 %v1021
        %1811 = vmatpush1.msra.mxu0 %v1020
        %1812 = vmatprep.subr.mxu0 %v1023
        %1813 = vmatpush1.msra.mxu0 %v1022
        %1814 = vmatprep.subr.mxu0 %v1025
        %1815 = vmatpush1.msra.mxu0 %v1024
        %1816 = vmatprep.subr.mxu0 0.0
        %1817 = vmatpush1.msra.mxu0 0.0
        %1818 = vmatprep.subr.mxu0 0.0
        %1819 = vmatpush1.msra.mxu0 0.0
        %1820 = vmatprep.subr.mxu0 0.0
        %1821 = vmatpush1.msra.mxu0 0.0
        %1822 = vmatprep.subr.mxu0 0.0
        %1823 = vmatpush1.msra.mxu0 0.0
        %1824 = vmatprep.subr.mxu0 0.0
        %1825 = vmatpush1.msra.mxu0 0.0
        %1826 = vmatprep.subr.mxu0 0.0
        %1827 = vmatpush1.msra.mxu0 0.0
        %1828 = vmatprep.subr.mxu0 0.0
        %1829 = vmatpush1.msra.mxu0 0.0
        %1830 = vmatprep.subr.mxu0 0.0
        %1831 = vmatpush1.msra.mxu0 0.0
        %1832 = vmatprep.subr.mxu0 0.0
        %1833 = vmatpush1.msra.mxu0 0.0
        %1834 = vmatprep.subr.mxu0 0.0
        %1835 = vmatpush1.msra.mxu0 0.0
        %1836 = vmatprep.subr.mxu0 0.0
        %1837 = vmatpush1.msra.mxu0 0.0
        %1838 = vmatprep.subr.mxu0 0.0
        %1839 = vmatpush1.msra.mxu0 0.0
        %1840 = vmatprep.subr.mxu0 0.0
        %1841 = vmatpush1.msra.mxu0 0.0
        %1842 = vmatprep.subr.mxu0 0.0
        %1843 = vmatpush1.msra.mxu0 0.0
        %1844 = vmatprep.subr.mxu0 0.0
        %1845 = vmatpush1.msra.mxu0 0.0
        %1846 = vmatprep.subr.mxu0 0.0
        %1847 = vmatpush1.msra.mxu0 0.0
        %1848 = vmatprep.subr.mxu0 0.0
        %1849 = vmatpush1.msra.mxu0 0.0
        %1850 = vmatprep.subr.mxu0 0.0
        %1851 = vmatpush1.msra.mxu0 0.0
        %1852 = vmatprep.subr.mxu0 0.0
        %1853 = vmatpush1.msra.mxu0 0.0
        %1854 = vmatprep.subr.mxu0 0.0
        %1855 = vmatpush1.msra.mxu0 0.0
        %1856 = vmatprep.subr.mxu0 0.0
        %1857 = vmatpush1.msra.mxu0 0.0
        %1858 = vmatprep.subr.mxu0 0.0
        %1859 = vmatpush1.msra.mxu0 0.0
        %1860 = vmatprep.subr.mxu0 0.0
        %1861 = vmatpush1.msra.mxu0 0.0
        %1862 = vmatprep.subr.mxu0 0.0
        %1863 = vmatpush1.msra.mxu0 0.0
        %1864 = vmatprep.mubr.f32.mxu0 0.0
        %1865 = vmatmul.mubr.f32.gmra.mrb[0].mxu0 %v1798
        %v1866 = vpop.f32.mrb[0].mxu0
        %v1867 = vadd.f32 0.0, %v1866
        %v1868 = vpop.f32.mrb[0].mxu0
        %v1869 = vadd.f32 0.0, %v1868
        %1870 = vdwg.mxu0
        %1871 = vmatprep.subr.mxu0 %v1027
        %1872 = vmatpush1.msra.mxu0 %v1026
        %1873 = vmatprep.subr.mxu0 %v1029
        %1874 = vmatpush1.msra.mxu0 %v1028
        %1875 = vmatprep.subr.mxu0 %v1031
        %1876 = vmatpush1.msra.mxu0 %v1030
        %1877 = vmatprep.subr.mxu0 %v1033
        %1878 = vmatpush1.msra.mxu0 %v1032
        %1879 = vmatprep.subr.mxu0 %v1035
        %1880 = vmatpush1.msra.mxu0 %v1034
        %1881 = vmatprep.subr.mxu0 %v1037
        %1882 = vmatpush1.msra.mxu0 %v1036
        %1883 = vmatprep.subr.mxu0 %v1039
        %1884 = vmatpush1.msra.mxu0 %v1038
        %1885 = vmatprep.subr.mxu0 %v1041
        %1886 = vmatpush1.msra.mxu0 %v1040
        %1887 = vmatprep.subr.mxu0 0.0
        %1888 = vmatpush1.msra.mxu0 0.0
        %1889 = vmatprep.subr.mxu0 0.0
        %1890 = vmatpush1.msra.mxu0 0.0
        %1891 = vmatprep.subr.mxu0 0.0
        %1892 = vmatpush1.msra.mxu0 0.0
        %1893 = vmatprep.subr.mxu0 0.0
        %1894 = vmatpush1.msra.mxu0 0.0
        %1895 = vmatprep.subr.mxu0 0.0
        %1896 = vmatpush1.msra.mxu0 0.0
        %1897 = vmatprep.subr.mxu0 0.0
        %1898 = vmatpush1.msra.mxu0 0.0
        %1899 = vmatprep.subr.mxu0 0.0
        %1900 = vmatpush1.msra.mxu0 0.0
        %1901 = vmatprep.subr.mxu0 0.0
        %1902 = vmatpush1.msra.mxu0 0.0
        %1903 = vmatprep.subr.mxu0 0.0
        %1904 = vmatpush1.msra.mxu0 0.0
        %1905 = vmatprep.subr.mxu0 0.0
        %1906 = vmatpush1.msra.mxu0 0.0
        %1907 = vmatprep.subr.mxu0 0.0
        %1908 = vmatpush1.msra.mxu0 0.0
        %1909 = vmatprep.subr.mxu0 0.0
        %1910 = vmatpush1.msra.mxu0 0.0
        %1911 = vmatprep.subr.mxu0 0.0
        %1912 = vmatpush1.msra.mxu0 0.0
        %1913 = vmatprep.subr.mxu0 0.0
        %1914 = vmatpush1.msra.mxu0 0.0
        %1915 = vmatprep.subr.mxu0 0.0
        %1916 = vmatpush1.msra.mxu0 0.0
        %1917 = vmatprep.subr.mxu0 0.0
        %1918 = vmatpush1.msra.mxu0 0.0
        %1919 = vmatprep.subr.mxu0 0.0
        %1920 = vmatpush1.msra.mxu0 0.0
        %1921 = vmatprep.subr.mxu0 0.0
        %1922 = vmatpush1.msra.mxu0 0.0
        %1923 = vmatprep.subr.mxu0 0.0
        %1924 = vmatpush1.msra.mxu0 0.0
        %1925 = vmatprep.subr.mxu0 0.0
        %1926 = vmatpush1.msra.mxu0 0.0
        %1927 = vmatprep.subr.mxu0 0.0
        %1928 = vmatpush1.msra.mxu0 0.0
        %1929 = vmatprep.subr.mxu0 0.0
        %1930 = vmatpush1.msra.mxu0 0.0
        %1931 = vmatprep.subr.mxu0 0.0
        %1932 = vmatpush1.msra.mxu0 0.0
        %1933 = vmatprep.subr.mxu0 0.0
        %1934 = vmatpush1.msra.mxu0 0.0
        %1935 = vmatprep.mubr.f32.mxu0 0.0
        %1936 = vmatmul.mubr.f32.gmra.mrb[0].mxu0 %v1798
        %v1937 = vpop.f32.mrb[0].mxu0
        %v1938 = vadd.f32 0.0, %v1937
        %v1939 = vpop.f32.mrb[0].mxu0
        %v1940 = vadd.f32 0.0, %v1939
        %1941 = vdwg.mxu0
        %1942 = vmatprep.subr.mxu0 %v1043
        %1943 = vmatpush1.msra.mxu0 %v1042
        %1944 = vmatprep.subr.mxu0 %v1045
        %1945 = vmatpush1.msra.mxu0 %v1044
        %1946 = vmatprep.subr.mxu0 %v1047
        %1947 = vmatpush1.msra.mxu0 %v1046
        %1948 = vmatprep.subr.mxu0 %v1049
        %1949 = vmatpush1.msra.mxu0 %v1048
        %1950 = vmatprep.subr.mxu0 %v1051
        %1951 = vmatpush1.msra.mxu0 %v1050
        %1952 = vmatprep.subr.mxu0 %v1053
        %1953 = vmatpush1.msra.mxu0 %v1052
        %1954 = vmatprep.subr.mxu0 %v1055
        %1955 = vmatpush1.msra.mxu0 %v1054
        %1956 = vmatprep.subr.mxu0 %v1057
        %1957 = vmatpush1.msra.mxu0 %v1056
        %1958 = vmatprep.subr.mxu0 0.0
        %1959 = vmatpush1.msra.mxu0 0.0
        %1960 = vmatprep.subr.mxu0 0.0
        %1961 = vmatpush1.msra.mxu0 0.0
        %1962 = vmatprep.subr.mxu0 0.0
        %1963 = vmatpush1.msra.mxu0 0.0
        %1964 = vmatprep.subr.mxu0 0.0
        %1965 = vmatpush1.msra.mxu0 0.0
        %1966 = vmatprep.subr.mxu0 0.0
        %1967 = vmatpush1.msra.mxu0 0.0
        %1968 = vmatprep.subr.mxu0 0.0
        %1969 = vmatpush1.msra.mxu0 0.0
        %1970 = vmatprep.subr.mxu0 0.0
        %1971 = vmatpush1.msra.mxu0 0.0
        %1972 = vmatprep.subr.mxu0 0.0
        %1973 = vmatpush1.msra.mxu0 0.0
        %1974 = vmatprep.subr.mxu0 0.0
        %1975 = vmatpush1.msra.mxu0 0.0
        %1976 = vmatprep.subr.mxu0 0.0
        %1977 = vmatpush1.msra.mxu0 0.0
        %1978 = vmatprep.subr.mxu0 0.0
        %1979 = vmatpush1.msra.mxu0 0.0
        %1980 = vmatprep.subr.mxu0 0.0
        %1981 = vmatpush1.msra.mxu0 0.0
        %1982 = vmatprep.subr.mxu0 0.0
        %1983 = vmatpush1.msra.mxu0 0.0
        %1984 = vmatprep.subr.mxu0 0.0
        %1985 = vmatpush1.msra.mxu0 0.0
        %1986 = vmatprep.subr.mxu0 0.0
        %1987 = vmatpush1.msra.mxu0 0.0
        %1988 = vmatprep.subr.mxu0 0.0
        %1989 = vmatpush1.msra.mxu0 0.0
        %1990 = vmatprep.subr.mxu0 0.0
        %1991 = vmatpush1.msra.mxu0 0.0
        %1992 = vmatprep.subr.mxu0 0.0
        %1993 = vmatpush1.msra.mxu0 0.0
        %1994 = vmatprep.subr.mxu0 0.0
        %1995 = vmatpush1.msra.mxu0 0.0
        %1996 = vmatprep.subr.mxu0 0.0
        %1997 = vmatpush1.msra.mxu0 0.0
        %1998 = vmatprep.subr.mxu0 0.0
        %1999 = vmatpush1.msra.mxu0 0.0
        %2000 = vmatprep.subr.mxu0 0.0
        %2001 = vmatpush1.msra.mxu0 0.0
        %2002 = vmatprep.subr.mxu0 0.0
        %2003 = vmatpush1.msra.mxu0 0.0
        %2004 = vmatprep.subr.mxu0 0.0
        %2005 = vmatpush1.msra.mxu0 0.0
        %2006 = vmatprep.mubr.f32.mxu0 0.0
        %2007 = vmatmul.mubr.f32.gmra.mrb[0].mxu0 %v1798
        %v2008 = vpop.f32.mrb[0].mxu0
        %v2009 = vadd.f32 0.0, %v2008
        %v2010 = vpop.f32.mrb[0].mxu0
        %v2011 = vadd.f32 0.0, %v2010
        %2012 = vdwg.mxu0
        %2013 = vmatprep.subr.mxu0 %v1059
        %2014 = vmatpush1.msra.mxu0 %v1058
        %2015 = vmatprep.subr.mxu0 %v1061
        %2016 = vmatpush1.msra.mxu0 %v1060
        %2017 = vmatprep.subr.mxu0 %v1063
        %2018 = vmatpush1.msra.mxu0 %v1062
        %2019 = vmatprep.subr.mxu0 %v1065
        %2020 = vmatpush1.msra.mxu0 %v1064
        %2021 = vmatprep.subr.mxu0 %v1067
        %2022 = vmatpush1.msra.mxu0 %v1066
        %2023 = vmatprep.subr.mxu0 %v1069
        %2024 = vmatpush1.msra.mxu0 %v1068
        %2025 = vmatprep.subr.mxu0 %v1071
        %2026 = vmatpush1.msra.mxu0 %v1070
        %2027 = vmatprep.subr.mxu0 %v1073
        %2028 = vmatpush1.msra.mxu0 %v1072
        %2029 = vmatprep.subr.mxu0 0.0
        %2030 = vmatpush1.msra.mxu0 0.0
        %2031 = vmatprep.subr.mxu0 0.0
        %2032 = vmatpush1.msra.mxu0 0.0
        %2033 = vmatprep.subr.mxu0 0.0
        %2034 = vmatpush1.msra.mxu0 0.0
        %2035 = vmatprep.subr.mxu0 0.0
        %2036 = vmatpush1.msra.mxu0 0.0
        %2037 = vmatprep.subr.mxu0 0.0
        %2038 = vmatpush1.msra.mxu0 0.0
        %2039 = vmatprep.subr.mxu0 0.0
        %2040 = vmatpush1.msra.mxu0 0.0
        %2041 = vmatprep.subr.mxu0 0.0
        %2042 = vmatpush1.msra.mxu0 0.0
        %2043 = vmatprep.subr.mxu0 0.0
        %2044 = vmatpush1.msra.mxu0 0.0
        %2045 = vmatprep.subr.mxu0 0.0
        %2046 = vmatpush1.msra.mxu0 0.0
        %2047 = vmatprep.subr.mxu0 0.0
        %2048 = vmatpush1.msra.mxu0 0.0
        %2049 = vmatprep.subr.mxu0 0.0
        %2050 = vmatpush1.msra.mxu0 0.0
        %2051 = vmatprep.subr.mxu0 0.0
        %2052 = vmatpush1.msra.mxu0 0.0
        %2053 = vmatprep.subr.mxu0 0.0
        %2054 = vmatpush1.msra.mxu0 0.0
        %2055 = vmatprep.subr.mxu0 0.0
        %2056 = vmatpush1.msra.mxu0 0.0
        %2057 = vmatprep.subr.mxu0 0.0
        %2058 = vmatpush1.msra.mxu0 0.0
        %2059 = vmatprep.subr.mxu0 0.0
        %2060 = vmatpush1.msra.mxu0 0.0
        %2061 = vmatprep.subr.mxu0 0.0
        %2062 = vmatpush1.msra.mxu0 0.0
        %2063 = vmatprep.subr.mxu0 0.0
        %2064 = vmatpush1.msra.mxu0 0.0
        %2065 = vmatprep.subr.mxu0 0.0
        %2066 = vmatpush1.msra.mxu0 0.0
        %2067 = vmatprep.subr.mxu0 0.0
        %2068 = vmatpush1.msra.mxu0 0.0
        %2069 = vmatprep.subr.mxu0 0.0
        %2070 = vmatpush1.msra.mxu0 0.0
        %2071 = vmatprep.subr.mxu0 0.0
        %2072 = vmatpush1.msra.mxu0 0.0
        %2073 = vmatprep.subr.mxu0 0.0
        %2074 = vmatpush1.msra.mxu0 0.0
        %2075 = vmatprep.subr.mxu0 0.0
        %2076 = vmatpush1.msra.mxu0 0.0
        %2077 = vmatprep.mubr.f32.mxu0 0.0
        %2078 = vmatmul.mubr.f32.gmra.mrb[0].mxu0 %v1798
        %v2079 = vpop.f32.mrb[0].mxu0
        %v2080 = vadd.f32 0.0, %v2079
        %v2081 = vpop.f32.mrb[0].mxu0
        %v2082 = vadd.f32 0.0, %v2081
        %2083 = vdwg.mxu0
        %2084 = vmatprep.subr.mxu0 %v1075
        %2085 = vmatpush1.msra.mxu0 %v1074
        %2086 = vmatprep.subr.mxu0 %v1077
        %2087 = vmatpush1.msra.mxu0 %v1076
        %2088 = vmatprep.subr.mxu0 %v1079
        %2089 = vmatpush1.msra.mxu0 %v1078
        %2090 = vmatprep.subr.mxu0 %v1081
        %2091 = vmatpush1.msra.mxu0 %v1080
        %2092 = vmatprep.subr.mxu0 %v1083
        %2093 = vmatpush1.msra.mxu0 %v1082
        %2094 = vmatprep.subr.mxu0 %v1085
        %2095 = vmatpush1.msra.mxu0 %v1084
        %2096 = vmatprep.subr.mxu0 %v1087
        %2097 = vmatpush1.msra.mxu0 %v1086
        %2098 = vmatprep.subr.mxu0 %v1089
        %2099 = vmatpush1.msra.mxu0 %v1088
        %2100 = vmatprep.subr.mxu0 0.0
        %2101 = vmatpush1.msra.mxu0 0.0
        %2102 = vmatprep.subr.mxu0 0.0
        %2103 = vmatpush1.msra.mxu0 0.0
        %2104 = vmatprep.subr.mxu0 0.0
        %2105 = vmatpush1.msra.mxu0 0.0
        %2106 = vmatprep.subr.mxu0 0.0
        %2107 = vmatpush1.msra.mxu0 0.0
        %2108 = vmatprep.subr.mxu0 0.0
        %2109 = vmatpush1.msra.mxu0 0.0
        %2110 = vmatprep.subr.mxu0 0.0
        %2111 = vmatpush1.msra.mxu0 0.0
        %2112 = vmatprep.subr.mxu0 0.0
        %2113 = vmatpush1.msra.mxu0 0.0
        %2114 = vmatprep.subr.mxu0 0.0
        %2115 = vmatpush1.msra.mxu0 0.0
        %2116 = vmatprep.subr.mxu0 0.0
        %2117 = vmatpush1.msra.mxu0 0.0
        %2118 = vmatprep.subr.mxu0 0.0
        %2119 = vmatpush1.msra.mxu0 0.0
        %2120 = vmatprep.subr.mxu0 0.0
        %2121 = vmatpush1.msra.mxu0 0.0
        %2122 = vmatprep.subr.mxu0 0.0
        %2123 = vmatpush1.msra.mxu0 0.0
        %2124 = vmatprep.subr.mxu0 0.0
        %2125 = vmatpush1.msra.mxu0 0.0
        %2126 = vmatprep.subr.mxu0 0.0
        %2127 = vmatpush1.msra.mxu0 0.0
        %2128 = vmatprep.subr.mxu0 0.0
        %2129 = vmatpush1.msra.mxu0 0.0
        %2130 = vmatprep.subr.mxu0 0.0
        %2131 = vmatpush1.msra.mxu0 0.0
        %2132 = vmatprep.subr.mxu0 0.0
        %2133 = vmatpush1.msra.mxu0 0.0
        %2134 = vmatprep.subr.mxu0 0.0
        %2135 = vmatpush1.msra.mxu0 0.0
        %2136 = vmatprep.subr.mxu0 0.0
        %2137 = vmatpush1.msra.mxu0 0.0
        %2138 = vmatprep.subr.mxu0 0.0
        %2139 = vmatpush1.msra.mxu0 0.0
        %2140 = vmatprep.subr.mxu0 0.0
        %2141 = vmatpush1.msra.mxu0 0.0
        %2142 = vmatprep.subr.mxu0 0.0
        %2143 = vmatpush1.msra.mxu0 0.0
        %2144 = vmatprep.subr.mxu0 0.0
        %2145 = vmatpush1.msra.mxu0 0.0
        %2146 = vmatprep.subr.mxu0 0.0
        %2147 = vmatpush1.msra.mxu0 0.0
        %2148 = vmatprep.mubr.f32.mxu0 0.0
        %2149 = vmatmul.mubr.f32.gmra.mrb[0].mxu0 %v1798
        %v2150 = vpop.f32.mrb[0].mxu0
        %v2151 = vadd.f32 0.0, %v2150
        %v2152 = vpop.f32.mrb[0].mxu0
        %v2153 = vadd.f32 0.0, %v2152
        %2154 = vdwg.mxu0
        %2155 = vmatprep.subr.mxu0 %v1091
        %2156 = vmatpush1.msra.mxu0 %v1090
        %2157 = vmatprep.subr.mxu0 %v1093
        %2158 = vmatpush1.msra.mxu0 %v1092
        %2159 = vmatprep.subr.mxu0 %v1095
        %2160 = vmatpush1.msra.mxu0 %v1094
        %2161 = vmatprep.subr.mxu0 %v1097
        %2162 = vmatpush1.msra.mxu0 %v1096
        %2163 = vmatprep.subr.mxu0 %v1099
        %2164 = vmatpush1.msra.mxu0 %v1098
        %2165 = vmatprep.subr.mxu0 %v1101
        %2166 = vmatpush1.msra.mxu0 %v1100
        %2167 = vmatprep.subr.mxu0 %v1103
        %2168 = vmatpush1.msra.mxu0 %v1102
        %2169 = vmatprep.subr.mxu0 %v1105
        %2170 = vmatpush1.msra.mxu0 %v1104
        %2171 = vmatprep.subr.mxu0 0.0
        %2172 = vmatpush1.msra.mxu0 0.0
        %2173 = vmatprep.subr.mxu0 0.0
        %2174 = vmatpush1.msra.mxu0 0.0
        %2175 = vmatprep.subr.mxu0 0.0
        %2176 = vmatpush1.msra.mxu0 0.0
        %2177 = vmatprep.subr.mxu0 0.0
        %2178 = vmatpush1.msra.mxu0 0.0
        %2179 = vmatprep.subr.mxu0 0.0
        %2180 = vmatpush1.msra.mxu0 0.0
        %2181 = vmatprep.subr.mxu0 0.0
        %2182 = vmatpush1.msra.mxu0 0.0
        %2183 = vmatprep.subr.mxu0 0.0
        %2184 = vmatpush1.msra.mxu0 0.0
        %2185 = vmatprep.subr.mxu0 0.0
        %2186 = vmatpush1.msra.mxu0 0.0
        %2187 = vmatprep.subr.mxu0 0.0
        %2188 = vmatpush1.msra.mxu0 0.0
        %2189 = vmatprep.subr.mxu0 0.0
        %2190 = vmatpush1.msra.mxu0 0.0
        %2191 = vmatprep.subr.mxu0 0.0
        %2192 = vmatpush1.msra.mxu0 0.0
        %2193 = vmatprep.subr.mxu0 0.0
        %2194 = vmatpush1.msra.mxu0 0.0
        %2195 = vmatprep.subr.mxu0 0.0
        %2196 = vmatpush1.msra.mxu0 0.0
        %2197 = vmatprep.subr.mxu0 0.0
        %2198 = vmatpush1.msra.mxu0 0.0
        %2199 = vmatprep.subr.mxu0 0.0
        %2200 = vmatpush1.msra.mxu0 0.0
        %2201 = vmatprep.subr.mxu0 0.0
        %2202 = vmatpush1.msra.mxu0 0.0
        %2203 = vmatprep.subr.mxu0 0.0
        %2204 = vmatpush1.msra.mxu0 0.0
        %2205 = vmatprep.subr.mxu0 0.0
        %2206 = vmatpush1.msra.mxu0 0.0
        %2207 = vmatprep.subr.mxu0 0.0
        %2208 = vmatpush1.msra.mxu0 0.0
        %2209 = vmatprep.subr.mxu0 0.0
        %2210 = vmatpush1.msra.mxu0 0.0
        %2211 = vmatprep.subr.mxu0 0.0
        %2212 = vmatpush1.msra.mxu0 0.0
        %2213 = vmatprep.subr.mxu0 0.0
        %2214 = vmatpush1.msra.mxu0 0.0
        %2215 = vmatprep.subr.mxu0 0.0
        %2216 = vmatpush1.msra.mxu0 0.0
        %2217 = vmatprep.subr.mxu0 0.0
        %2218 = vmatpush1.msra.mxu0 0.0
        %2219 = vmatprep.mubr.f32.mxu0 0.0
        %2220 = vmatmul.mubr.f32.gmra.mrb[0].mxu0 %v1798
        %v2221 = vpop.f32.mrb[0].mxu0
        %v2222 = vadd.f32 0.0, %v2221
        %v2223 = vpop.f32.mrb[0].mxu0
        %v2224 = vadd.f32 0.0, %v2223
        %2225 = vdwg.mxu0
        %2226 = vmatprep.subr.mxu0 %v1107
        %2227 = vmatpush1.msra.mxu0 %v1106
        %2228 = vmatprep.subr.mxu0 %v1109
        %2229 = vmatpush1.msra.mxu0 %v1108
        %2230 = vmatprep.subr.mxu0 %v1111
        %2231 = vmatpush1.msra.mxu0 %v1110
        %2232 = vmatprep.subr.mxu0 %v1113
        %2233 = vmatpush1.msra.mxu0 %v1112
        %2234 = vmatprep.subr.mxu0 %v1115
        %2235 = vmatpush1.msra.mxu0 %v1114
        %2236 = vmatprep.subr.mxu0 %v1117
        %2237 = vmatpush1.msra.mxu0 %v1116
        %2238 = vmatprep.subr.mxu0 %v1119
        %2239 = vmatpush1.msra.mxu0 %v1118
        %2240 = vmatprep.subr.mxu0 %v1121
        %2241 = vmatpush1.msra.mxu0 %v1120
        %2242 = vmatprep.subr.mxu0 0.0
        %2243 = vmatpush1.msra.mxu0 0.0
        %2244 = vmatprep.subr.mxu0 0.0
        %2245 = vmatpush1.msra.mxu0 0.0
        %2246 = vmatprep.subr.mxu0 0.0
        %2247 = vmatpush1.msra.mxu0 0.0
        %2248 = vmatprep.subr.mxu0 0.0
        %2249 = vmatpush1.msra.mxu0 0.0
        %2250 = vmatprep.subr.mxu0 0.0
        %2251 = vmatpush1.msra.mxu0 0.0
        %2252 = vmatprep.subr.mxu0 0.0
        %2253 = vmatpush1.msra.mxu0 0.0
        %2254 = vmatprep.subr.mxu0 0.0
        %2255 = vmatpush1.msra.mxu0 0.0
        %2256 = vmatprep.subr.mxu0 0.0
        %2257 = vmatpush1.msra.mxu0 0.0
        %2258 = vmatprep.subr.mxu0 0.0
        %2259 = vmatpush1.msra.mxu0 0.0
        %2260 = vmatprep.subr.mxu0 0.0
        %2261 = vmatpush1.msra.mxu0 0.0
        %2262 = vmatprep.subr.mxu0 0.0
        %2263 = vmatpush1.msra.mxu0 0.0
        %2264 = vmatprep.subr.mxu0 0.0
        %2265 = vmatpush1.msra.mxu0 0.0
        %2266 = vmatprep.subr.mxu0 0.0
        %2267 = vmatpush1.msra.mxu0 0.0
        %2268 = vmatprep.subr.mxu0 0.0
        %2269 = vmatpush1.msra.mxu0 0.0
        %2270 = vmatprep.subr.mxu0 0.0
        %2271 = vmatpush1.msra.mxu0 0.0
        %2272 = vmatprep.subr.mxu0 0.0
        %2273 = vmatpush1.msra.mxu0 0.0
        %2274 = vmatprep.subr.mxu0 0.0
        %2275 = vmatpush1.msra.mxu0 0.0
        %2276 = vmatprep.subr.mxu0 0.0
        %2277 = vmatpush1.msra.mxu0 0.0
        %2278 = vmatprep.subr.mxu0 0.0
        %2279 = vmatpush1.msra.mxu0 0.0
        %2280 = vmatprep.subr.mxu0 0.0
        %2281 = vmatpush1.msra.mxu0 0.0
        %2282 = vmatprep.subr.mxu0 0.0
        %2283 = vmatpush1.msra.mxu0 0.0
        %2284 = vmatprep.subr.mxu0 0.0
        %2285 = vmatpush1.msra.mxu0 0.0
        %2286 = vmatprep.subr.mxu0 0.0
        %2287 = vmatpush1.msra.mxu0 0.0
        %2288 = vmatprep.subr.mxu0 0.0
        %2289 = vmatpush1.msra.mxu0 0.0
        %2290 = vmatprep.mubr.f32.mxu0 0.0
        %2291 = vmatmul.mubr.f32.gmra.mrb[0].mxu0 %v1798
        %v2292 = vpop.f32.mrb[0].mxu0
        %v2293 = vadd.f32 0.0, %v2292
        %v2294 = vpop.f32.mrb[0].mxu0
        %v2295 = vadd.f32 0.0, %v2294
        %2296 = vdwg.mxu0
        %2297 = vmatprep.subr.mxu0 %v1123
        %2298 = vmatpush1.msra.mxu0 %v1122
        %2299 = vmatprep.subr.mxu0 %v1125
        %2300 = vmatpush1.msra.mxu0 %v1124
        %2301 = vmatprep.subr.mxu0 %v1127
        %2302 = vmatpush1.msra.mxu0 %v1126
        %2303 = vmatprep.subr.mxu0 %v1129
        %2304 = vmatpush1.msra.mxu0 %v1128
        %2305 = vmatprep.subr.mxu0 %v1131
        %2306 = vmatpush1.msra.mxu0 %v1130
        %2307 = vmatprep.subr.mxu0 %v1133
        %2308 = vmatpush1.msra.mxu0 %v1132
        %2309 = vmatprep.subr.mxu0 %v1135
        %2310 = vmatpush1.msra.mxu0 %v1134
        %2311 = vmatprep.subr.mxu0 %v1137
        %2312 = vmatpush1.msra.mxu0 %v1136
        %2313 = vmatprep.subr.mxu0 0.0
        %2314 = vmatpush1.msra.mxu0 0.0
        %2315 = vmatprep.subr.mxu0 0.0
        %2316 = vmatpush1.msra.mxu0 0.0
        %2317 = vmatprep.subr.mxu0 0.0
        %2318 = vmatpush1.msra.mxu0 0.0
        %2319 = vmatprep.subr.mxu0 0.0
        %2320 = vmatpush1.msra.mxu0 0.0
        %2321 = vmatprep.subr.mxu0 0.0
        %2322 = vmatpush1.msra.mxu0 0.0
        %2323 = vmatprep.subr.mxu0 0.0
        %2324 = vmatpush1.msra.mxu0 0.0
        %2325 = vmatprep.subr.mxu0 0.0
        %2326 = vmatpush1.msra.mxu0 0.0
        %2327 = vmatprep.subr.mxu0 0.0
        %2328 = vmatpush1.msra.mxu0 0.0
        %2329 = vmatprep.subr.mxu0 0.0
        %2330 = vmatpush1.msra.mxu0 0.0
        %2331 = vmatprep.subr.mxu0 0.0
        %2332 = vmatpush1.msra.mxu0 0.0
        %2333 = vmatprep.subr.mxu0 0.0
        %2334 = vmatpush1.msra.mxu0 0.0
        %2335 = vmatprep.subr.mxu0 0.0
        %2336 = vmatpush1.msra.mxu0 0.0
        %2337 = vmatprep.subr.mxu0 0.0
        %2338 = vmatpush1.msra.mxu0 0.0
        %2339 = vmatprep.subr.mxu0 0.0
        %2340 = vmatpush1.msra.mxu0 0.0
        %2341 = vmatprep.subr.mxu0 0.0
        %2342 = vmatpush1.msra.mxu0 0.0
        %2343 = vmatprep.subr.mxu0 0.0
        %2344 = vmatpush1.msra.mxu0 0.0
        %2345 = vmatprep.subr.mxu0 0.0
        %2346 = vmatpush1.msra.mxu0 0.0
        %2347 = vmatprep.subr.mxu0 0.0
        %2348 = vmatpush1.msra.mxu0 0.0
        %2349 = vmatprep.subr.mxu0 0.0
        %2350 = vmatpush1.msra.mxu0 0.0
        %2351 = vmatprep.subr.mxu0 0.0
        %2352 = vmatpush1.msra.mxu0 0.0
        %2353 = vmatprep.subr.mxu0 0.0
        %2354 = vmatpush1.msra.mxu0 0.0
        %2355 = vmatprep.subr.mxu0 0.0
        %2356 = vmatpush1.msra.mxu0 0.0
        %2357 = vmatprep.subr.mxu0 0.0
        %2358 = vmatpush1.msra.mxu0 0.0
        %2359 = vmatprep.subr.mxu0 0.0
        %2360 = vmatpush1.msra.mxu0 0.0
        %2361 = vmatprep.mubr.f32.mxu0 0.0
        %2362 = vmatmul.mubr.f32.gmra.mrb[0].mxu0 %v1798
        %v2363 = vpop.f32.mrb[0].mxu0
        %v2364 = vadd.f32 0.0, %v2363
        %v2365 = vpop.f32.mrb[0].mxu0
        %v2366 = vadd.f32 0.0, %v2365
        %2367 = vdwg.mxu0
        %2368 = vmatprep.subr.mxu0 %v1139
        %2369 = vmatpush1.msra.mxu0 %v1138
        %2370 = vmatprep.subr.mxu0 %v1141
        %2371 = vmatpush1.msra.mxu0 %v1140
        %2372 = vmatprep.subr.mxu0 %v1143
        %2373 = vmatpush1.msra.mxu0 %v1142
        %2374 = vmatprep.subr.mxu0 %v1145
        %2375 = vmatpush1.msra.mxu0 %v1144
        %2376 = vmatprep.subr.mxu0 %v1147
        %2377 = vmatpush1.msra.mxu0 %v1146
        %2378 = vmatprep.subr.mxu0 %v1149
        %2379 = vmatpush1.msra.mxu0 %v1148
        %2380 = vmatprep.subr.mxu0 %v1151
        %2381 = vmatpush1.msra.mxu0 %v1150
        %2382 = vmatprep.subr.mxu0 %v1153
        %2383 = vmatpush1.msra.mxu0 %v1152
        %2384 = vmatprep.subr.mxu0 0.0
        %2385 = vmatpush1.msra.mxu0 0.0
        %2386 = vmatprep.subr.mxu0 0.0
        %2387 = vmatpush1.msra.mxu0 0.0
        %2388 = vmatprep.subr.mxu0 0.0
        %2389 = vmatpush1.msra.mxu0 0.0
        %2390 = vmatprep.subr.mxu0 0.0
        %2391 = vmatpush1.msra.mxu0 0.0
        %2392 = vmatprep.subr.mxu0 0.0
        %2393 = vmatpush1.msra.mxu0 0.0
        %2394 = vmatprep.subr.mxu0 0.0
        %2395 = vmatpush1.msra.mxu0 0.0
        %2396 = vmatprep.subr.mxu0 0.0
        %2397 = vmatpush1.msra.mxu0 0.0
        %2398 = vmatprep.subr.mxu0 0.0
        %2399 = vmatpush1.msra.mxu0 0.0
        %2400 = vmatprep.subr.mxu0 0.0
        %2401 = vmatpush1.msra.mxu0 0.0
        %2402 = vmatprep.subr.mxu0 0.0
        %2403 = vmatpush1.msra.mxu0 0.0
        %2404 = vmatprep.subr.mxu0 0.0
        %2405 = vmatpush1.msra.mxu0 0.0
        %2406 = vmatprep.subr.mxu0 0.0
        %2407 = vmatpush1.msra.mxu0 0.0
        %2408 = vmatprep.subr.mxu0 0.0
        %2409 = vmatpush1.msra.mxu0 0.0
        %2410 = vmatprep.subr.mxu0 0.0
        %2411 = vmatpush1.msra.mxu0 0.0
        %2412 = vmatprep.subr.mxu0 0.0
        %2413 = vmatpush1.msra.mxu0 0.0
        %2414 = vmatprep.subr.mxu0 0.0
        %2415 = vmatpush1.msra.mxu0 0.0
        %2416 = vmatprep.subr.mxu0 0.0
        %2417 = vmatpush1.msra.mxu0 0.0
        %2418 = vmatprep.subr.mxu0 0.0
        %2419 = vmatpush1.msra.mxu0 0.0
        %2420 = vmatprep.subr.mxu0 0.0
        %2421 = vmatpush1.msra.mxu0 0.0
        %2422 = vmatprep.subr.mxu0 0.0
        %2423 = vmatpush1.msra.mxu0 0.0
        %2424 = vmatprep.subr.mxu0 0.0
        %2425 = vmatpush1.msra.mxu0 0.0
        %2426 = vmatprep.subr.mxu0 0.0
        %2427 = vmatpush1.msra.mxu0 0.0
        %2428 = vmatprep.subr.mxu0 0.0
        %2429 = vmatpush1.msra.mxu0 0.0
        %2430 = vmatprep.subr.mxu0 0.0
        %2431 = vmatpush1.msra.mxu0 0.0
        %2432 = vmatprep.mubr.f32.mxu0 0.0
        %2433 = vmatmul.mubr.f32.gmra.mrb[0].mxu0 %v1798
        %v2434 = vpop.f32.mrb[0].mxu0
        %v2435 = vadd.f32 0.0, %v2434
        %v2436 = vpop.f32.mrb[0].mxu0
        %v2437 = vadd.f32 0.0, %v2436
        %2438 = vdwg.mxu0
        %v2439 = vld [vmem:[%s4] sm:$0xff]
        %v2440 = vld [vmem:[%s5] sm:$0xff]
        %vm2441 = vcmask 588800
        %v2443 = vsel %vm2441, %v2440, 0
        %2445 = vmatprep.subr.mxu0 %v1869
        %2446 = vmatpush1.msra.mxu0 %v1867
        %2447 = vmatprep.subr.mxu0 %v1940
        %2448 = vmatpush1.msra.mxu0 %v1938
        %2449 = vmatprep.subr.mxu0 %v2011
        %2450 = vmatpush1.msra.mxu0 %v2009
        %2451 = vmatprep.subr.mxu0 %v2082
        %2452 = vmatpush1.msra.mxu0 %v2080
        %2453 = vmatprep.subr.mxu0 %v2153
        %2454 = vmatpush1.msra.mxu0 %v2151
        %2455 = vmatprep.subr.mxu0 %v2224
        %2456 = vmatpush1.msra.mxu0 %v2222
        %2457 = vmatprep.subr.mxu0 %v2295
        %2458 = vmatpush1.msra.mxu0 %v2293
        %2459 = vmatprep.subr.mxu0 %v2366
        %2460 = vmatpush1.msra.mxu0 %v2364
        %2461 = vmatprep.subr.mxu0 %v2437
        %2462 = vmatpush1.msra.mxu0 %v2435
        %2463 = vmatprep.subr.mxu0 0.0
        %2464 = vmatpush1.msra.mxu0 0.0
        %2465 = vmatprep.subr.mxu0 0.0
        %2466 = vmatpush1.msra.mxu0 0.0
        %2467 = vmatprep.subr.mxu0 0.0
        %2468 = vmatpush1.msra.mxu0 0.0
        %2469 = vmatprep.subr.mxu0 0.0
        %2470 = vmatpush1.msra.mxu0 0.0
        %2471 = vmatprep.subr.mxu0 0.0
        %2472 = vmatpush1.msra.mxu0 0.0
        %2473 = vmatprep.subr.mxu0 0.0
        %2474 = vmatpush1.msra.mxu0 0.0
        %2475 = vmatprep.subr.mxu0 0.0
        %2476 = vmatpush1.msra.mxu0 0.0
        %2477 = vmatprep.subr.mxu0 0.0
        %2478 = vmatpush1.msra.mxu0 0.0
        %2479 = vmatprep.subr.mxu0 0.0
        %2480 = vmatpush1.msra.mxu0 0.0
        %2481 = vmatprep.subr.mxu0 0.0
        %2482 = vmatpush1.msra.mxu0 0.0
        %2483 = vmatprep.subr.mxu0 0.0
        %2484 = vmatpush1.msra.mxu0 0.0
        %2485 = vmatprep.subr.mxu0 0.0
        %2486 = vmatpush1.msra.mxu0 0.0
        %2487 = vmatprep.subr.mxu0 0.0
        %2488 = vmatpush1.msra.mxu0 0.0
        %2489 = vmatprep.subr.mxu0 0.0
        %2490 = vmatpush1.msra.mxu0 0.0
        %2491 = vmatprep.subr.mxu0 0.0
        %2492 = vmatpush1.msra.mxu0 0.0
        %2493 = vmatprep.subr.mxu0 0.0
        %2494 = vmatpush1.msra.mxu0 0.0
        %2495 = vmatprep.subr.mxu0 0.0
        %2496 = vmatpush1.msra.mxu0 0.0
        %2497 = vmatprep.subr.mxu0 0.0
        %2498 = vmatpush1.msra.mxu0 0.0
        %2499 = vmatprep.subr.mxu0 0.0
        %2500 = vmatpush1.msra.mxu0 0.0
        %2501 = vmatprep.subr.mxu0 0.0
        %2502 = vmatpush1.msra.mxu0 0.0
        %2503 = vmatprep.subr.mxu0 0.0
        %2504 = vmatpush1.msra.mxu0 0.0
        %2505 = vmatprep.subr.mxu0 0.0
        %2506 = vmatpush1.msra.mxu0 0.0
        %2507 = vmatprep.subr.mxu0 0.0
        %2508 = vmatpush1.msra.mxu0 0.0
        %2509 = vmatprep.mubr.f32.mxu0 0.0
        %2510 = vmatmul.mubr.f32.gmra.mrb[0].mxu0 %v2443
        %v2511 = vpop.f32.mrb[0].mxu0
        %v2512 = vadd.f32 0.0, %v2511
        %v2513 = vpop.f32.mrb[0].mxu0
        %v2514 = vadd.f32 0.0, %v2513
        %2515 = vdwg.mxu0
        %v2517 = vsel %vm2441, %v2439, 0
        %2519 = vmatprep.subr.mxu0 %v1225
        %2520 = vmatpush1.msra.mxu0 %v1223
        %2521 = vmatprep.subr.mxu0 %v1296
        %2522 = vmatpush1.msra.mxu0 %v1294
        %2523 = vmatprep.subr.mxu0 %v1367
        %2524 = vmatpush1.msra.mxu0 %v1365
        %2525 = vmatprep.subr.mxu0 %v1438
        %2526 = vmatpush1.msra.mxu0 %v1436
        %2527 = vmatprep.subr.mxu0 %v1509
        %2528 = vmatpush1.msra.mxu0 %v1507
        %2529 = vmatprep.subr.mxu0 %v1580
        %2530 = vmatpush1.msra.mxu0 %v1578
        %2531 = vmatprep.subr.mxu0 %v1651
        %2532 = vmatpush1.msra.mxu0 %v1649
        %2533 = vmatprep.subr.mxu0 %v1722
        %2534 = vmatpush1.msra.mxu0 %v1720
        %2535 = vmatprep.subr.mxu0 %v1793
        %2536 = vmatpush1.msra.mxu0 %v1791
        %2537 = vmatprep.subr.mxu0 0.0
        %2538 = vmatpush1.msra.mxu0 0.0
        %2539 = vmatprep.subr.mxu0 0.0
        %2540 = vmatpush1.msra.mxu0 0.0
        %2541 = vmatprep.subr.mxu0 0.0
        %2542 = vmatpush1.msra.mxu0 0.0
        %2543 = vmatprep.subr.mxu0 0.0
        %2544 = vmatpush1.msra.mxu0 0.0
        %2545 = vmatprep.subr.mxu0 0.0
        %2546 = vmatpush1.msra.mxu0 0.0
        %2547 = vmatprep.subr.mxu0 0.0
        %2548 = vmatpush1.msra.mxu0 0.0
        %2549 = vmatprep.subr.mxu0 0.0
        %2550 = vmatpush1.msra.mxu0 0.0
        %2551 = vmatprep.subr.mxu0 0.0
        %2552 = vmatpush1.msra.mxu0 0.0
        %2553 = vmatprep.subr.mxu0 0.0
        %2554 = vmatpush1.msra.mxu0 0.0
        %2555 = vmatprep.subr.mxu0 0.0
        %2556 = vmatpush1.msra.mxu0 0.0
        %2557 = vmatprep.subr.mxu0 0.0
        %2558 = vmatpush1.msra.mxu0 0.0
        %2559 = vmatprep.subr.mxu0 0.0
        %2560 = vmatpush1.msra.mxu0 0.0
        %2561 = vmatprep.subr.mxu0 0.0
        %2562 = vmatpush1.msra.mxu0 0.0
        %2563 = vmatprep.subr.mxu0 0.0
        %2564 = vmatpush1.msra.mxu0 0.0
        %2565 = vmatprep.subr.mxu0 0.0
        %2566 = vmatpush1.msra.mxu0 0.0
        %2567 = vmatprep.subr.mxu0 0.0
        %2568 = vmatpush1.msra.mxu0 0.0
        %2569 = vmatprep.subr.mxu0 0.0
        %2570 = vmatpush1.msra.mxu0 0.0
        %2571 = vmatprep.subr.mxu0 0.0
        %2572 = vmatpush1.msra.mxu0 0.0
        %2573 = vmatprep.subr.mxu0 0.0
        %2574 = vmatpush1.msra.mxu0 0.0
        %2575 = vmatprep.subr.mxu0 0.0
        %2576 = vmatpush1.msra.mxu0 0.0
        %2577 = vmatprep.subr.mxu0 0.0
        %2578 = vmatpush1.msra.mxu0 0.0
        %2579 = vmatprep.subr.mxu0 0.0
        %2580 = vmatpush1.msra.mxu0 0.0
        %2581 = vmatprep.subr.mxu0 0.0
        %2582 = vmatpush1.msra.mxu0 0.0
        %2583 = vmatprep.mubr.f32.mxu0 0.0
        %2584 = vmatmul.mubr.f32.gmra.mrb[0].mxu0 %v2517
        %v2585 = vpop.f32.mrb[0].mxu0
        %v2586 = vadd.f32 %v2512, %v2585
        %v2587 = vpop.f32.mrb[0].mxu0
        %v2588 = vadd.f32 %v2514, %v2587
        %2589 = vdwg.mxu0
        %v2590 = vld [vmem:[%s6] sm:$0xff]
        %2592 = vset.pattern.permute.xlu0 0
        %2593 = vperm.xlu0 %2592, %v2590
        %v2594 = vpop.permute.xlu0 %2593
        %v2596 = vmul.f32 %v2586, %v2594
        %v2597 = vmul.f32 %v2588, %v2594
        %v2598 = vld [vmem:[%s7] sm:$0xff]
        %2600 = vset.pattern.permute.xlu0 0
        %2601 = vperm.xlu0 %2600, %v2598
        %v2602 = vpop.permute.xlu0 %2601
        %v2604 = vadd.f32 %v2596, %v2602
        %v2605 = vadd.f32 %v2597, %v2602
        %v2606 = vmax.f32 %v2604, 0.0
        %v2607 = vmax.f32 %v2605, 0.0
        %2608 = vmatprep.subr.mxu0 %v435
        %2609 = vmatpush1.msra.mxu0 %v434
        %2610 = vmatprep.subr.mxu0 %v437
        %2611 = vmatpush1.msra.mxu0 %v436
        %2612 = vmatprep.subr.mxu0 %v439
        %2613 = vmatpush1.msra.mxu0 %v438
        %2614 = vmatprep.subr.mxu0 %v441
        %2615 = vmatpush1.msra.mxu0 %v440
        %2616 = vmatprep.subr.mxu0 %v443
        %2617 = vmatpush1.msra.mxu0 %v442
        %2618 = vmatprep.subr.mxu0 %v445
        %2619 = vmatpush1.msra.mxu0 %v444
        %2620 = vmatprep.subr.mxu0 %v447
        %2621 = vmatpush1.msra.mxu0 %v446
        %2622 = vmatprep.subr.mxu0 %v449
        %2623 = vmatpush1.msra.mxu0 %v448
        %2624 = vmatprep.subr.mxu0 %v451
        %2625 = vmatpush1.msra.mxu0 %v450
        %2626 = vmatprep.subr.mxu0 %v453
        %2627 = vmatpush1.msra.mxu0 %v452
        %2628 = vmatprep.subr.mxu0 %v455
        %2629 = vmatpush1.msra.mxu0 %v454
        %2630 = vmatprep.subr.mxu0 %v457
        %2631 = vmatpush1.msra.mxu0 %v456
        %2632 = vmatprep.subr.mxu0 %v459
        %2633 = vmatpush1.msra.mxu0 %v458
        %2634 = vmatprep.subr.mxu0 %v461
        %2635 = vmatpush1.msra.mxu0 %v460
        %2636 = vmatprep.subr.mxu0 %v463
        %2637 = vmatpush1.msra.mxu0 %v462
        %2638 = vmatprep.subr.mxu0 %v465
        %2639 = vmatpush1.msra.mxu0 %v464
        %2640 = vmatprep.subr.mxu0 %v467
        %2641 = vmatpush1.msra.mxu0 %v466
        %2642 = vmatprep.subr.mxu0 %v469
        %2643 = vmatpush1.msra.mxu0 %v468
        %2644 = vmatprep.subr.mxu0 %v471
        %2645 = vmatpush1.msra.mxu0 %v470
        %2646 = vmatprep.subr.mxu0 %v473
        %2647 = vmatpush1.msra.mxu0 %v472
        %2648 = vmatprep.subr.mxu0 %v475
        %2649 = vmatpush1.msra.mxu0 %v474
        %2650 = vmatprep.subr.mxu0 %v477
        %2651 = vmatpush1.msra.mxu0 %v476
        %2652 = vmatprep.subr.mxu0 %v479
        %2653 = vmatpush1.msra.mxu0 %v478
        %2654 = vmatprep.subr.mxu0 %v481
        %2655 = vmatpush1.msra.mxu0 %v480
        %2656 = vmatprep.subr.mxu0 %v483
        %2657 = vmatpush1.msra.mxu0 %v482
        %2658 = vmatprep.subr.mxu0 %v485
        %2659 = vmatpush1.msra.mxu0 %v484
        %2660 = vmatprep.subr.mxu0 %v487
        %2661 = vmatpush1.msra.mxu0 %v486
        %2662 = vmatprep.subr.mxu0 %v489
        %2663 = vmatpush1.msra.mxu0 %v488
        %2664 = vmatprep.subr.mxu0 %v491
        %2665 = vmatpush1.msra.mxu0 %v490
        %2666 = vmatprep.subr.mxu0 %v493
        %2667 = vmatpush1.msra.mxu0 %v492
        %2668 = vmatprep.subr.mxu0 %v495
        %2669 = vmatpush1.msra.mxu0 %v494
        %2670 = vmatprep.subr.mxu0 %v497
        %2671 = vmatpush1.msra.mxu0 %v496
        %2672 = vmatprep.mubr.f32.mxu0 %v2607
        %2673 = vmatmul.mubr.f32.gmra.mrb[0].mxu0 %v2606
        %v2674 = vpop.f32.mrb[0].mxu0
        %v2675 = vadd.f32 0.0, %v2674
        %v2676 = vpop.f32.mrb[0].mxu0
        %v2677 = vadd.f32 0.0, %v2676
        %2678 = vdwg.mxu0
        %2679 = vmatprep.subr.mxu0 %v499
        %2680 = vmatpush1.msra.mxu0 %v498
        %2681 = vmatprep.subr.mxu0 %v501
        %2682 = vmatpush1.msra.mxu0 %v500
        %2683 = vmatprep.subr.mxu0 %v503
        %2684 = vmatpush1.msra.mxu0 %v502
        %2685 = vmatprep.subr.mxu0 %v505
        %2686 = vmatpush1.msra.mxu0 %v504
        %2687 = vmatprep.subr.mxu0 %v507
        %2688 = vmatpush1.msra.mxu0 %v506
        %2689 = vmatprep.subr.mxu0 %v509
        %2690 = vmatpush1.msra.mxu0 %v508
        %2691 = vmatprep.subr.mxu0 %v511
        %2692 = vmatpush1.msra.mxu0 %v510
        %2693 = vmatprep.subr.mxu0 %v513
        %2694 = vmatpush1.msra.mxu0 %v512
        %2695 = vmatprep.subr.mxu0 %v515
        %2696 = vmatpush1.msra.mxu0 %v514
        %2697 = vmatprep.subr.mxu0 %v517
        %2698 = vmatpush1.msra.mxu0 %v516
        %2699 = vmatprep.subr.mxu0 %v519
        %2700 = vmatpush1.msra.mxu0 %v518
        %2701 = vmatprep.subr.mxu0 %v521
        %2702 = vmatpush1.msra.mxu0 %v520
        %2703 = vmatprep.subr.mxu0 %v523
        %2704 = vmatpush1.msra.mxu0 %v522
        %2705 = vmatprep.subr.mxu0 %v525
        %2706 = vmatpush1.msra.mxu0 %v524
        %2707 = vmatprep.subr.mxu0 %v527
        %2708 = vmatpush1.msra.mxu0 %v526
        %2709 = vmatprep.subr.mxu0 %v529
        %2710 = vmatpush1.msra.mxu0 %v528
        %2711 = vmatprep.subr.mxu0 %v531
        %2712 = vmatpush1.msra.mxu0 %v530
        %2713 = vmatprep.subr.mxu0 %v533
        %2714 = vmatpush1.msra.mxu0 %v532
        %2715 = vmatprep.subr.mxu0 %v535
        %2716 = vmatpush1.msra.mxu0 %v534
        %2717 = vmatprep.subr.mxu0 %v537
        %2718 = vmatpush1.msra.mxu0 %v536
        %2719 = vmatprep.subr.mxu0 %v539
        %2720 = vmatpush1.msra.mxu0 %v538
        %2721 = vmatprep.subr.mxu0 %v541
        %2722 = vmatpush1.msra.mxu0 %v540
        %2723 = vmatprep.subr.mxu0 %v543
        %2724 = vmatpush1.msra.mxu0 %v542
        %2725 = vmatprep.subr.mxu0 %v545
        %2726 = vmatpush1.msra.mxu0 %v544
        %2727 = vmatprep.subr.mxu0 %v547
        %2728 = vmatpush1.msra.mxu0 %v546
        %2729 = vmatprep.subr.mxu0 %v549
        %2730 = vmatpush1.msra.mxu0 %v548
        %2731 = vmatprep.subr.mxu0 %v551
        %2732 = vmatpush1.msra.mxu0 %v550
        %2733 = vmatprep.subr.mxu0 %v553
        %2734 = vmatpush1.msra.mxu0 %v552
        %2735 = vmatprep.subr.mxu0 %v555
        %2736 = vmatpush1.msra.mxu0 %v554
        %2737 = vmatprep.subr.mxu0 %v557
        %2738 = vmatpush1.msra.mxu0 %v556
        %2739 = vmatprep.subr.mxu0 %v559
        %2740 = vmatpush1.msra.mxu0 %v558
        %2741 = vmatprep.subr.mxu0 %v561
        %2742 = vmatpush1.msra.mxu0 %v560
        %2743 = vmatprep.mubr.f32.mxu0 %v2607
        %2744 = vmatmul.mubr.f32.gmra.mrb[0].mxu0 %v2606
        %v2745 = vpop.f32.mrb[0].mxu0
        %v2746 = vadd.f32 0.0, %v2745
        %v2747 = vpop.f32.mrb[0].mxu0
        %v2748 = vadd.f32 0.0, %v2747
        %2749 = vdwg.mxu0
        %2750 = vmatprep.subr.mxu0 %v563
        %2751 = vmatpush1.msra.mxu0 %v562
        %2752 = vmatprep.subr.mxu0 %v565
        %2753 = vmatpush1.msra.mxu0 %v564
        %2754 = vmatprep.subr.mxu0 %v567
        %2755 = vmatpush1.msra.mxu0 %v566
        %2756 = vmatprep.subr.mxu0 %v569
        %2757 = vmatpush1.msra.mxu0 %v568
        %2758 = vmatprep.subr.mxu0 %v571
        %2759 = vmatpush1.msra.mxu0 %v570
        %2760 = vmatprep.subr.mxu0 %v573
        %2761 = vmatpush1.msra.mxu0 %v572
        %2762 = vmatprep.subr.mxu0 %v575
        %2763 = vmatpush1.msra.mxu0 %v574
        %2764 = vmatprep.subr.mxu0 %v577
        %2765 = vmatpush1.msra.mxu0 %v576
        %2766 = vmatprep.subr.mxu0 %v579
        %2767 = vmatpush1.msra.mxu0 %v578
        %2768 = vmatprep.subr.mxu0 %v581
        %2769 = vmatpush1.msra.mxu0 %v580
        %2770 = vmatprep.subr.mxu0 %v583
        %2771 = vmatpush1.msra.mxu0 %v582
        %2772 = vmatprep.subr.mxu0 %v585
        %2773 = vmatpush1.msra.mxu0 %v584
        %2774 = vmatprep.subr.mxu0 %v587
        %2775 = vmatpush1.msra.mxu0 %v586
        %2776 = vmatprep.subr.mxu0 %v589
        %2777 = vmatpush1.msra.mxu0 %v588
        %2778 = vmatprep.subr.mxu0 %v591
        %2779 = vmatpush1.msra.mxu0 %v590
        %2780 = vmatprep.subr.mxu0 %v593
        %2781 = vmatpush1.msra.mxu0 %v592
        %2782 = vmatprep.subr.mxu0 %v595
        %2783 = vmatpush1.msra.mxu0 %v594
        %2784 = vmatprep.subr.mxu0 %v597
        %2785 = vmatpush1.msra.mxu0 %v596
        %2786 = vmatprep.subr.mxu0 %v599
        %2787 = vmatpush1.msra.mxu0 %v598
        %2788 = vmatprep.subr.mxu0 %v601
        %2789 = vmatpush1.msra.mxu0 %v600
        %2790 = vmatprep.subr.mxu0 %v603
        %2791 = vmatpush1.msra.mxu0 %v602
        %2792 = vmatprep.subr.mxu0 %v605
        %2793 = vmatpush1.msra.mxu0 %v604
        %2794 = vmatprep.subr.mxu0 %v607
        %2795 = vmatpush1.msra.mxu0 %v606
        %2796 = vmatprep.subr.mxu0 %v609
        %2797 = vmatpush1.msra.mxu0 %v608
        %2798 = vmatprep.subr.mxu0 %v611
        %2799 = vmatpush1.msra.mxu0 %v610
        %2800 = vmatprep.subr.mxu0 %v613
        %2801 = vmatpush1.msra.mxu0 %v612
        %2802 = vmatprep.subr.mxu0 %v615
        %2803 = vmatpush1.msra.mxu0 %v614
        %2804 = vmatprep.subr.mxu0 %v617
        %2805 = vmatpush1.msra.mxu0 %v616
        %2806 = vmatprep.subr.mxu0 %v619
        %2807 = vmatpush1.msra.mxu0 %v618
        %2808 = vmatprep.subr.mxu0 %v621
        %2809 = vmatpush1.msra.mxu0 %v620
        %2810 = vmatprep.subr.mxu0 %v623
        %2811 = vmatpush1.msra.mxu0 %v622
        %2812 = vmatprep.subr.mxu0 %v625
        %2813 = vmatpush1.msra.mxu0 %v624
        %2814 = vmatprep.mubr.f32.mxu0 %v2607
        %2815 = vmatmul.mubr.f32.gmra.mrb[0].mxu0 %v2606
        %v2816 = vpop.f32.mrb[0].mxu0
        %v2817 = vadd.f32 0.0, %v2816
        %v2818 = vpop.f32.mrb[0].mxu0
        %v2819 = vadd.f32 0.0, %v2818
        %2820 = vdwg.mxu0
        %2821 = vmatprep.subr.mxu0 %v627
        %2822 = vmatpush1.msra.mxu0 %v626
        %2823 = vmatprep.subr.mxu0 %v629
        %2824 = vmatpush1.msra.mxu0 %v628
        %2825 = vmatprep.subr.mxu0 %v631
        %2826 = vmatpush1.msra.mxu0 %v630
        %2827 = vmatprep.subr.mxu0 %v633
        %2828 = vmatpush1.msra.mxu0 %v632
        %2829 = vmatprep.subr.mxu0 %v635
        %2830 = vmatpush1.msra.mxu0 %v634
        %2831 = vmatprep.subr.mxu0 %v637
        %2832 = vmatpush1.msra.mxu0 %v636
        %2833 = vmatprep.subr.mxu0 %v639
        %2834 = vmatpush1.msra.mxu0 %v638
        %2835 = vmatprep.subr.mxu0 %v641
        %2836 = vmatpush1.msra.mxu0 %v640
        %2837 = vmatprep.subr.mxu0 %v643
        %2838 = vmatpush1.msra.mxu0 %v642
        %2839 = vmatprep.subr.mxu0 %v645
        %2840 = vmatpush1.msra.mxu0 %v644
        %2841 = vmatprep.subr.mxu0 %v647
        %2842 = vmatpush1.msra.mxu0 %v646
        %2843 = vmatprep.subr.mxu0 %v649
        %2844 = vmatpush1.msra.mxu0 %v648
        %2845 = vmatprep.subr.mxu0 %v651
        %2846 = vmatpush1.msra.mxu0 %v650
        %2847 = vmatprep.subr.mxu0 %v653
        %2848 = vmatpush1.msra.mxu0 %v652
        %2849 = vmatprep.subr.mxu0 %v655
        %2850 = vmatpush1.msra.mxu0 %v654
        %2851 = vmatprep.subr.mxu0 %v657
        %2852 = vmatpush1.msra.mxu0 %v656
        %2853 = vmatprep.subr.mxu0 %v659
        %2854 = vmatpush1.msra.mxu0 %v658
        %2855 = vmatprep.subr.mxu0 %v661
        %2856 = vmatpush1.msra.mxu0 %v660
        %2857 = vmatprep.subr.mxu0 %v663
        %2858 = vmatpush1.msra.mxu0 %v662
        %2859 = vmatprep.subr.mxu0 %v665
        %2860 = vmatpush1.msra.mxu0 %v664
        %2861 = vmatprep.subr.mxu0 %v667
        %2862 = vmatpush1.msra.mxu0 %v666
        %2863 = vmatprep.subr.mxu0 %v669
        %2864 = vmatpush1.msra.mxu0 %v668
        %2865 = vmatprep.subr.mxu0 %v671
        %2866 = vmatpush1.msra.mxu0 %v670
        %2867 = vmatprep.subr.mxu0 %v673
        %2868 = vmatpush1.msra.mxu0 %v672
        %2869 = vmatprep.subr.mxu0 %v675
        %2870 = vmatpush1.msra.mxu0 %v674
        %2871 = vmatprep.subr.mxu0 %v677
        %2872 = vmatpush1.msra.mxu0 %v676
        %2873 = vmatprep.subr.mxu0 %v679
        %2874 = vmatpush1.msra.mxu0 %v678
        %2875 = vmatprep.subr.mxu0 %v681
        %2876 = vmatpush1.msra.mxu0 %v680
        %2877 = vmatprep.subr.mxu0 %v683
        %2878 = vmatpush1.msra.mxu0 %v682
        %2879 = vmatprep.subr.mxu0 %v685
        %2880 = vmatpush1.msra.mxu0 %v684
        %2881 = vmatprep.subr.mxu0 %v687
        %2882 = vmatpush1.msra.mxu0 %v686
        %2883 = vmatprep.subr.mxu0 %v689
        %2884 = vmatpush1.msra.mxu0 %v688
        %2885 = vmatprep.mubr.f32.mxu0 %v2607
        %2886 = vmatmul.mubr.f32.gmra.mrb[0].mxu0 %v2606
        %v2887 = vpop.f32.mrb[0].mxu0
        %v2888 = vadd.f32 0.0, %v2887
        %v2889 = vpop.f32.mrb[0].mxu0
        %v2890 = vadd.f32 0.0, %v2889
        %2891 = vdwg.mxu0
        %2892 = vmatprep.subr.mxu0 %v691
        %2893 = vmatpush1.msra.mxu0 %v690
        %2894 = vmatprep.subr.mxu0 %v693
        %2895 = vmatpush1.msra.mxu0 %v692
        %2896 = vmatprep.subr.mxu0 %v695
        %2897 = vmatpush1.msra.mxu0 %v694
        %2898 = vmatprep.subr.mxu0 %v697
        %2899 = vmatpush1.msra.mxu0 %v696
        %2900 = vmatprep.subr.mxu0 %v699
        %2901 = vmatpush1.msra.mxu0 %v698
        %2902 = vmatprep.subr.mxu0 %v701
        %2903 = vmatpush1.msra.mxu0 %v700
        %2904 = vmatprep.subr.mxu0 %v703
        %2905 = vmatpush1.msra.mxu0 %v702
        %2906 = vmatprep.subr.mxu0 %v705
        %2907 = vmatpush1.msra.mxu0 %v704
        %2908 = vmatprep.subr.mxu0 %v707
        %2909 = vmatpush1.msra.mxu0 %v706
        %2910 = vmatprep.subr.mxu0 %v709
        %2911 = vmatpush1.msra.mxu0 %v708
        %2912 = vmatprep.subr.mxu0 %v711
        %2913 = vmatpush1.msra.mxu0 %v710
        %2914 = vmatprep.subr.mxu0 %v713
        %2915 = vmatpush1.msra.mxu0 %v712
        %2916 = vmatprep.subr.mxu0 %v715
        %2917 = vmatpush1.msra.mxu0 %v714
        %2918 = vmatprep.subr.mxu0 %v717
        %2919 = vmatpush1.msra.mxu0 %v716
        %2920 = vmatprep.subr.mxu0 %v719
        %2921 = vmatpush1.msra.mxu0 %v718
        %2922 = vmatprep.subr.mxu0 %v721
        %2923 = vmatpush1.msra.mxu0 %v720
        %2924 = vmatprep.subr.mxu0 %v723
        %2925 = vmatpush1.msra.mxu0 %v722
        %2926 = vmatprep.subr.mxu0 %v725
        %2927 = vmatpush1.msra.mxu0 %v724
        %2928 = vmatprep.subr.mxu0 %v727
        %2929 = vmatpush1.msra.mxu0 %v726
        %2930 = vmatprep.subr.mxu0 %v729
        %2931 = vmatpush1.msra.mxu0 %v728
        %2932 = vmatprep.subr.mxu0 %v731
        %2933 = vmatpush1.msra.mxu0 %v730
        %2934 = vmatprep.subr.mxu0 %v733
        %2935 = vmatpush1.msra.mxu0 %v732
        %2936 = vmatprep.subr.mxu0 %v735
        %2937 = vmatpush1.msra.mxu0 %v734
        %2938 = vmatprep.subr.mxu0 %v737
        %2939 = vmatpush1.msra.mxu0 %v736
        %2940 = vmatprep.subr.mxu0 %v739
        %2941 = vmatpush1.msra.mxu0 %v738
        %2942 = vmatprep.subr.mxu0 %v741
        %2943 = vmatpush1.msra.mxu0 %v740
        %2944 = vmatprep.subr.mxu0 %v743
        %2945 = vmatpush1.msra.mxu0 %v742
        %2946 = vmatprep.subr.mxu0 %v745
        %2947 = vmatpush1.msra.mxu0 %v744
        %2948 = vmatprep.subr.mxu0 %v747
        %2949 = vmatpush1.msra.mxu0 %v746
        %2950 = vmatprep.subr.mxu0 %v749
        %2951 = vmatpush1.msra.mxu0 %v748
        %2952 = vmatprep.subr.mxu0 %v751
        %2953 = vmatpush1.msra.mxu0 %v750
        %2954 = vmatprep.subr.mxu0 %v753
        %2955 = vmatpush1.msra.mxu0 %v752
        %2956 = vmatprep.mubr.f32.mxu0 %v2607
        %2957 = vmatmul.mubr.f32.gmra.mrb[0].mxu0 %v2606
        %v2958 = vpop.f32.mrb[0].mxu0
        %v2959 = vadd.f32 0.0, %v2958
        %v2960 = vpop.f32.mrb[0].mxu0
        %v2961 = vadd.f32 0.0, %v2960
        %2962 = vdwg.mxu0
        %2963 = vmatprep.subr.mxu0 %v755
        %2964 = vmatpush1.msra.mxu0 %v754
        %2965 = vmatprep.subr.mxu0 %v757
        %2966 = vmatpush1.msra.mxu0 %v756
        %2967 = vmatprep.subr.mxu0 %v759
        %2968 = vmatpush1.msra.mxu0 %v758
        %2969 = vmatprep.subr.mxu0 %v761
        %2970 = vmatpush1.msra.mxu0 %v760
        %2971 = vmatprep.subr.mxu0 %v763
        %2972 = vmatpush1.msra.mxu0 %v762
        %2973 = vmatprep.subr.mxu0 %v765
        %2974 = vmatpush1.msra.mxu0 %v764
        %2975 = vmatprep.subr.mxu0 %v767
        %2976 = vmatpush1.msra.mxu0 %v766
        %2977 = vmatprep.subr.mxu0 %v769
        %2978 = vmatpush1.msra.mxu0 %v768
        %2979 = vmatprep.subr.mxu0 %v771
        %2980 = vmatpush1.msra.mxu0 %v770
        %2981 = vmatprep.subr.mxu0 %v773
        %2982 = vmatpush1.msra.mxu0 %v772
        %2983 = vmatprep.subr.mxu0 %v775
        %2984 = vmatpush1.msra.mxu0 %v774
        %2985 = vmatprep.subr.mxu0 %v777
        %2986 = vmatpush1.msra.mxu0 %v776
        %2987 = vmatprep.subr.mxu0 %v779
        %2988 = vmatpush1.msra.mxu0 %v778
        %2989 = vmatprep.subr.mxu0 %v781
        %2990 = vmatpush1.msra.mxu0 %v780
        %2991 = vmatprep.subr.mxu0 %v783
        %2992 = vmatpush1.msra.mxu0 %v782
        %2993 = vmatprep.subr.mxu0 %v785
        %2994 = vmatpush1.msra.mxu0 %v784
        %2995 = vmatprep.subr.mxu0 %v787
        %2996 = vmatpush1.msra.mxu0 %v786
        %2997 = vmatprep.subr.mxu0 %v789
        %2998 = vmatpush1.msra.mxu0 %v788
        %2999 = vmatprep.subr.mxu0 %v791
        %3000 = vmatpush1.msra.mxu0 %v790
        %3001 = vmatprep.subr.mxu0 %v793
        %3002 = vmatpush1.msra.mxu0 %v792
        %3003 = vmatprep.subr.mxu0 %v795
        %3004 = vmatpush1.msra.mxu0 %v794
        %3005 = vmatprep.subr.mxu0 %v797
        %3006 = vmatpush1.msra.mxu0 %v796
        %3007 = vmatprep.subr.mxu0 %v799
        %3008 = vmatpush1.msra.mxu0 %v798
        %3009 = vmatprep.subr.mxu0 %v801
        %3010 = vmatpush1.msra.mxu0 %v800
        %3011 = vmatprep.subr.mxu0 %v803
        %3012 = vmatpush1.msra.mxu0 %v802
        %3013 = vmatprep.subr.mxu0 %v805
        %3014 = vmatpush1.msra.mxu0 %v804
        %3015 = vmatprep.subr.mxu0 %v807
        %3016 = vmatpush1.msra.mxu0 %v806
        %3017 = vmatprep.subr.mxu0 %v809
        %3018 = vmatpush1.msra.mxu0 %v808
        %3019 = vmatprep.subr.mxu0 %v811
        %3020 = vmatpush1.msra.mxu0 %v810
        %3021 = vmatprep.subr.mxu0 %v813
        %3022 = vmatpush1.msra.mxu0 %v812
        %3023 = vmatprep.subr.mxu0 %v815
        %3024 = vmatpush1.msra.mxu0 %v814
        %3025 = vmatprep.subr.mxu0 %v817
        %3026 = vmatpush1.msra.mxu0 %v816
        %3027 = vmatprep.mubr.f32.mxu0 %v2607
        %3028 = vmatmul.mubr.f32.gmra.mrb[0].mxu0 %v2606
        %v3029 = vpop.f32.mrb[0].mxu0
        %v3030 = vadd.f32 0.0, %v3029
        %v3031 = vpop.f32.mrb[0].mxu0
        %v3032 = vadd.f32 0.0, %v3031
        %3033 = vdwg.mxu0
        %3034 = vmatprep.subr.mxu0 %v819
        %3035 = vmatpush1.msra.mxu0 %v818
        %3036 = vmatprep.subr.mxu0 %v821
        %3037 = vmatpush1.msra.mxu0 %v820
        %3038 = vmatprep.subr.mxu0 %v823
        %3039 = vmatpush1.msra.mxu0 %v822
        %3040 = vmatprep.subr.mxu0 %v825
        %3041 = vmatpush1.msra.mxu0 %v824
        %3042 = vmatprep.subr.mxu0 %v827
        %3043 = vmatpush1.msra.mxu0 %v826
        %3044 = vmatprep.subr.mxu0 %v829
        %3045 = vmatpush1.msra.mxu0 %v828
        %3046 = vmatprep.subr.mxu0 %v831
        %3047 = vmatpush1.msra.mxu0 %v830
        %3048 = vmatprep.subr.mxu0 %v833
        %3049 = vmatpush1.msra.mxu0 %v832
        %3050 = vmatprep.subr.mxu0 %v835
        %3051 = vmatpush1.msra.mxu0 %v834
        %3052 = vmatprep.subr.mxu0 %v837
        %3053 = vmatpush1.msra.mxu0 %v836
        %3054 = vmatprep.subr.mxu0 %v839
        %3055 = vmatpush1.msra.mxu0 %v838
        %3056 = vmatprep.subr.mxu0 %v841
        %3057 = vmatpush1.msra.mxu0 %v840
        %3058 = vmatprep.subr.mxu0 %v843
        %3059 = vmatpush1.msra.mxu0 %v842
        %3060 = vmatprep.subr.mxu0 %v845
        %3061 = vmatpush1.msra.mxu0 %v844
        %3062 = vmatprep.subr.mxu0 %v847
        %3063 = vmatpush1.msra.mxu0 %v846
        %3064 = vmatprep.subr.mxu0 %v849
        %3065 = vmatpush1.msra.mxu0 %v848
        %3066 = vmatprep.subr.mxu0 %v851
        %3067 = vmatpush1.msra.mxu0 %v850
        %3068 = vmatprep.subr.mxu0 %v853
        %3069 = vmatpush1.msra.mxu0 %v852
        %3070 = vmatprep.subr.mxu0 %v855
        %3071 = vmatpush1.msra.mxu0 %v854
        %3072 = vmatprep.subr.mxu0 %v857
        %3073 = vmatpush1.msra.mxu0 %v856
        %3074 = vmatprep.subr.mxu0 %v859
        %3075 = vmatpush1.msra.mxu0 %v858
        %3076 = vmatprep.subr.mxu0 %v861
        %3077 = vmatpush1.msra.mxu0 %v860
        %3078 = vmatprep.subr.mxu0 %v863
        %3079 = vmatpush1.msra.mxu0 %v862
        %3080 = vmatprep.subr.mxu0 %v865
        %3081 = vmatpush1.msra.mxu0 %v864
        %3082 = vmatprep.subr.mxu0 %v867
        %3083 = vmatpush1.msra.mxu0 %v866
        %3084 = vmatprep.subr.mxu0 %v869
        %3085 = vmatpush1.msra.mxu0 %v868
        %3086 = vmatprep.subr.mxu0 %v871
        %3087 = vmatpush1.msra.mxu0 %v870
        %3088 = vmatprep.subr.mxu0 %v873
        %3089 = vmatpush1.msra.mxu0 %v872
        %3090 = vmatprep.subr.mxu0 %v875
        %3091 = vmatpush1.msra.mxu0 %v874
        %3092 = vmatprep.subr.mxu0 %v877
        %3093 = vmatpush1.msra.mxu0 %v876
        %3094 = vmatprep.subr.mxu0 %v879
        %3095 = vmatpush1.msra.mxu0 %v878
        %3096 = vmatprep.subr.mxu0 %v881
        %3097 = vmatpush1.msra.mxu0 %v880
        %3098 = vmatprep.mubr.f32.mxu0 %v2607
        %3099 = vmatmul.mubr.f32.gmra.mrb[0].mxu0 %v2606
        %v3100 = vpop.f32.mrb[0].mxu0
        %v3101 = vadd.f32 0.0, %v3100
        %v3102 = vpop.f32.mrb[0].mxu0
        %v3103 = vadd.f32 0.0, %v3102
        %3104 = vdwg.mxu0
        %3105 = vmatprep.subr.mxu0 %v883
        %3106 = vmatpush1.msra.mxu0 %v882
        %3107 = vmatprep.subr.mxu0 %v885
        %3108 = vmatpush1.msra.mxu0 %v884
        %3109 = vmatprep.subr.mxu0 %v887
        %3110 = vmatpush1.msra.mxu0 %v886
        %3111 = vmatprep.subr.mxu0 %v889
        %3112 = vmatpush1.msra.mxu0 %v888
        %3113 = vmatprep.subr.mxu0 %v891
        %3114 = vmatpush1.msra.mxu0 %v890
        %3115 = vmatprep.subr.mxu0 %v893
        %3116 = vmatpush1.msra.mxu0 %v892
        %3117 = vmatprep.subr.mxu0 %v895
        %3118 = vmatpush1.msra.mxu0 %v894
        %3119 = vmatprep.subr.mxu0 %v897
        %3120 = vmatpush1.msra.mxu0 %v896
        %3121 = vmatprep.subr.mxu0 %v899
        %3122 = vmatpush1.msra.mxu0 %v898
        %3123 = vmatprep.subr.mxu0 %v901
        %3124 = vmatpush1.msra.mxu0 %v900
        %3125 = vmatprep.subr.mxu0 %v903
        %3126 = vmatpush1.msra.mxu0 %v902
        %3127 = vmatprep.subr.mxu0 %v905
        %3128 = vmatpush1.msra.mxu0 %v904
        %3129 = vmatprep.subr.mxu0 %v907
        %3130 = vmatpush1.msra.mxu0 %v906
        %3131 = vmatprep.subr.mxu0 %v909
        %3132 = vmatpush1.msra.mxu0 %v908
        %3133 = vmatprep.subr.mxu0 %v911
        %3134 = vmatpush1.msra.mxu0 %v910
        %3135 = vmatprep.subr.mxu0 %v913
        %3136 = vmatpush1.msra.mxu0 %v912
        %3137 = vmatprep.subr.mxu0 %v915
        %3138 = vmatpush1.msra.mxu0 %v914
        %3139 = vmatprep.subr.mxu0 %v917
        %3140 = vmatpush1.msra.mxu0 %v916
        %3141 = vmatprep.subr.mxu0 %v919
        %3142 = vmatpush1.msra.mxu0 %v918
        %3143 = vmatprep.subr.mxu0 %v921
        %3144 = vmatpush1.msra.mxu0 %v920
        %3145 = vmatprep.subr.mxu0 %v923
        %3146 = vmatpush1.msra.mxu0 %v922
        %3147 = vmatprep.subr.mxu0 %v925
        %3148 = vmatpush1.msra.mxu0 %v924
        %3149 = vmatprep.subr.mxu0 %v927
        %3150 = vmatpush1.msra.mxu0 %v926
        %3151 = vmatprep.subr.mxu0 %v929
        %3152 = vmatpush1.msra.mxu0 %v928
        %3153 = vmatprep.subr.mxu0 %v931
        %3154 = vmatpush1.msra.mxu0 %v930
        %3155 = vmatprep.subr.mxu0 %v933
        %3156 = vmatpush1.msra.mxu0 %v932
        %3157 = vmatprep.subr.mxu0 %v935
        %3158 = vmatpush1.msra.mxu0 %v934
        %3159 = vmatprep.subr.mxu0 %v937
        %3160 = vmatpush1.msra.mxu0 %v936
        %3161 = vmatprep.subr.mxu0 %v939
        %3162 = vmatpush1.msra.mxu0 %v938
        %3163 = vmatprep.subr.mxu0 %v941
        %3164 = vmatpush1.msra.mxu0 %v940
        %3165 = vmatprep.subr.mxu0 %v943
        %3166 = vmatpush1.msra.mxu0 %v942
        %3167 = vmatprep.subr.mxu0 %v945
        %3168 = vmatpush1.msra.mxu0 %v944
        %3169 = vmatprep.mubr.f32.mxu0 %v2607
        %3170 = vmatmul.mubr.f32.gmra.mrb[0].mxu0 %v2606
        %v3171 = vpop.f32.mrb[0].mxu0
        %v3172 = vadd.f32 0.0, %v3171
        %v3173 = vpop.f32.mrb[0].mxu0
        %v3174 = vadd.f32 0.0, %v3173
        %3175 = vdwg.mxu0
        %3176 = vmatprep.subr.mxu0 %v947
        %3177 = vmatpush1.msra.mxu0 %v946
        %3178 = vmatprep.subr.mxu0 %v949
        %3179 = vmatpush1.msra.mxu0 %v948
        %3180 = vmatprep.subr.mxu0 %v951
        %3181 = vmatpush1.msra.mxu0 %v950
        %3182 = vmatprep.subr.mxu0 %v953
        %3183 = vmatpush1.msra.mxu0 %v952
        %3184 = vmatprep.subr.mxu0 %v955
        %3185 = vmatpush1.msra.mxu0 %v954
        %3186 = vmatprep.subr.mxu0 %v957
        %3187 = vmatpush1.msra.mxu0 %v956
        %3188 = vmatprep.subr.mxu0 %v959
        %3189 = vmatpush1.msra.mxu0 %v958
        %3190 = vmatprep.subr.mxu0 %v961
        %3191 = vmatpush1.msra.mxu0 %v960
        %3192 = vmatprep.subr.mxu0 %v963
        %3193 = vmatpush1.msra.mxu0 %v962
        %3194 = vmatprep.subr.mxu0 %v965
        %3195 = vmatpush1.msra.mxu0 %v964
        %3196 = vmatprep.subr.mxu0 %v967
        %3197 = vmatpush1.msra.mxu0 %v966
        %3198 = vmatprep.subr.mxu0 %v969
        %3199 = vmatpush1.msra.mxu0 %v968
        %3200 = vmatprep.subr.mxu0 %v971
        %3201 = vmatpush1.msra.mxu0 %v970
        %3202 = vmatprep.subr.mxu0 %v973
        %3203 = vmatpush1.msra.mxu0 %v972
        %3204 = vmatprep.subr.mxu0 %v975
        %3205 = vmatpush1.msra.mxu0 %v974
        %3206 = vmatprep.subr.mxu0 %v977
        %3207 = vmatpush1.msra.mxu0 %v976
        %3208 = vmatprep.subr.mxu0 %v979
        %3209 = vmatpush1.msra.mxu0 %v978
        %3210 = vmatprep.subr.mxu0 %v981
        %3211 = vmatpush1.msra.mxu0 %v980
        %3212 = vmatprep.subr.mxu0 %v983
        %3213 = vmatpush1.msra.mxu0 %v982
        %3214 = vmatprep.subr.mxu0 %v985
        %3215 = vmatpush1.msra.mxu0 %v984
        %3216 = vmatprep.subr.mxu0 %v987
        %3217 = vmatpush1.msra.mxu0 %v986
        %3218 = vmatprep.subr.mxu0 %v989
        %3219 = vmatpush1.msra.mxu0 %v988
        %3220 = vmatprep.subr.mxu0 %v991
        %3221 = vmatpush1.msra.mxu0 %v990
        %3222 = vmatprep.subr.mxu0 %v993
        %3223 = vmatpush1.msra.mxu0 %v992
        %3224 = vmatprep.subr.mxu0 %v995
        %3225 = vmatpush1.msra.mxu0 %v994
        %3226 = vmatprep.subr.mxu0 %v997
        %3227 = vmatpush1.msra.mxu0 %v996
        %3228 = vmatprep.subr.mxu0 %v999
        %3229 = vmatpush1.msra.mxu0 %v998
        %3230 = vmatprep.subr.mxu0 %v1001
        %3231 = vmatpush1.msra.mxu0 %v1000
        %3232 = vmatprep.subr.mxu0 %v1003
        %3233 = vmatpush1.msra.mxu0 %v1002
        %3234 = vmatprep.subr.mxu0 %v1005
        %3235 = vmatpush1.msra.mxu0 %v1004
        %3236 = vmatprep.subr.mxu0 %v1007
        %3237 = vmatpush1.msra.mxu0 %v1006
        %3238 = vmatprep.subr.mxu0 %v1009
        %3239 = vmatpush1.msra.mxu0 %v1008
        %3240 = vmatprep.mubr.f32.mxu0 %v2607
        %3241 = vmatmul.mubr.f32.gmra.mrb[0].mxu0 %v2606
        %v3242 = vpop.f32.mrb[0].mxu0
        %v3243 = vadd.f32 0.0, %v3242
        %v3244 = vpop.f32.mrb[0].mxu0
        %v3245 = vadd.f32 0.0, %v3244
        %3246 = vdwg.mxu0
        %v3247 = vld [vmem:[%s8] sm:$0xf]
        %v3249 = vsel %vm2441, %v3247, 0
        %3251 = vmatprep.subr.mxu0 %v2677
        %3252 = vmatpush1.msra.mxu0 %v2675
        %3253 = vmatprep.subr.mxu0 %v2748
        %3254 = vmatpush1.msra.mxu0 %v2746
        %3255 = vmatprep.subr.mxu0 %v2819
        %3256 = vmatpush1.msra.mxu0 %v2817
        %3257 = vmatprep.subr.mxu0 %v2890
        %3258 = vmatpush1.msra.mxu0 %v2888
        %3259 = vmatprep.subr.mxu0 %v2961
        %3260 = vmatpush1.msra.mxu0 %v2959
        %3261 = vmatprep.subr.mxu0 %v3032
        %3262 = vmatpush1.msra.mxu0 %v3030
        %3263 = vmatprep.subr.mxu0 %v3103
        %3264 = vmatpush1.msra.mxu0 %v3101
        %3265 = vmatprep.subr.mxu0 %v3174
        %3266 = vmatpush1.msra.mxu0 %v3172
        %3267 = vmatprep.subr.mxu0 %v3245
        %3268 = vmatpush1.msra.mxu0 %v3243
        %3269 = vmatprep.subr.mxu0 0.0
        %3270 = vmatpush1.msra.mxu0 0.0
        %3271 = vmatprep.subr.mxu0 0.0
        %3272 = vmatpush1.msra.mxu0 0.0
        %3273 = vmatprep.subr.mxu0 0.0
        %3274 = vmatpush1.msra.mxu0 0.0
        %3275 = vmatprep.subr.mxu0 0.0
        %3276 = vmatpush1.msra.mxu0 0.0
        %3277 = vmatprep.subr.mxu0 0.0
        %3278 = vmatpush1.msra.mxu0 0.0
        %3279 = vmatprep.subr.mxu0 0.0
        %3280 = vmatpush1.msra.mxu0 0.0
        %3281 = vmatprep.subr.mxu0 0.0
        %3282 = vmatpush1.msra.mxu0 0.0
        %3283 = vmatprep.subr.mxu0 0.0
        %3284 = vmatpush1.msra.mxu0 0.0
        %3285 = vmatprep.subr.mxu0 0.0
        %3286 = vmatpush1.msra.mxu0 0.0
        %3287 = vmatprep.subr.mxu0 0.0
        %3288 = vmatpush1.msra.mxu0 0.0
        %3289 = vmatprep.subr.mxu0 0.0
        %3290 = vmatpush1.msra.mxu0 0.0
        %3291 = vmatprep.subr.mxu0 0.0
        %3292 = vmatpush1.msra.mxu0 0.0
        %3293 = vmatprep.subr.mxu0 0.0
        %3294 = vmatpush1.msra.mxu0 0.0
        %3295 = vmatprep.subr.mxu0 0.0
        %3296 = vmatpush1.msra.mxu0 0.0
        %3297 = vmatprep.subr.mxu0 0.0
        %3298 = vmatpush1.msra.mxu0 0.0
        %3299 = vmatprep.subr.mxu0 0.0
        %3300 = vmatpush1.msra.mxu0 0.0
        %3301 = vmatprep.subr.mxu0 0.0
        %3302 = vmatpush1.msra.mxu0 0.0
        %3303 = vmatprep.subr.mxu0 0.0
        %3304 = vmatpush1.msra.mxu0 0.0
        %3305 = vmatprep.subr.mxu0 0.0
        %3306 = vmatpush1.msra.mxu0 0.0
        %3307 = vmatprep.subr.mxu0 0.0
        %3308 = vmatpush1.msra.mxu0 0.0
        %3309 = vmatprep.subr.mxu0 0.0
        %3310 = vmatpush1.msra.mxu0 0.0
        %3311 = vmatprep.subr.mxu0 0.0
        %3312 = vmatpush1.msra.mxu0 0.0
        %3313 = vmatprep.subr.mxu0 0.0
        %3314 = vmatpush1.msra.mxu0 0.0
        %3315 = vmatprep.mubr.f32.mxu0 0.0
        %3316 = vmatmul.mubr.f32.gmra.mrb[0].mxu0 %v3249
        %v3317 = vpop.f32.mrb[0].mxu0
        %v3318 = vadd.f32 0.0, %v3317
        %v3319 = vpop.f32.mrb[0].mxu0
        %v3320 = vadd.f32 0.0, %v3319
        %3321 = vdwg.mxu0
        %v3322 = vld [vmem:[%s9] sm:$0xf]
        %3324 = vset.pattern.permute.xlu0 0
        %3325 = vperm.xlu0 %3324, %v3322
        %v3326 = vpop.permute.xlu0 %3325
        %v3328 = vmul.f32 %v3318, %v3326
        %v3329 = vmul.f32 %v3320, %v3326
        %v3330 = vld [vmem:[%s10] sm:$0xf]
        %3332 = vset.pattern.permute.xlu0 0
        %3333 = vperm.xlu0 %3332, %v3330
        %v3334 = vpop.permute.xlu0 %3333
        %v3336 = vadd.f32 %v3328, %v3334
        %v3337 = vadd.f32 %v3329, %v3334
        %v3338 = vmax.f32 %v3336, 0.0
        %v3339 = vmax.f32 %v3337, 0.0
        %v3342 = vcombine.low %v3338, %v3339
        %3344 = vst [vmem:[%s433] sm:$0xff] %v3342
        %p3345 = scmp.lt.s32.totalorder %s24, 1
        %s3346 = scalar_select %p3345, %s24, 1
        %s3347 = smul.addr %s3346, 2
        %s3348 = smul.addr %s3347, 4
        %s3349 = scalar_lea.vmem %s11, %s3348
        // Predicated region
        $region73: #{up_forward.1} parent=63 // pred_check
          %p3350 = pneg %p283
        $region74: #{up_forward.1} parent=63 // pred_check_branch
          %3352 = sbr.rel (%p3350) target = $region76
        $region75: #{up_forward.1} parent=63 // pred_region
          _
        $region76: #{up_forward.1} parent=63 // pred_fallthru
          _
      $region64: #{up_forward.1} parent=5 // pred_fallthru
        _
      %p3353 = scmp.le.s32.totalorder 2, %s19
      // Predicated region
      $region77: #{up_forward.1} parent=5 // pred_check
        %p3354 = pneg %p3353
      $region78: #{up_forward.1} parent=5 // pred_check_branch
        %3356 = sbr.rel (%p3354) target = $region80
      $region79: #{up_forward.1} parent=5 // pred_region
        %s3357 = ssub.s32 %s19, 2
        // Predicated region
        $region81: #{up_forward.1} parent=79 // pred_check
          %p3358 = pneg %p289
        $region82: #{up_forward.1} parent=79 // pred_check_branch
          %3360 = sbr.rel (%p3358) target = $region84
        $region83: #{up_forward.1} parent=79 // pred_region
          %p3361 = scmp.lt.s32.totalorder %s25, 1
          %s3362 = scalar_select %p3361, %s25, 1
          %s3363 = smul.addr %s3362, 2
          %s3364 = smul.addr %s3363, 4
          %s3365 = scalar_lea.vmem %s11, %s3364
        $region84: #{up_forward.1} parent=79 // pred_fallthru
          _
      $region80: #{up_forward.1} parent=5 // pred_fallthru
        _
    $region6: #{up_forward.1} parent=1 // loop_footer
      %s23 = sadd.s32 1, %s19
    $region7: #{up_forward.1} parent=1 // loop_footer_branch
      %18 = sbr.rel target = $region3
    $region8: #{up_forward.1} parent=1 // loop_exit
      _
    %3366 = vsyncpa [#allocation3], 1
    %s3367 = scalar_lea.sflag [#allocation3], 1
    %3368 = vsyncpa %s3367, 1
    %3369 = vsyncpa [#allocation5], 1

</llo_original>
